<compile_context>
chip_gen: v7x
topology: tpu7x:2x2x1
jax: 0.10.0
libtpu: 0.0.40
codegen_flags: <defaults>
</compile_context>

<pallas_src>
import jax
import jax.numpy as jnp
from jax.experimental import pallas as pl
from jax.experimental.pallas import tpu as pltpu


# ----------------------------- config ---------------------------------------
EMB_DIM = 32
NUM_HEADS = 4
NUM_BLOCKS = 2
OUT_DIM = 16
HEAD_DIM = EMB_DIM // NUM_HEADS
MAX_POS = 220
LN_EPS = 1e-5

OUT_PAD = 128                       # lane-dense output width (>= OUT_DIM)
W_COLS_PER_BLOCK = 384              # wqkv slot(128) + wo slot(128) + w1 slot(128)
W_OUT_COL = NUM_BLOCKS * W_COLS_PER_BLOCK
WA_COLS = W_OUT_COL + OUT_PAD       # 896
VEC_ROWS_PER_BLOCK = 8
VEC_ROWS = NUM_BLOCKS * VEC_ROWS_PER_BLOCK + 1   # 17 (last row = b_out)


# --------------------------- Pallas kernel ----------------------------------
def _layernorm(x, gamma, beta):
    mean = jnp.mean(x, axis=-1, keepdims=True)
    var = jnp.mean(jnp.square(x - mean), axis=-1, keepdims=True)
    return (x - mean) * jax.lax.rsqrt(var + LN_EPS) * gamma + beta


def decoder_kernel(x_ref, pos_ref, wA_ref, w2_ref, vec_ref, o_ref):
    """One grid step = one batch element.

    x_ref : (1, S, D)   token embeddings for this batch element
    pos_ref: (S, D)     positional embeddings (shared across batch)
    wA_ref : (D, 896)   packed D-leading weights
    w2_ref : (4D, 2D)   packed MLP down-projection weights
    vec_ref: (17, 128)  packed LN params / biases (one per row)
    o_ref  : (1, S, 128) padded output
    """
    x = x_ref[0] + pos_ref[...]                       # (S, D) f32
    wA = wA_ref[...]                                  # (D, 896)
    vec = vec_ref[...]                                # (17, 128)

    scale = 1.0 / float(HEAD_DIM) ** 0.5
    D = EMB_DIM

    for blk in range(NUM_BLOCKS):                     # static unroll
        r = blk * VEC_ROWS_PER_BLOCK
        ln1_g = vec[r + 0:r + 1, :D]
        ln1_b = vec[r + 1:r + 2, :D]
        bqkv = vec[r + 2:r + 3, :3 * D]
        bo = vec[r + 3:r + 4, :D]
        ln2_g = vec[r + 4:r + 5, :D]
        ln2_b = vec[r + 5:r + 6, :D]
        b1 = vec[r + 6:r + 7, :4 * D]
        b2 = vec[r + 7:r + 8, :D]

        c = blk * W_COLS_PER_BLOCK
        wqkv = wA[:, c:c + 3 * D]                     # (D, 3D)
        wo = wA[:, c + 128:c + 128 + D]               # (D, D)
        w1 = wA[:, c + 256:c + 256 + 4 * D]           # (D, 4D)
        w2 = w2_ref[:, blk * D:(blk + 1) * D]         # (4D, D)

        # --- multi-head self-attention (pre-norm) ---
        h = _layernorm(x, ln1_g, ln1_b)
        qkv = jnp.dot(h, wqkv, preferred_element_type=jnp.float32) + bqkv
        q = qkv[:, :D]
        k = qkv[:, D:2 * D]
        v = qkv[:, 2 * D:]

        attn = jnp.zeros_like(x)                      # accumulated projected heads
        for hd in range(NUM_HEADS):                   # static unroll, no concat
            lo = hd * HEAD_DIM
            qh = q[:, lo:lo + HEAD_DIM]
            kh = k[:, lo:lo + HEAD_DIM]
            vh = v[:, lo:lo + HEAD_DIM]
            s = jnp.einsum('qd,kd->qk', qh, kh,
                           preferred_element_type=jnp.float32) * scale
            s = s - jnp.max(s, axis=-1, keepdims=True)
            p = jnp.exp(s)
            p = p * pl.reciprocal(jnp.sum(p, axis=-1, keepdims=True),
                                  approx=True)
            ho = jnp.dot(p, vh, preferred_element_type=jnp.float32)   # (S, Dh)
            attn = attn + jnp.dot(ho, wo[lo:lo + HEAD_DIM, :],
                                  preferred_element_type=jnp.float32)  # (S, D)
        x = x + attn + bo

        # --- MLP (pre-norm) ---
        h2 = _layernorm(x, ln2_g, ln2_b)
        m = jnp.dot(h2, w1, preferred_element_type=jnp.float32) + b1
        m = jax.nn.gelu(m, approximate=True)   # TODO(synk): torch default is erf
        m = jnp.dot(m, w2, preferred_element_type=jnp.float32) + b2
        x = x + m

    # --- output projection (lane-dense, padded to 128) ---
    w_out = wA[:, W_OUT_COL:W_OUT_COL + OUT_PAD]
    b_out = vec[NUM_BLOCKS * VEC_ROWS_PER_BLOCK:
                NUM_BLOCKS * VEC_ROWS_PER_BLOCK + 1, :OUT_PAD]
    y = jnp.dot(x, w_out, preferred_element_type=jnp.float32) + b_out  # (S, 128)
    o_ref[0] = y.astype(o_ref.dtype)


# ------------------------------ wrapper --------------------------------------
@jax.jit
def decoder_forward(packed, pos_emb, mask_emb, encoder_output,
                    all_positional_indices):
    B, S_enc, D = encoder_output.shape
    S = all_positional_indices.shape[0]
    num_masked = S - S_enc

    # Glue in plain JAX: mask-token broadcast, concat, positional gather.
    mask_tok = mask_emb[0]                                        # (D,)
    masked = jnp.broadcast_to(mask_tok, (B, num_masked, D))
    all_emb = jnp.concatenate([encoder_output, masked], axis=1)   # (B, S, D)
    pos = pos_emb[all_positional_indices]                         # (S, D)

    y = pl.pallas_call(
        decoder_kernel,
        out_shape=jax.ShapeDtypeStruct((B, S, OUT_PAD), jnp.float32),
        grid=(B,),
        in_specs=[
            pl.BlockSpec((1, S, D), lambda b: (b, 0, 0)),         # x (per batch)
            pl.BlockSpec((S, D), lambda b: (0, 0)),               # pos (shared)
            pl.BlockSpec((D, WA_COLS), lambda b: (0, 0)),         # packed weights
            pl.BlockSpec((4 * D, NUM_BLOCKS * D), lambda b: (0, 0)),  # packed w2
            pl.BlockSpec((VEC_ROWS, 128), lambda b: (0, 0)),      # packed vectors
        ],
        out_specs=pl.BlockSpec((1, S, OUT_PAD), lambda b: (b, 0, 0)),
        compiler_params=pltpu.CompilerParams(
            dimension_semantics=("parallel",)),                   # 2 TCs on v7x
    )(all_emb, pos, packed["wA"], packed["w2"], packed["vec"])
    return y[:, :, :OUT_DIM]


# --------------------------- params: init & pack ------------------------------
def init_params(key):
    def nrm(k, shape, scale=0.02):
        return (scale * jax.random.normal(k, shape)).astype(jnp.float32)

    keys = iter(jax.random.split(key, 64))
    blocks = []
    for _ in range(NUM_BLOCKS):
        blocks.append(dict(
            ln1_g=jnp.ones((EMB_DIM,), jnp.float32),
            ln1_b=jnp.zeros((EMB_DIM,), jnp.float32),
            wqkv=nrm(next(keys), (EMB_DIM, 3 * EMB_DIM)),
            bqkv=jnp.zeros((3 * EMB_DIM,), jnp.float32),
            wo=nrm(next(keys), (EMB_DIM, EMB_DIM)),
            bo=jnp.zeros((EMB_DIM,), jnp.float32),
            ln2_g=jnp.ones((EMB_DIM,), jnp.float32),
            ln2_b=jnp.zeros((EMB_DIM,), jnp.float32),
            w1=nrm(next(keys), (EMB_DIM, 4 * EMB_DIM)),
            b1=jnp.zeros((4 * EMB_DIM,), jnp.float32),
            w2=nrm(next(keys), (4 * EMB_DIM, EMB_DIM)),
            b2=jnp.zeros((EMB_DIM,), jnp.float32),
        ))
    return dict(
        pos_emb=nrm(next(keys), (MAX_POS, EMB_DIM), scale=1.0),
        mask_emb=nrm(next(keys), (1, EMB_DIM), scale=1.0),
        w_out=nrm(next(keys), (EMB_DIM, OUT_DIM)),
        b_out=jnp.zeros((OUT_DIM,), jnp.float32),
        blocks=blocks,
    )


def pack_params(params):
    """Pack all matmul/LN parameters into 3 contiguous, lane-aligned blobs."""
    D = EMB_DIM
    wA = jnp.zeros((D, WA_COLS), jnp.float32)
    w2 = jnp.zeros((4 * D, NUM_BLOCKS * D), jnp.float32)
    vec = jnp.zeros((VEC_ROWS, 128), jnp.float32)
    for i, blk in enumerate(params["blocks"]):
        c = i * W_COLS_PER_BLOCK
        wA = wA.at[:, c:c + 3 * D].set(blk["wqkv"])
        wA = wA.at[:, c + 128:c + 128 + D].set(blk["wo"])
        wA = wA.at[:, c + 256:c + 256 + 4 * D].set(blk["w1"])
        w2 = w2.at[:, i * D:(i + 1) * D].set(blk["w2"])
        r = i * VEC_ROWS_PER_BLOCK
        vec = vec.at[r + 0, :D].set(blk["ln1_g"])
        vec = vec.at[r + 1, :D].set(blk["ln1_b"])
        vec = vec.at[r + 2, :3 * D].set(blk["bqkv"])
        vec = vec.at[r + 3, :D].set(blk["bo"])
        vec = vec.at[r + 4, :D].set(blk["ln2_g"])
        vec = vec.at[r + 5, :D].set(blk["ln2_b"])
        vec = vec.at[r + 6, :4 * D].set(blk["b1"])
        vec = vec.at[r + 7, :D].set(blk["b2"])
    wA = wA.at[:, W_OUT_COL:W_OUT_COL + OUT_DIM].set(params["w_out"])
    vec = vec.at[NUM_BLOCKS * VEC_ROWS_PER_BLOCK, :OUT_DIM].set(params["b_out"])
    return {"wA": wA, "w2": w2, "vec": vec}


# ---------------------------- pure-JAX reference ------------------------------
def _ref_ln(x, g, b):
    mu = x.mean(-1, keepdims=True)
    var = ((x - mu) ** 2).mean(-1, keepdims=True)
    return (x - mu) * jax.lax.rsqrt(var + LN_EPS) * g + b


def decoder_reference(params, encoder_output, idx):
    B, S_enc, D = encoder_output.shape
    S = idx.shape[0]
    masked = jnp.broadcast_to(params["mask_emb"][0], (B, S - S_enc, D))
    x = jnp.concatenate([encoder_output, masked], 1) + params["pos_emb"][idx][None]
    scale = HEAD_DIM ** -0.5
    for blk in params["blocks"]:
        h = _ref_ln(x, blk["ln1_g"], blk["ln1_b"])
        qkv = h @ blk["wqkv"] + blk["bqkv"]
        q, k, v = jnp.split(qkv, 3, -1)
        q = q.reshape(B, S, NUM_HEADS, HEAD_DIM)
        k = k.reshape(B, S, NUM_HEADS, HEAD_DIM)
        v = v.reshape(B, S, NUM_HEADS, HEAD_DIM)
        s = jnp.einsum('bqhd,bkhd->bhqk', q, k) * scale
        p = jax.nn.softmax(s, -1)
        o = jnp.einsum('bhqk,bkhd->bqhd', p, v).reshape(B, S, D)
        x = x + o @ blk["wo"] + blk["bo"]
        h2 = _ref_ln(x, blk["ln2_g"], blk["ln2_b"])
        m = jax.nn.gelu(h2 @ blk["w1"] + blk["b1"], approximate=True)
        x = x + m @ blk["w2"] + blk["b2"]
    return x @ params["w_out"] + params["b_out"]


# --------------------------------- main ---------------------------------------
if __name__ == "__main__":
    key = jax.random.PRNGKey(0)
    k_p, k_x, k_i = jax.random.split(key, 3)

    B, S_ENC, S_TOTAL = 2, 5, 8          # 3 masked tokens
    params = init_params(k_p)
    packed = pack_params(params)
    encoder_output = jax.random.normal(k_x, (B, S_ENC, EMB_DIM), jnp.float32)
    all_positional_indices = jax.random.randint(
        k_i, (S_TOTAL,), 0, MAX_POS, dtype=jnp.int32)

    out = decoder_forward(packed, params["pos_emb"], params["mask_emb"],
                          encoder_output, all_positional_indices)
    out = jax.block_until_ready(out)
    assert out.shape == (B, S_TOTAL, OUT_DIM), out.shape
    assert bool(jnp.all(jnp.isfinite(out)))

    ref = decoder_reference(params, encoder_output, all_positional_indices)
    max_err = float(jnp.max(jnp.abs(out - ref)))
    assert max_err < 1e-2, f"max abs error {max_err}"
    print("KERNEL_OK")
</pallas_src>

<mosaic_0001>
module attributes {stable_mosaic.version = 11 : i64} {
  func.func @decoder_kernel(%arg0: i32, %arg1: memref<1x8x32xf32, #tpu.memory_space<vmem>>, %arg2: memref<8x32xf32, #tpu.memory_space<vmem>>, %arg3: memref<32x896xf32, #tpu.memory_space<vmem>>, %arg4: memref<128x64xf32, #tpu.memory_space<vmem>>, %arg5: memref<17x128xf32, #tpu.memory_space<vmem>>, %arg6: memref<1x8x128xf32, #tpu.memory_space<vmem>>) attributes {dimension_semantics = [#tpu.dimension_semantics<parallel>], iteration_bounds = array<i64: 2>, scalar_prefetch = 0 : i64, scratch_operands = 0 : i64, tpu.core_type = #tpu.core_type<tc>, window_params = [{transform_indices = @transform_0, window_bounds = array<i64: 1, 8, 32>}, {pipeline_mode = #tpu.pipeline_mode<synchronous>, transform_indices = @transform_1, window_bounds = array<i64: 8, 32>}, {pipeline_mode = #tpu.pipeline_mode<synchronous>, transform_indices = @transform_2, window_bounds = array<i64: 32, 896>}, {pipeline_mode = #tpu.pipeline_mode<synchronous>, transform_indices = @transform_3, window_bounds = array<i64: 128, 64>}, {pipeline_mode = #tpu.pipeline_mode<synchronous>, transform_indices = @transform_4, window_bounds = array<i64: 17, 128>}, {transform_indices = @transform_5, window_bounds = array<i64: 1, 8, 128>}]} {
    %c0 = arith.constant 0 : index
    %c0_0 = arith.constant 0 : index
    %c0_1 = arith.constant 0 : index
    %0 = vector.load %arg1[%c0, %c0_0, %c0_1] : memref<1x8x32xf32, #tpu.memory_space<vmem>>, vector<1x8x32xf32>
    %1 = vector.shape_cast %0 : vector<1x8x32xf32> to vector<8x32xf32>
    %c0_2 = arith.constant 0 : index
    %c0_3 = arith.constant 0 : index
    %2 = vector.load %arg2[%c0_2, %c0_3] : memref<8x32xf32, #tpu.memory_space<vmem>>, vector<8x32xf32>
    %3 = arith.addf %1, %2 : vector<8x32xf32>
    %c0_4 = arith.constant 0 : index
    %c0_5 = arith.constant 0 : index
    %4 = vector.load %arg3[%c0_4, %c0_5] : memref<32x896xf32, #tpu.memory_space<vmem>>, vector<32x896xf32>
    %c0_6 = arith.constant 0 : index
    %c0_7 = arith.constant 0 : index
    %5 = vector.load %arg5[%c0_6, %c0_7] : memref<17x128xf32, #tpu.memory_space<vmem>>, vector<17x128xf32>
    %6 = vector.extract_strided_slice %5 {offsets = [0, 0], sizes = [1, 32], strides = [1, 1]} : vector<17x128xf32> to vector<1x32xf32>
    %7 = vector.extract_strided_slice %5 {offsets = [1, 0], sizes = [1, 32], strides = [1, 1]} : vector<17x128xf32> to vector<1x32xf32>
    %8 = vector.extract_strided_slice %5 {offsets = [2, 0], sizes = [1, 96], strides = [1, 1]} : vector<17x128xf32> to vector<1x96xf32>
    %9 = vector.extract_strided_slice %5 {offsets = [3, 0], sizes = [1, 32], strides = [1, 1]} : vector<17x128xf32> to vector<1x32xf32>
    %10 = vector.extract_strided_slice %5 {offsets = [4, 0], sizes = [1, 32], strides = [1, 1]} : vector<17x128xf32> to vector<1x32xf32>
    %11 = vector.extract_strided_slice %5 {offsets = [5, 0], sizes = [1, 32], strides = [1, 1]} : vector<17x128xf32> to vector<1x32xf32>
    %12 = vector.extract_strided_slice %5 {offsets = [6, 0], sizes = [1, 128], strides = [1, 1]} : vector<17x128xf32> to vector<1x128xf32>
    %13 = vector.extract_strided_slice %5 {offsets = [7, 0], sizes = [1, 32], strides = [1, 1]} : vector<17x128xf32> to vector<1x32xf32>
    %14 = vector.extract_strided_slice %4 {offsets = [0, 0], sizes = [32, 96], strides = [1, 1]} : vector<32x896xf32> to vector<32x96xf32>
    %15 = vector.extract_strided_slice %4 {offsets = [0, 128], sizes = [32, 32], strides = [1, 1]} : vector<32x896xf32> to vector<32x32xf32>
    %16 = vector.extract_strided_slice %4 {offsets = [0, 256], sizes = [32, 128], strides = [1, 1]} : vector<32x896xf32> to vector<32x128xf32>
    %c0_8 = arith.constant 0 : index
    %c0_9 = arith.constant 0 : index
    %17 = vector.load %arg4[%c0_8, %c0_9] : memref<128x64xf32, #tpu.memory_space<vmem>>, vector<128x32xf32>
    %cst = arith.constant dense<0.000000e+00> : vector<8xf32>
    %18 = vector.multi_reduction <add>, %3, %cst [1] : vector<8x32xf32> to vector<8xf32>
    %19 = vector.shape_cast %18 : vector<8xf32> to vector<8x1xf32>
    %cst_10 = arith.constant 3.200000e+01 : f32
    %20 = vector.broadcast %cst_10 : f32 to vector<8x1xf32>
    %21 = arith.divf %19, %20 : vector<8x1xf32>
    %22 = vector.broadcast %21 : vector<8x1xf32> to vector<8x32xf32>
    %23 = arith.subf %3, %22 : vector<8x32xf32>
    %24 = arith.mulf %23, %23 : vector<8x32xf32>
    %cst_11 = arith.constant dense<0.000000e+00> : vector<8xf32>
    %25 = vector.multi_reduction <add>, %24, %cst_11 [1] : vector<8x32xf32> to vector<8xf32>
    %26 = vector.shape_cast %25 : vector<8xf32> to vector<8x1xf32>
    %cst_12 = arith.constant 3.200000e+01 : f32
    %27 = vector.broadcast %cst_12 : f32 to vector<8x1xf32>
    %28 = arith.divf %26, %27 : vector<8x1xf32>
    %29 = vector.broadcast %21 : vector<8x1xf32> to vector<8x32xf32>
    %30 = arith.subf %3, %29 : vector<8x32xf32>
    %cst_13 = arith.constant 9.99999974E-6 : f32
    %31 = vector.broadcast %cst_13 : f32 to vector<8x1xf32>
    %32 = arith.addf %28, %31 : vector<8x1xf32>
    %33 = math.rsqrt %32 : vector<8x1xf32>
    %34 = vector.broadcast %33 : vector<8x1xf32> to vector<8x32xf32>
    %35 = arith.mulf %30, %34 : vector<8x32xf32>
    %36 = vector.broadcast %6 : vector<1x32xf32> to vector<8x32xf32>
    %37 = arith.mulf %35, %36 : vector<8x32xf32>
    %38 = vector.broadcast %7 : vector<1x32xf32> to vector<8x32xf32>
    %39 = arith.addf %37, %38 : vector<8x32xf32>
    %cst_14 = arith.constant dense<0.000000e+00> : vector<8x96xf32>
    %40 = tpu.matmul %39, %14, %cst_14 {dimension_numbers = #tpu.dot_dimension_numbers<[1], [0], [0], [1], [0, 0, 1, 1], [], []>} : vector<8x32xf32>, vector<32x96xf32>, vector<8x96xf32> -> vector<8x96xf32>
    %41 = vector.broadcast %8 : vector<1x96xf32> to vector<8x96xf32>
    %42 = arith.addf %40, %41 : vector<8x96xf32>
    %43 = vector.extract_strided_slice %42 {offsets = [0, 0], sizes = [8, 32], strides = [1, 1]} : vector<8x96xf32> to vector<8x32xf32>
    %44 = vector.extract_strided_slice %42 {offsets = [0, 32], sizes = [8, 32], strides = [1, 1]} : vector<8x96xf32> to vector<8x32xf32>
    %45 = vector.extract_strided_slice %42 {offsets = [0, 64], sizes = [8, 32], strides = [1, 1]} : vector<8x96xf32> to vector<8x32xf32>
    %cst_15 = arith.constant 0.000000e+00 : f32
    %46 = vector.broadcast %cst_15 : f32 to vector<8x32xf32>
    %47 = vector.extract_strided_slice %43 {offsets = [0, 0], sizes = [8, 8], strides = [1, 1]} : vector<8x32xf32> to vector<8x8xf32>
    %48 = vector.extract_strided_slice %44 {offsets = [0, 0], sizes = [8, 8], strides = [1, 1]} : vector<8x32xf32> to vector<8x8xf32>
    %49 = vector.extract_strided_slice %45 {offsets = [0, 0], sizes = [8, 8], strides = [1, 1]} : vector<8x32xf32> to vector<8x8xf32>
    "tpu.trace_start"() <{level = 10 : i32, message = "qd,kd->qk"}> : () -> ()
    %cst_16 = arith.constant dense<0.000000e+00> : vector<8x8xf32>
    %50 = tpu.matmul %47, %48, %cst_16 {dimension_numbers = #tpu.dot_dimension_numbers<[1], [1], [0], [0], [0, 0, 1, 0], [], []>} : vector<8x8xf32>, vector<8x8xf32>, vector<8x8xf32> -> vector<8x8xf32>
    "tpu.trace_stop"() : () -> ()
    %cst_17 = arith.constant 0.353553385 : f32
    %51 = vector.broadcast %cst_17 : f32 to vector<8x8xf32>
    %52 = arith.mulf %50, %51 : vector<8x8xf32>
    %cst_18 = arith.constant dense<0xFF800000> : vector<8xf32>
    %53 = vector.multi_reduction <maximumf>, %52, %cst_18 [1] : vector<8x8xf32> to vector<8xf32>
    %54 = vector.shape_cast %53 : vector<8xf32> to vector<8x1xf32>
    %55 = vector.broadcast %54 : vector<8x1xf32> to vector<8x8xf32>
    %56 = arith.subf %52, %55 : vector<8x8xf32>
    %57 = math.exp %56 : vector<8x8xf32>
    %cst_19 = arith.constant dense<0.000000e+00> : vector<8xf32>
    %58 = vector.multi_reduction <add>, %57, %cst_19 [1] : vector<8x8xf32> to vector<8xf32>
    %59 = vector.shape_cast %58 : vector<8xf32> to vector<8x1xf32>
    %60 = tpu.reciprocal %59 {approx = true} : vector<8x1xf32> -> vector<8x1xf32>
    %61 = vector.broadcast %60 : vector<8x1xf32> to vector<8x8xf32>
    %62 = arith.mulf %57, %61 : vector<8x8xf32>
    %cst_20 = arith.constant dense<0.000000e+00> : vector<8x8xf32>
    %63 = tpu.matmul %62, %49, %cst_20 {dimension_numbers = #tpu.dot_dimension_numbers<[1], [0], [0], [1], [0, 0, 1, 1], [], []>} : vector<8x8xf32>, vector<8x8xf32>, vector<8x8xf32> -> vector<8x8xf32>
    %64 = vector.extract_strided_slice %15 {offsets = [0, 0], sizes = [8, 32], strides = [1, 1]} : vector<32x32xf32> to vector<8x32xf32>
    %cst_21 = arith.constant dense<0.000000e+00> : vector<8x32xf32>
    %65 = tpu.matmul %63, %64, %cst_21 {dimension_numbers = #tpu.dot_dimension_numbers<[1], [0], [0], [1], [0, 0, 1, 1], [], []>} : vector<8x8xf32>, vector<8x32xf32>, vector<8x32xf32> -> vector<8x32xf32>
    %66 = arith.addf %46, %65 : vector<8x32xf32>
    %67 = vector.extract_strided_slice %43 {offsets = [0, 8], sizes = [8, 8], strides = [1, 1]} : vector<8x32xf32> to vector<8x8xf32>
    %68 = vector.extract_strided_slice %44 {offsets = [0, 8], sizes = [8, 8], strides = [1, 1]} : vector<8x32xf32> to vector<8x8xf32>
    %69 = vector.extract_strided_slice %45 {offsets = [0, 8], sizes = [8, 8], strides = [1, 1]} : vector<8x32xf32> to vector<8x8xf32>
    "tpu.trace_start"() <{level = 10 : i32, message = "qd,kd->qk"}> : () -> ()
    %cst_22 = arith.constant dense<0.000000e+00> : vector<8x8xf32>
    %70 = tpu.matmul %67, %68, %cst_22 {dimension_numbers = #tpu.dot_dimension_numbers<[1], [1], [0], [0], [0, 0, 1, 0], [], []>} : vector<8x8xf32>, vector<8x8xf32>, vector<8x8xf32> -> vector<8x8xf32>
    "tpu.trace_stop"() : () -> ()
    %cst_23 = arith.constant 0.353553385 : f32
    %71 = vector.broadcast %cst_23 : f32 to vector<8x8xf32>
    %72 = arith.mulf %70, %71 : vector<8x8xf32>
    %cst_24 = arith.constant dense<0xFF800000> : vector<8xf32>
    %73 = vector.multi_reduction <maximumf>, %72, %cst_24 [1] : vector<8x8xf32> to vector<8xf32>
    %74 = vector.shape_cast %73 : vector<8xf32> to vector<8x1xf32>
    %75 = vector.broadcast %74 : vector<8x1xf32> to vector<8x8xf32>
    %76 = arith.subf %72, %75 : vector<8x8xf32>
    %77 = math.exp %76 : vector<8x8xf32>
    %cst_25 = arith.constant dense<0.000000e+00> : vector<8xf32>
    %78 = vector.multi_reduction <add>, %77, %cst_25 [1] : vector<8x8xf32> to vector<8xf32>
    %79 = vector.shape_cast %78 : vector<8xf32> to vector<8x1xf32>
    %80 = tpu.reciprocal %79 {approx = true} : vector<8x1xf32> -> vector<8x1xf32>
    %81 = vector.broadcast %80 : vector<8x1xf32> to vector<8x8xf32>
    %82 = arith.mulf %77, %81 : vector<8x8xf32>
    %cst_26 = arith.constant dense<0.000000e+00> : vector<8x8xf32>
    %83 = tpu.matmul %82, %69, %cst_26 {dimension_numbers = #tpu.dot_dimension_numbers<[1], [0], [0], [1], [0, 0, 1, 1], [], []>} : vector<8x8xf32>, vector<8x8xf32>, vector<8x8xf32> -> vector<8x8xf32>
    %84 = vector.extract_strided_slice %15 {offsets = [8, 0], sizes = [8, 32], strides = [1, 1]} : vector<32x32xf32> to vector<8x32xf32>
    %cst_27 = arith.constant dense<0.000000e+00> : vector<8x32xf32>
    %85 = tpu.matmul %83, %84, %cst_27 {dimension_numbers = #tpu.dot_dimension_numbers<[1], [0], [0], [1], [0, 0, 1, 1], [], []>} : vector<8x8xf32>, vector<8x32xf32>, vector<8x32xf32> -> vector<8x32xf32>
    %86 = arith.addf %66, %85 : vector<8x32xf32>
    %87 = vector.extract_strided_slice %43 {offsets = [0, 16], sizes = [8, 8], strides = [1, 1]} : vector<8x32xf32> to vector<8x8xf32>
    %88 = vector.extract_strided_slice %44 {offsets = [0, 16], sizes = [8, 8], strides = [1, 1]} : vector<8x32xf32> to vector<8x8xf32>
    %89 = vector.extract_strided_slice %45 {offsets = [0, 16], sizes = [8, 8], strides = [1, 1]} : vector<8x32xf32> to vector<8x8xf32>
    "tpu.trace_start"() <{level = 10 : i32, message = "qd,kd->qk"}> : () -> ()
    %cst_28 = arith.constant dense<0.000000e+00> : vector<8x8xf32>
    %90 = tpu.matmul %87, %88, %cst_28 {dimension_numbers = #tpu.dot_dimension_numbers<[1], [1], [0], [0], [0, 0, 1, 0], [], []>} : vector<8x8xf32>, vector<8x8xf32>, vector<8x8xf32> -> vector<8x8xf32>
    "tpu.trace_stop"() : () -> ()
    %cst_29 = arith.constant 0.353553385 : f32
    %91 = vector.broadcast %cst_29 : f32 to vector<8x8xf32>
    %92 = arith.mulf %90, %91 : vector<8x8xf32>
    %cst_30 = arith.constant dense<0xFF800000> : vector<8xf32>
    %93 = vector.multi_reduction <maximumf>, %92, %cst_30 [1] : vector<8x8xf32> to vector<8xf32>
    %94 = vector.shape_cast %93 : vector<8xf32> to vector<8x1xf32>
    %95 = vector.broadcast %94 : vector<8x1xf32> to vector<8x8xf32>
    %96 = arith.subf %92, %95 : vector<8x8xf32>
    %97 = math.exp %96 : vector<8x8xf32>
    %cst_31 = arith.constant dense<0.000000e+00> : vector<8xf32>
    %98 = vector.multi_reduction <add>, %97, %cst_31 [1] : vector<8x8xf32> to vector<8xf32>
    %99 = vector.shape_cast %98 : vector<8xf32> to vector<8x1xf32>
    %100 = tpu.reciprocal %99 {approx = true} : vector<8x1xf32> -> vector<8x1xf32>
    %101 = vector.broadcast %100 : vector<8x1xf32> to vector<8x8xf32>
    %102 = arith.mulf %97, %101 : vector<8x8xf32>
    %cst_32 = arith.constant dense<0.000000e+00> : vector<8x8xf32>
    %103 = tpu.matmul %102, %89, %cst_32 {dimension_numbers = #tpu.dot_dimension_numbers<[1], [0], [0], [1], [0, 0, 1, 1], [], []>} : vector<8x8xf32>, vector<8x8xf32>, vector<8x8xf32> -> vector<8x8xf32>
    %104 = vector.extract_strided_slice %15 {offsets = [16, 0], sizes = [8, 32], strides = [1, 1]} : vector<32x32xf32> to vector<8x32xf32>
    %cst_33 = arith.constant dense<0.000000e+00> : vector<8x32xf32>
    %105 = tpu.matmul %103, %104, %cst_33 {dimension_numbers = #tpu.dot_dimension_numbers<[1], [0], [0], [1], [0, 0, 1, 1], [], []>} : vector<8x8xf32>, vector<8x32xf32>, vector<8x32xf32> -> vector<8x32xf32>
    %106 = arith.addf %86, %105 : vector<8x32xf32>
    %107 = vector.extract_strided_slice %43 {offsets = [0, 24], sizes = [8, 8], strides = [1, 1]} : vector<8x32xf32> to vector<8x8xf32>
    %108 = vector.extract_strided_slice %44 {offsets = [0, 24], sizes = [8, 8], strides = [1, 1]} : vector<8x32xf32> to vector<8x8xf32>
    %109 = vector.extract_strided_slice %45 {offsets = [0, 24], sizes = [8, 8], strides = [1, 1]} : vector<8x32xf32> to vector<8x8xf32>
    "tpu.trace_start"() <{level = 10 : i32, message = "qd,kd->qk"}> : () -> ()
    %cst_34 = arith.constant dense<0.000000e+00> : vector<8x8xf32>
    %110 = tpu.matmul %107, %108, %cst_34 {dimension_numbers = #tpu.dot_dimension_numbers<[1], [1], [0], [0], [0, 0, 1, 0], [], []>} : vector<8x8xf32>, vector<8x8xf32>, vector<8x8xf32> -> vector<8x8xf32>
    "tpu.trace_stop"() : () -> ()
    %cst_35 = arith.constant 0.353553385 : f32
    %111 = vector.broadcast %cst_35 : f32 to vector<8x8xf32>
    %112 = arith.mulf %110, %111 : vector<8x8xf32>
    %cst_36 = arith.constant dense<0xFF800000> : vector<8xf32>
    %113 = vector.multi_reduction <maximumf>, %112, %cst_36 [1] : vector<8x8xf32> to vector<8xf32>
    %114 = vector.shape_cast %113 : vector<8xf32> to vector<8x1xf32>
    %115 = vector.broadcast %114 : vector<8x1xf32> to vector<8x8xf32>
    %116 = arith.subf %112, %115 : vector<8x8xf32>
    %117 = math.exp %116 : vector<8x8xf32>
    %cst_37 = arith.constant dense<0.000000e+00> : vector<8xf32>
    %118 = vector.multi_reduction <add>, %117, %cst_37 [1] : vector<8x8xf32> to vector<8xf32>
    %119 = vector.shape_cast %118 : vector<8xf32> to vector<8x1xf32>
    %120 = tpu.reciprocal %119 {approx = true} : vector<8x1xf32> -> vector<8x1xf32>
    %121 = vector.broadcast %120 : vector<8x1xf32> to vector<8x8xf32>
    %122 = arith.mulf %117, %121 : vector<8x8xf32>
    %cst_38 = arith.constant dense<0.000000e+00> : vector<8x8xf32>
    %123 = tpu.matmul %122, %109, %cst_38 {dimension_numbers = #tpu.dot_dimension_numbers<[1], [0], [0], [1], [0, 0, 1, 1], [], []>} : vector<8x8xf32>, vector<8x8xf32>, vector<8x8xf32> -> vector<8x8xf32>
    %124 = vector.extract_strided_slice %15 {offsets = [24, 0], sizes = [8, 32], strides = [1, 1]} : vector<32x32xf32> to vector<8x32xf32>
    %cst_39 = arith.constant dense<0.000000e+00> : vector<8x32xf32>
    %125 = tpu.matmul %123, %124, %cst_39 {dimension_numbers = #tpu.dot_dimension_numbers<[1], [0], [0], [1], [0, 0, 1, 1], [], []>} : vector<8x8xf32>, vector<8x32xf32>, vector<8x32xf32> -> vector<8x32xf32>
    %126 = arith.addf %106, %125 : vector<8x32xf32>
    %127 = arith.addf %3, %126 : vector<8x32xf32>
    %128 = vector.broadcast %9 : vector<1x32xf32> to vector<8x32xf32>
    %129 = arith.addf %127, %128 : vector<8x32xf32>
    %cst_40 = arith.constant dense<0.000000e+00> : vector<8xf32>
    %130 = vector.multi_reduction <add>, %129, %cst_40 [1] : vector<8x32xf32> to vector<8xf32>
    %131 = vector.shape_cast %130 : vector<8xf32> to vector<8x1xf32>
    %cst_41 = arith.constant 3.200000e+01 : f32
    %132 = vector.broadcast %cst_41 : f32 to vector<8x1xf32>
    %133 = arith.divf %131, %132 : vector<8x1xf32>
    %134 = vector.broadcast %133 : vector<8x1xf32> to vector<8x32xf32>
    %135 = arith.subf %129, %134 : vector<8x32xf32>
    %136 = arith.mulf %135, %135 : vector<8x32xf32>
    %cst_42 = arith.constant dense<0.000000e+00> : vector<8xf32>
    %137 = vector.multi_reduction <add>, %136, %cst_42 [1] : vector<8x32xf32> to vector<8xf32>
    %138 = vector.shape_cast %137 : vector<8xf32> to vector<8x1xf32>
    %cst_43 = arith.constant 3.200000e+01 : f32
    %139 = vector.broadcast %cst_43 : f32 to vector<8x1xf32>
    %140 = arith.divf %138, %139 : vector<8x1xf32>
    %141 = vector.broadcast %133 : vector<8x1xf32> to vector<8x32xf32>
    %142 = arith.subf %129, %141 : vector<8x32xf32>
    %cst_44 = arith.constant 9.99999974E-6 : f32
    %143 = vector.broadcast %cst_44 : f32 to vector<8x1xf32>
    %144 = arith.addf %140, %143 : vector<8x1xf32>
    %145 = math.rsqrt %144 : vector<8x1xf32>
    %146 = vector.broadcast %145 : vector<8x1xf32> to vector<8x32xf32>
    %147 = arith.mulf %142, %146 : vector<8x32xf32>
    %148 = vector.broadcast %10 : vector<1x32xf32> to vector<8x32xf32>
    %149 = arith.mulf %147, %148 : vector<8x32xf32>
    %150 = vector.broadcast %11 : vector<1x32xf32> to vector<8x32xf32>
    %151 = arith.addf %149, %150 : vector<8x32xf32>
    %cst_45 = arith.constant dense<0.000000e+00> : vector<8x128xf32>
    %152 = tpu.matmul %151, %16, %cst_45 {dimension_numbers = #tpu.dot_dimension_numbers<[1], [0], [0], [1], [0, 0, 1, 1], [], []>} : vector<8x32xf32>, vector<32x128xf32>, vector<8x128xf32> -> vector<8x128xf32>
    %153 = vector.broadcast %12 : vector<1x128xf32> to vector<8x128xf32>
    %154 = arith.addf %152, %153 : vector<8x128xf32>
    %155 = arith.mulf %154, %154 : vector<8x128xf32>
    %156 = arith.mulf %154, %155 : vector<8x128xf32>
    %cst_46 = arith.constant 4.471500e-02 : f32
    %157 = vector.broadcast %cst_46 : f32 to vector<8x128xf32>
    %158 = arith.mulf %157, %156 : vector<8x128xf32>
    %159 = arith.addf %154, %158 : vector<8x128xf32>
    %cst_47 = arith.constant 0.797884583 : f32
    %160 = vector.broadcast %cst_47 : f32 to vector<8x128xf32>
    %161 = arith.mulf %160, %159 : vector<8x128xf32>
    %162 = math.tanh %161 : vector<8x128xf32>
    %cst_48 = arith.constant 1.000000e+00 : f32
    %163 = vector.broadcast %cst_48 : f32 to vector<8x128xf32>
    %164 = arith.addf %163, %162 : vector<8x128xf32>
    %cst_49 = arith.constant 5.000000e-01 : f32
    %165 = vector.broadcast %cst_49 : f32 to vector<8x128xf32>
    %166 = arith.mulf %165, %164 : vector<8x128xf32>
    %167 = arith.mulf %154, %166 : vector<8x128xf32>
    %cst_50 = arith.constant dense<0.000000e+00> : vector<8x32xf32>
    %168 = tpu.matmul %167, %17, %cst_50 {dimension_numbers = #tpu.dot_dimension_numbers<[1], [0], [0], [1], [0, 0, 1, 1], [], []>} : vector<8x128xf32>, vector<128x32xf32>, vector<8x32xf32> -> vector<8x32xf32>
    %169 = vector.broadcast %13 : vector<1x32xf32> to vector<8x32xf32>
    %170 = arith.addf %168, %169 : vector<8x32xf32>
    %171 = arith.addf %129, %170 : vector<8x32xf32>
    %172 = vector.extract_strided_slice %5 {offsets = [8, 0], sizes = [1, 32], strides = [1, 1]} : vector<17x128xf32> to vector<1x32xf32>
    %173 = vector.extract_strided_slice %5 {offsets = [9, 0], sizes = [1, 32], strides = [1, 1]} : vector<17x128xf32> to vector<1x32xf32>
    %174 = vector.extract_strided_slice %5 {offsets = [10, 0], sizes = [1, 96], strides = [1, 1]} : vector<17x128xf32> to vector<1x96xf32>
    %175 = vector.extract_strided_slice %5 {offsets = [11, 0], sizes = [1, 32], strides = [1, 1]} : vector<17x128xf32> to vector<1x32xf32>
    %176 = vector.extract_strided_slice %5 {offsets = [12, 0], sizes = [1, 32], strides = [1, 1]} : vector<17x128xf32> to vector<1x32xf32>
    %177 = vector.extract_strided_slice %5 {offsets = [13, 0], sizes = [1, 32], strides = [1, 1]} : vector<17x128xf32> to vector<1x32xf32>
    %178 = vector.extract_strided_slice %5 {offsets = [14, 0], sizes = [1, 128], strides = [1, 1]} : vector<17x128xf32> to vector<1x128xf32>
    %179 = vector.extract_strided_slice %5 {offsets = [15, 0], sizes = [1, 32], strides = [1, 1]} : vector<17x128xf32> to vector<1x32xf32>
    %180 = vector.extract_strided_slice %4 {offsets = [0, 384], sizes = [32, 96], strides = [1, 1]} : vector<32x896xf32> to vector<32x96xf32>
    %181 = vector.extract_strided_slice %4 {offsets = [0, 512], sizes = [32, 32], strides = [1, 1]} : vector<32x896xf32> to vector<32x32xf32>
    %182 = vector.extract_strided_slice %4 {offsets = [0, 640], sizes = [32, 128], strides = [1, 1]} : vector<32x896xf32> to vector<32x128xf32>
    %c0_51 = arith.constant 0 : index
    %c32 = arith.constant 32 : index
    %183 = vector.load %arg4[%c0_51, %c32] : memref<128x64xf32, #tpu.memory_space<vmem>>, vector<128x32xf32>
    %cst_52 = arith.constant dense<0.000000e+00> : vector<8xf32>
    %184 = vector.multi_reduction <add>, %171, %cst_52 [1] : vector<8x32xf32> to vector<8xf32>
    %185 = vector.shape_cast %184 : vector<8xf32> to vector<8x1xf32>
    %cst_53 = arith.constant 3.200000e+01 : f32
    %186 = vector.broadcast %cst_53 : f32 to vector<8x1xf32>
    %187 = arith.divf %185, %186 : vector<8x1xf32>
    %188 = vector.broadcast %187 : vector<8x1xf32> to vector<8x32xf32>
    %189 = arith.subf %171, %188 : vector<8x32xf32>
    %190 = arith.mulf %189, %189 : vector<8x32xf32>
    %cst_54 = arith.constant dense<0.000000e+00> : vector<8xf32>
    %191 = vector.multi_reduction <add>, %190, %cst_54 [1] : vector<8x32xf32> to vector<8xf32>
    %192 = vector.shape_cast %191 : vector<8xf32> to vector<8x1xf32>
    %cst_55 = arith.constant 3.200000e+01 : f32
    %193 = vector.broadcast %cst_55 : f32 to vector<8x1xf32>
    %194 = arith.divf %192, %193 : vector<8x1xf32>
    %195 = vector.broadcast %187 : vector<8x1xf32> to vector<8x32xf32>
    %196 = arith.subf %171, %195 : vector<8x32xf32>
    %cst_56 = arith.constant 9.99999974E-6 : f32
    %197 = vector.broadcast %cst_56 : f32 to vector<8x1xf32>
    %198 = arith.addf %194, %197 : vector<8x1xf32>
    %199 = math.rsqrt %198 : vector<8x1xf32>
    %200 = vector.broadcast %199 : vector<8x1xf32> to vector<8x32xf32>
    %201 = arith.mulf %196, %200 : vector<8x32xf32>
    %202 = vector.broadcast %172 : vector<1x32xf32> to vector<8x32xf32>
    %203 = arith.mulf %201, %202 : vector<8x32xf32>
    %204 = vector.broadcast %173 : vector<1x32xf32> to vector<8x32xf32>
    %205 = arith.addf %203, %204 : vector<8x32xf32>
    %cst_57 = arith.constant dense<0.000000e+00> : vector<8x96xf32>
    %206 = tpu.matmul %205, %180, %cst_57 {dimension_numbers = #tpu.dot_dimension_numbers<[1], [0], [0], [1], [0, 0, 1, 1], [], []>} : vector<8x32xf32>, vector<32x96xf32>, vector<8x96xf32> -> vector<8x96xf32>
    %207 = vector.broadcast %174 : vector<1x96xf32> to vector<8x96xf32>
    %208 = arith.addf %206, %207 : vector<8x96xf32>
    %209 = vector.extract_strided_slice %208 {offsets = [0, 0], sizes = [8, 32], strides = [1, 1]} : vector<8x96xf32> to vector<8x32xf32>
    %210 = vector.extract_strided_slice %208 {offsets = [0, 32], sizes = [8, 32], strides = [1, 1]} : vector<8x96xf32> to vector<8x32xf32>
    %211 = vector.extract_strided_slice %208 {offsets = [0, 64], sizes = [8, 32], strides = [1, 1]} : vector<8x96xf32> to vector<8x32xf32>
    %cst_58 = arith.constant 0.000000e+00 : f32
    %212 = vector.broadcast %cst_58 : f32 to vector<8x32xf32>
    %213 = vector.extract_strided_slice %209 {offsets = [0, 0], sizes = [8, 8], strides = [1, 1]} : vector<8x32xf32> to vector<8x8xf32>
    %214 = vector.extract_strided_slice %210 {offsets = [0, 0], sizes = [8, 8], strides = [1, 1]} : vector<8x32xf32> to vector<8x8xf32>
    %215 = vector.extract_strided_slice %211 {offsets = [0, 0], sizes = [8, 8], strides = [1, 1]} : vector<8x32xf32> to vector<8x8xf32>
    "tpu.trace_start"() <{level = 10 : i32, message = "qd,kd->qk"}> : () -> ()
    %cst_59 = arith.constant dense<0.000000e+00> : vector<8x8xf32>
    %216 = tpu.matmul %213, %214, %cst_59 {dimension_numbers = #tpu.dot_dimension_numbers<[1], [1], [0], [0], [0, 0, 1, 0], [], []>} : vector<8x8xf32>, vector<8x8xf32>, vector<8x8xf32> -> vector<8x8xf32>
    "tpu.trace_stop"() : () -> ()
    %cst_60 = arith.constant 0.353553385 : f32
    %217 = vector.broadcast %cst_60 : f32 to vector<8x8xf32>
    %218 = arith.mulf %216, %217 : vector<8x8xf32>
    %cst_61 = arith.constant dense<0xFF800000> : vector<8xf32>
    %219 = vector.multi_reduction <maximumf>, %218, %cst_61 [1] : vector<8x8xf32> to vector<8xf32>
    %220 = vector.shape_cast %219 : vector<8xf32> to vector<8x1xf32>
    %221 = vector.broadcast %220 : vector<8x1xf32> to vector<8x8xf32>
    %222 = arith.subf %218, %221 : vector<8x8xf32>
    %223 = math.exp %222 : vector<8x8xf32>
    %cst_62 = arith.constant dense<0.000000e+00> : vector<8xf32>
    %224 = vector.multi_reduction <add>, %223, %cst_62 [1] : vector<8x8xf32> to vector<8xf32>
    %225 = vector.shape_cast %224 : vector<8xf32> to vector<8x1xf32>
    %226 = tpu.reciprocal %225 {approx = true} : vector<8x1xf32> -> vector<8x1xf32>
    %227 = vector.broadcast %226 : vector<8x1xf32> to vector<8x8xf32>
    %228 = arith.mulf %223, %227 : vector<8x8xf32>
    %cst_63 = arith.constant dense<0.000000e+00> : vector<8x8xf32>
    %229 = tpu.matmul %228, %215, %cst_63 {dimension_numbers = #tpu.dot_dimension_numbers<[1], [0], [0], [1], [0, 0, 1, 1], [], []>} : vector<8x8xf32>, vector<8x8xf32>, vector<8x8xf32> -> vector<8x8xf32>
    %230 = vector.extract_strided_slice %181 {offsets = [0, 0], sizes = [8, 32], strides = [1, 1]} : vector<32x32xf32> to vector<8x32xf32>
    %cst_64 = arith.constant dense<0.000000e+00> : vector<8x32xf32>
    %231 = tpu.matmul %229, %230, %cst_64 {dimension_numbers = #tpu.dot_dimension_numbers<[1], [0], [0], [1], [0, 0, 1, 1], [], []>} : vector<8x8xf32>, vector<8x32xf32>, vector<8x32xf32> -> vector<8x32xf32>
    %232 = arith.addf %212, %231 : vector<8x32xf32>
    %233 = vector.extract_strided_slice %209 {offsets = [0, 8], sizes = [8, 8], strides = [1, 1]} : vector<8x32xf32> to vector<8x8xf32>
    %234 = vector.extract_strided_slice %210 {offsets = [0, 8], sizes = [8, 8], strides = [1, 1]} : vector<8x32xf32> to vector<8x8xf32>
    %235 = vector.extract_strided_slice %211 {offsets = [0, 8], sizes = [8, 8], strides = [1, 1]} : vector<8x32xf32> to vector<8x8xf32>
    "tpu.trace_start"() <{level = 10 : i32, message = "qd,kd->qk"}> : () -> ()
    %cst_65 = arith.constant dense<0.000000e+00> : vector<8x8xf32>
    %236 = tpu.matmul %233, %234, %cst_65 {dimension_numbers = #tpu.dot_dimension_numbers<[1], [1], [0], [0], [0, 0, 1, 0], [], []>} : vector<8x8xf32>, vector<8x8xf32>, vector<8x8xf32> -> vector<8x8xf32>
    "tpu.trace_stop"() : () -> ()
    %cst_66 = arith.constant 0.353553385 : f32
    %237 = vector.broadcast %cst_66 : f32 to vector<8x8xf32>
    %238 = arith.mulf %236, %237 : vector<8x8xf32>
    %cst_67 = arith.constant dense<0xFF800000> : vector<8xf32>
    %239 = vector.multi_reduction <maximumf>, %238, %cst_67 [1] : vector<8x8xf32> to vector<8xf32>
    %240 = vector.shape_cast %239 : vector<8xf32> to vector<8x1xf32>
    %241 = vector.broadcast %240 : vector<8x1xf32> to vector<8x8xf32>
    %242 = arith.subf %238, %241 : vector<8x8xf32>
    %243 = math.exp %242 : vector<8x8xf32>
    %cst_68 = arith.constant dense<0.000000e+00> : vector<8xf32>
    %244 = vector.multi_reduction <add>, %243, %cst_68 [1] : vector<8x8xf32> to vector<8xf32>
    %245 = vector.shape_cast %244 : vector<8xf32> to vector<8x1xf32>
    %246 = tpu.reciprocal %245 {approx = true} : vector<8x1xf32> -> vector<8x1xf32>
    %247 = vector.broadcast %246 : vector<8x1xf32> to vector<8x8xf32>
    %248 = arith.mulf %243, %247 : vector<8x8xf32>
    %cst_69 = arith.constant dense<0.000000e+00> : vector<8x8xf32>
    %249 = tpu.matmul %248, %235, %cst_69 {dimension_numbers = #tpu.dot_dimension_numbers<[1], [0], [0], [1], [0, 0, 1, 1], [], []>} : vector<8x8xf32>, vector<8x8xf32>, vector<8x8xf32> -> vector<8x8xf32>
    %250 = vector.extract_strided_slice %181 {offsets = [8, 0], sizes = [8, 32], strides = [1, 1]} : vector<32x32xf32> to vector<8x32xf32>
    %cst_70 = arith.constant dense<0.000000e+00> : vector<8x32xf32>
    %251 = tpu.matmul %249, %250, %cst_70 {dimension_numbers = #tpu.dot_dimension_numbers<[1], [0], [0], [1], [0, 0, 1, 1], [], []>} : vector<8x8xf32>, vector<8x32xf32>, vector<8x32xf32> -> vector<8x32xf32>
    %252 = arith.addf %232, %251 : vector<8x32xf32>
    %253 = vector.extract_strided_slice %209 {offsets = [0, 16], sizes = [8, 8], strides = [1, 1]} : vector<8x32xf32> to vector<8x8xf32>
    %254 = vector.extract_strided_slice %210 {offsets = [0, 16], sizes = [8, 8], strides = [1, 1]} : vector<8x32xf32> to vector<8x8xf32>
    %255 = vector.extract_strided_slice %211 {offsets = [0, 16], sizes = [8, 8], strides = [1, 1]} : vector<8x32xf32> to vector<8x8xf32>
    "tpu.trace_start"() <{level = 10 : i32, message = "qd,kd->qk"}> : () -> ()
    %cst_71 = arith.constant dense<0.000000e+00> : vector<8x8xf32>
    %256 = tpu.matmul %253, %254, %cst_71 {dimension_numbers = #tpu.dot_dimension_numbers<[1], [1], [0], [0], [0, 0, 1, 0], [], []>} : vector<8x8xf32>, vector<8x8xf32>, vector<8x8xf32> -> vector<8x8xf32>
    "tpu.trace_stop"() : () -> ()
    %cst_72 = arith.constant 0.353553385 : f32
    %257 = vector.broadcast %cst_72 : f32 to vector<8x8xf32>
    %258 = arith.mulf %256, %257 : vector<8x8xf32>
    %cst_73 = arith.constant dense<0xFF800000> : vector<8xf32>
    %259 = vector.multi_reduction <maximumf>, %258, %cst_73 [1] : vector<8x8xf32> to vector<8xf32>
    %260 = vector.shape_cast %259 : vector<8xf32> to vector<8x1xf32>
    %261 = vector.broadcast %260 : vector<8x1xf32> to vector<8x8xf32>
    %262 = arith.subf %258, %261 : vector<8x8xf32>
    %263 = math.exp %262 : vector<8x8xf32>
    %cst_74 = arith.constant dense<0.000000e+00> : vector<8xf32>
    %264 = vector.multi_reduction <add>, %263, %cst_74 [1] : vector<8x8xf32> to vector<8xf32>
    %265 = vector.shape_cast %264 : vector<8xf32> to vector<8x1xf32>
    %266 = tpu.reciprocal %265 {approx = true} : vector<8x1xf32> -> vector<8x1xf32>
    %267 = vector.broadcast %266 : vector<8x1xf32> to vector<8x8xf32>
    %268 = arith.mulf %263, %267 : vector<8x8xf32>
    %cst_75 = arith.constant dense<0.000000e+00> : vector<8x8xf32>
    %269 = tpu.matmul %268, %255, %cst_75 {dimension_numbers = #tpu.dot_dimension_numbers<[1], [0], [0], [1], [0, 0, 1, 1], [], []>} : vector<8x8xf32>, vector<8x8xf32>, vector<8x8xf32> -> vector<8x8xf32>
    %270 = vector.extract_strided_slice %181 {offsets = [16, 0], sizes = [8, 32], strides = [1, 1]} : vector<32x32xf32> to vector<8x32xf32>
    %cst_76 = arith.constant dense<0.000000e+00> : vector<8x32xf32>
    %271 = tpu.matmul %269, %270, %cst_76 {dimension_numbers = #tpu.dot_dimension_numbers<[1], [0], [0], [1], [0, 0, 1, 1], [], []>} : vector<8x8xf32>, vector<8x32xf32>, vector<8x32xf32> -> vector<8x32xf32>
    %272 = arith.addf %252, %271 : vector<8x32xf32>
    %273 = vector.extract_strided_slice %209 {offsets = [0, 24], sizes = [8, 8], strides = [1, 1]} : vector<8x32xf32> to vector<8x8xf32>
    %274 = vector.extract_strided_slice %210 {offsets = [0, 24], sizes = [8, 8], strides = [1, 1]} : vector<8x32xf32> to vector<8x8xf32>
    %275 = vector.extract_strided_slice %211 {offsets = [0, 24], sizes = [8, 8], strides = [1, 1]} : vector<8x32xf32> to vector<8x8xf32>
    "tpu.trace_start"() <{level = 10 : i32, message = "qd,kd->qk"}> : () -> ()
    %cst_77 = arith.constant dense<0.000000e+00> : vector<8x8xf32>
    %276 = tpu.matmul %273, %274, %cst_77 {dimension_numbers = #tpu.dot_dimension_numbers<[1], [1], [0], [0], [0, 0, 1, 0], [], []>} : vector<8x8xf32>, vector<8x8xf32>, vector<8x8xf32> -> vector<8x8xf32>
    "tpu.trace_stop"() : () -> ()
    %cst_78 = arith.constant 0.353553385 : f32
    %277 = vector.broadcast %cst_78 : f32 to vector<8x8xf32>
    %278 = arith.mulf %276, %277 : vector<8x8xf32>
    %cst_79 = arith.constant dense<0xFF800000> : vector<8xf32>
    %279 = vector.multi_reduction <maximumf>, %278, %cst_79 [1] : vector<8x8xf32> to vector<8xf32>
    %280 = vector.shape_cast %279 : vector<8xf32> to vector<8x1xf32>
    %281 = vector.broadcast %280 : vector<8x1xf32> to vector<8x8xf32>
    %282 = arith.subf %278, %281 : vector<8x8xf32>
    %283 = math.exp %282 : vector<8x8xf32>
    %cst_80 = arith.constant dense<0.000000e+00> : vector<8xf32>
    %284 = vector.multi_reduction <add>, %283, %cst_80 [1] : vector<8x8xf32> to vector<8xf32>
    %285 = vector.shape_cast %284 : vector<8xf32> to vector<8x1xf32>
    %286 = tpu.reciprocal %285 {approx = true} : vector<8x1xf32> -> vector<8x1xf32>
    %287 = vector.broadcast %286 : vector<8x1xf32> to vector<8x8xf32>
    %288 = arith.mulf %283, %287 : vector<8x8xf32>
    %cst_81 = arith.constant dense<0.000000e+00> : vector<8x8xf32>
    %289 = tpu.matmul %288, %275, %cst_81 {dimension_numbers = #tpu.dot_dimension_numbers<[1], [0], [0], [1], [0, 0, 1, 1], [], []>} : vector<8x8xf32>, vector<8x8xf32>, vector<8x8xf32> -> vector<8x8xf32>
    %290 = vector.extract_strided_slice %181 {offsets = [24, 0], sizes = [8, 32], strides = [1, 1]} : vector<32x32xf32> to vector<8x32xf32>
    %cst_82 = arith.constant dense<0.000000e+00> : vector<8x32xf32>
    %291 = tpu.matmul %289, %290, %cst_82 {dimension_numbers = #tpu.dot_dimension_numbers<[1], [0], [0], [1], [0, 0, 1, 1], [], []>} : vector<8x8xf32>, vector<8x32xf32>, vector<8x32xf32> -> vector<8x32xf32>
    %292 = arith.addf %272, %291 : vector<8x32xf32>
    %293 = arith.addf %171, %292 : vector<8x32xf32>
    %294 = vector.broadcast %175 : vector<1x32xf32> to vector<8x32xf32>
    %295 = arith.addf %293, %294 : vector<8x32xf32>
    %cst_83 = arith.constant dense<0.000000e+00> : vector<8xf32>
    %296 = vector.multi_reduction <add>, %295, %cst_83 [1] : vector<8x32xf32> to vector<8xf32>
    %297 = vector.shape_cast %296 : vector<8xf32> to vector<8x1xf32>
    %cst_84 = arith.constant 3.200000e+01 : f32
    %298 = vector.broadcast %cst_84 : f32 to vector<8x1xf32>
    %299 = arith.divf %297, %298 : vector<8x1xf32>
    %300 = vector.broadcast %299 : vector<8x1xf32> to vector<8x32xf32>
    %301 = arith.subf %295, %300 : vector<8x32xf32>
    %302 = arith.mulf %301, %301 : vector<8x32xf32>
    %cst_85 = arith.constant dense<0.000000e+00> : vector<8xf32>
    %303 = vector.multi_reduction <add>, %302, %cst_85 [1] : vector<8x32xf32> to vector<8xf32>
    %304 = vector.shape_cast %303 : vector<8xf32> to vector<8x1xf32>
    %cst_86 = arith.constant 3.200000e+01 : f32
    %305 = vector.broadcast %cst_86 : f32 to vector<8x1xf32>
    %306 = arith.divf %304, %305 : vector<8x1xf32>
    %307 = vector.broadcast %299 : vector<8x1xf32> to vector<8x32xf32>
    %308 = arith.subf %295, %307 : vector<8x32xf32>
    %cst_87 = arith.constant 9.99999974E-6 : f32
    %309 = vector.broadcast %cst_87 : f32 to vector<8x1xf32>
    %310 = arith.addf %306, %309 : vector<8x1xf32>
    %311 = math.rsqrt %310 : vector<8x1xf32>
    %312 = vector.broadcast %311 : vector<8x1xf32> to vector<8x32xf32>
    %313 = arith.mulf %308, %312 : vector<8x32xf32>
    %314 = vector.broadcast %176 : vector<1x32xf32> to vector<8x32xf32>
    %315 = arith.mulf %313, %314 : vector<8x32xf32>
    %316 = vector.broadcast %177 : vector<1x32xf32> to vector<8x32xf32>
    %317 = arith.addf %315, %316 : vector<8x32xf32>
    %cst_88 = arith.constant dense<0.000000e+00> : vector<8x128xf32>
    %318 = tpu.matmul %317, %182, %cst_88 {dimension_numbers = #tpu.dot_dimension_numbers<[1], [0], [0], [1], [0, 0, 1, 1], [], []>} : vector<8x32xf32>, vector<32x128xf32>, vector<8x128xf32> -> vector<8x128xf32>
    %319 = vector.broadcast %178 : vector<1x128xf32> to vector<8x128xf32>
    %320 = arith.addf %318, %319 : vector<8x128xf32>
    %321 = arith.mulf %320, %320 : vector<8x128xf32>
    %322 = arith.mulf %320, %321 : vector<8x128xf32>
    %cst_89 = arith.constant 4.471500e-02 : f32
    %323 = vector.broadcast %cst_89 : f32 to vector<8x128xf32>
    %324 = arith.mulf %323, %322 : vector<8x128xf32>
    %325 = arith.addf %320, %324 : vector<8x128xf32>
    %cst_90 = arith.constant 0.797884583 : f32
    %326 = vector.broadcast %cst_90 : f32 to vector<8x128xf32>
    %327 = arith.mulf %326, %325 : vector<8x128xf32>
    %328 = math.tanh %327 : vector<8x128xf32>
    %cst_91 = arith.constant 1.000000e+00 : f32
    %329 = vector.broadcast %cst_91 : f32 to vector<8x128xf32>
    %330 = arith.addf %329, %328 : vector<8x128xf32>
    %cst_92 = arith.constant 5.000000e-01 : f32
    %331 = vector.broadcast %cst_92 : f32 to vector<8x128xf32>
    %332 = arith.mulf %331, %330 : vector<8x128xf32>
    %333 = arith.mulf %320, %332 : vector<8x128xf32>
    %cst_93 = arith.constant dense<0.000000e+00> : vector<8x32xf32>
    %334 = tpu.matmul %333, %183, %cst_93 {dimension_numbers = #tpu.dot_dimension_numbers<[1], [0], [0], [1], [0, 0, 1, 1], [], []>} : vector<8x128xf32>, vector<128x32xf32>, vector<8x32xf32> -> vector<8x32xf32>
    %335 = vector.broadcast %179 : vector<1x32xf32> to vector<8x32xf32>
    %336 = arith.addf %334, %335 : vector<8x32xf32>
    %337 = arith.addf %295, %336 : vector<8x32xf32>
    %338 = vector.extract_strided_slice %4 {offsets = [0, 768], sizes = [32, 128], strides = [1, 1]} : vector<32x896xf32> to vector<32x128xf32>
    %339 = vector.extract_strided_slice %5 {offsets = [16, 0], sizes = [1, 128], strides = [1, 1]} : vector<17x128xf32> to vector<1x128xf32>
    %cst_94 = arith.constant dense<0.000000e+00> : vector<8x128xf32>
    %340 = tpu.matmul %337, %338, %cst_94 {dimension_numbers = #tpu.dot_dimension_numbers<[1], [0], [0], [1], [0, 0, 1, 1], [], []>} : vector<8x32xf32>, vector<32x128xf32>, vector<8x128xf32> -> vector<8x128xf32>
    %341 = vector.broadcast %339 : vector<1x128xf32> to vector<8x128xf32>
    %342 = arith.addf %340, %341 : vector<8x128xf32>
    %c0_95 = arith.constant 0 : index
    %c0_96 = arith.constant 0 : index
    %c0_97 = arith.constant 0 : index
    %343 = vector.load %arg6[%c0_95, %c0_96, %c0_97] : memref<1x8x128xf32, #tpu.memory_space<vmem>>, vector<1x8x128xf32>
    %344 = vector.shape_cast %343 : vector<1x8x128xf32> to vector<8x128xf32>
    %345 = vector.shape_cast %342 : vector<8x128xf32> to vector<1x8x128xf32>
    tpu.vector_store %arg6[%c0_95, %c0_96, %c0_97], %345 {strides = array<i32>} : memref<1x8x128xf32, #tpu.memory_space<vmem>>, vector<1x8x128xf32>,
    return
  }
  func.func @transform_0(%arg0: i32) -> (i32, i32, i32) {
    %c0_i32 = arith.constant 0 : i32
    %c0_i32_0 = arith.constant 0 : i32
    %c0_i32_1 = arith.constant 0 : i32
    return %arg0, %c0_i32, %c0_i32_0 : i32, i32, i32
  }
  func.func @transform_1(%arg0: i32) -> (i32, i32) {
    %c0_i32 = arith.constant 0 : i32
    %c0_i32_0 = arith.constant 0 : i32
    %c0_i32_1 = arith.constant 0 : i32
    return %c0_i32, %c0_i32_0 : i32, i32
  }
  func.func @transform_2(%arg0: i32) -> (i32, i32) {
    %c0_i32 = arith.constant 0 : i32
    %c0_i32_0 = arith.constant 0 : i32
    %c0_i32_1 = arith.constant 0 : i32
    return %c0_i32, %c0_i32_0 : i32, i32
  }
  func.func @transform_3(%arg0: i32) -> (i32, i32) {
    %c0_i32 = arith.constant 0 : i32
    %c0_i32_0 = arith.constant 0 : i32
    %c0_i32_1 = arith.constant 0 : i32
    return %c0_i32, %c0_i32_0 : i32, i32
  }
  func.func @transform_4(%arg0: i32) -> (i32, i32) {
    %c0_i32 = arith.constant 0 : i32
    %c0_i32_0 = arith.constant 0 : i32
    %c0_i32_1 = arith.constant 0 : i32
    return %c0_i32, %c0_i32_0 : i32, i32
  }
  func.func @transform_5(%arg0: i32) -> (i32, i32, i32) {
    %c0_i32 = arith.constant 0 : i32
    %c0_i32_0 = arith.constant 0 : i32
    %c0_i32_1 = arith.constant 0 : i32
    return %arg0, %c0_i32, %c0_i32_0 : i32, i32, i32
  }
}

</mosaic_0001>

<llo_original>
// kernel: decoder_forward.1
$region0: #{decoder_forward.1}
  #allocation0 [shape = 'u32[]', space=smem, size = 0x4, offset = 0x4, fixed_abs, tag = 'smem constant byte address 0x4 - core index']
  #allocation1 [shape = 'u32[144,128]{1,0:T(1,128)}', space=vmem, size = 0x12000, scoped, tag = 'internal scratch']
  %s0 = inlined_call_operand.vmem [shape: f32[2,8,32], index: 0, kind: input, shape index: {}]
  %s1 = inlined_call_operand.vmem [shape: f32[8,32], index: 1, kind: input, shape index: {}]
  %s2 = inlined_call_operand.vmem [shape: f32[32,896], index: 2, kind: input, shape index: {}]
  %s3 = inlined_call_operand.vmem [shape: f32[128,64], index: 3, kind: input, shape index: {}]
  %s4 = inlined_call_operand.vmem [shape: f32[17,128], index: 4, kind: input, shape index: {}]
  %s5 = inlined_call_operand.hbm [shape: f32[2,8,128], index: 5, kind: output, shape index: {}]
  %s6 = sld [smem:[#allocation0]]
  $region53: #{decoder_forward.1} parent=0
    _
  %s8 = ssub.s32 1, %s6
  %s9 = scalar_select 0, %s8, %s6
  $region1: #{decoder_forward.1} parent=0
    #allocation2 [shape = 'u8[8192]{0}', space=vmem, size = 0x2000, scoped, tag = 'output window, operand 0']
    #allocation3 [shape = 's32[2]{0}', space=sflag, size = 0x8, scoped, tag = 'scoped memory for decoder_forward.1']
    %10 = vsyncpa [#allocation3], 0
    %s11 = scalar_lea.sflag [#allocation3], 1
    %12 = vsyncpa %s11, 0
    loop: start=0, step=1, limit=4
    $region2: #{decoder_forward.1} parent=1 // loop_pre_header
      _
    $region3: #{decoder_forward.1} parent=1 // loop_header
      %s14 = sphi 0, %s18
      %p15 = scmp.ge.s32.totalorder %s14, 4
      %s24 = sphi 0, %s26
      %s27 = sphi 0, %s24
      %s28 = sphi 0, %s27
      %s44 = sphi 0, %s28
      %s48 = sphi 0, %s48
      %s50 = sphi 0, %s48
      %s51 = sphi 0, %s50
      %s65 = sphi 0, %s51
      %s69 = sphi 0, %s69
      %s71 = sphi 0, %s69
      %s72 = sphi 0, %s71
      %s86 = sphi 0, %s72
      %s90 = sphi 0, %s90
      %s92 = sphi 0, %s90
      %s93 = sphi 0, %s92
      %s107 = sphi 0, %s93
      %s111 = sphi 0, %s111
      %s113 = sphi 0, %s111
      %s114 = sphi 0, %s113
      %s128 = sphi 0, %s114
      %s134 = sphi 0, %s136
      %s137 = sphi 0, %s134
      %s138 = sphi 0, %s137
      %s154 = sphi 0, %s138
    $region4: #{decoder_forward.1} parent=1 // loop_header_branch
      %17 = sbr.rel (%p15) target = $region8
    $region5: #{decoder_forward.1} parent=1 // loop_body
      %s19 = ssub.s32 %s14, 1
      %s20 = ssub.s32 %s14, 2
      %s21 = sadd.s32 %s14, 1
      %s22 = ssub.s32 %s14, %s21
      %p23 = scmp.eq.s32.totalorder %s22, 0
      %s25 = sadd.s32 %s24, 1
      %s26 = scalar_select %p23, %s24, %s25
      %p29 = pneg %p23
      %p30 = scmp.eq.s32.totalorder %s14, 1
      %p31 = por %p29, %p30
      %p32 = scmp.ne.s32.totalorder %s24, %s27
      %p33 = scmp.eq.s32.totalorder %s14, 0
      %p34 = por %p32, %p33
      %p35 = scmp.ne.s32.totalorder %s24, %s27
      %p36 = scmp.eq.s32.totalorder %s19, 1
      %p37 = por %p35, %p36
      %p38 = scmp.ne.s32.totalorder %s27, %s28
      %p39 = scmp.eq.s32.totalorder %s19, 0
      %p40 = por %p38, %p39
      %p41 = scmp.ne.s32.totalorder %s27, %s28
      %p42 = scmp.eq.s32.totalorder %s20, 1
      %p43 = por %p41, %p42
      %p45 = scmp.ne.s32.totalorder %s28, %s44
      %p46 = scmp.eq.s32.totalorder %s20, 0
      %p47 = por %p45, %p46
      %s49 = sadd.s32 %s48, 1
      %p52 = scmp.eq.s32.totalorder %s14, 1
      %p53 = scmp.ne.s32.totalorder %s48, %s50
      %p54 = scmp.eq.s32.totalorder %s14, 0
      %p55 = por %p53, %p54
      %p56 = scmp.ne.s32.totalorder %s48, %s50
      %p57 = scmp.eq.s32.totalorder %s19, 1
      %p58 = por %p56, %p57
      %p59 = scmp.ne.s32.totalorder %s50, %s51
      %p60 = scmp.eq.s32.totalorder %s19, 0
      %p61 = por %p59, %p60
      %p62 = scmp.ne.s32.totalorder %s50, %s51
      %p63 = scmp.eq.s32.totalorder %s20, 1
      %p64 = por %p62, %p63
      %p66 = scmp.ne.s32.totalorder %s51, %s65
      %p67 = scmp.eq.s32.totalorder %s20, 0
      %p68 = por %p66, %p67
      %s70 = sadd.s32 %s69, 1
      %p73 = scmp.eq.s32.totalorder %s14, 1
      %p74 = scmp.ne.s32.totalorder %s69, %s71
      %p75 = scmp.eq.s32.totalorder %s14, 0
      %p76 = por %p74, %p75
      %p77 = scmp.ne.s32.totalorder %s69, %s71
      %p78 = scmp.eq.s32.totalorder %s19, 1
      %p79 = por %p77, %p78
      %p80 = scmp.ne.s32.totalorder %s71, %s72
      %p81 = scmp.eq.s32.totalorder %s19, 0
      %p82 = por %p80, %p81
      %p83 = scmp.ne.s32.totalorder %s71, %s72
      %p84 = scmp.eq.s32.totalorder %s20, 1
      %p85 = por %p83, %p84
      %p87 = scmp.ne.s32.totalorder %s72, %s86
      %p88 = scmp.eq.s32.totalorder %s20, 0
      %p89 = por %p87, %p88
      %s91 = sadd.s32 %s90, 1
      %p94 = scmp.eq.s32.totalorder %s14, 1
      %p95 = scmp.ne.s32.totalorder %s90, %s92
      %p96 = scmp.eq.s32.totalorder %s14, 0
      %p97 = por %p95, %p96
      %p98 = scmp.ne.s32.totalorder %s90, %s92
      %p99 = scmp.eq.s32.totalorder %s19, 1
      %p100 = por %p98, %p99
      %p101 = scmp.ne.s32.totalorder %s92, %s93
      %p102 = scmp.eq.s32.totalorder %s19, 0
      %p103 = por %p101, %p102
      %p104 = scmp.ne.s32.totalorder %s92, %s93
      %p105 = scmp.eq.s32.totalorder %s20, 1
      %p106 = por %p104, %p105
      %p108 = scmp.ne.s32.totalorder %s93, %s107
      %p109 = scmp.eq.s32.totalorder %s20, 0
      %p110 = por %p108, %p109
      %s112 = sadd.s32 %s111, 1
      %p115 = scmp.eq.s32.totalorder %s14, 1
      %p116 = scmp.ne.s32.totalorder %s111, %s113
      %p117 = scmp.eq.s32.totalorder %s14, 0
      %p118 = por %p116, %p117
      %p119 = scmp.ne.s32.totalorder %s111, %s113
      %p120 = scmp.eq.s32.totalorder %s19, 1
      %p121 = por %p119, %p120
      %p122 = scmp.ne.s32.totalorder %s113, %s114
      %p123 = scmp.eq.s32.totalorder %s19, 0
      %p124 = por %p122, %p123
      %p125 = scmp.ne.s32.totalorder %s113, %s114
      %p126 = scmp.eq.s32.totalorder %s20, 1
      %p127 = por %p125, %p126
      %p129 = scmp.ne.s32.totalorder %s114, %s128
      %p130 = scmp.eq.s32.totalorder %s20, 0
      %p131 = por %p129, %p130
      %s132 = ssub.s32 %s14, %s21
      %p133 = scmp.eq.s32.totalorder %s132, 0
      %s135 = sadd.s32 %s134, 1
      %s136 = scalar_select %p133, %s134, %s135
      %p139 = pneg %p133
      %p140 = scmp.eq.s32.totalorder %s14, 1
      %p141 = por %p139, %p140
      %p142 = scmp.ne.s32.totalorder %s134, %s137
      %p143 = scmp.eq.s32.totalorder %s14, 0
      %p144 = por %p142, %p143
      %p145 = scmp.ne.s32.totalorder %s134, %s137
      %p146 = scmp.eq.s32.totalorder %s19, 1
      %p147 = por %p145, %p146
      %p148 = scmp.ne.s32.totalorder %s137, %s138
      %p149 = scmp.eq.s32.totalorder %s19, 0
      %p150 = por %p148, %p149
      %p151 = scmp.ne.s32.totalorder %s137, %s138
      %p152 = scmp.eq.s32.totalorder %s20, 1
      %p153 = por %p151, %p152
      %p155 = scmp.ne.s32.totalorder %s138, %s154
      %p156 = scmp.eq.s32.totalorder %s20, 0
      %p157 = por %p155, %p156
      %p158 = scmp.le.s32.totalorder 1, %s14
      %p159 = scmp.lt.s32.totalorder %s14, 3
      %p160 = pnand %p158, %p159
      %p161 = pneg %p160
      // Predicated region
      $region9: #{decoder_forward.1} parent=5 // pred_check
        _
      $region10: #{decoder_forward.1} parent=5 // pred_check_branch
        %163 = sbr.rel (%p160) target = $region12
      $region11: #{decoder_forward.1} parent=5 // pred_region
        %s164 = ssub.s32 %s14, 1
        // Predicated region
        $region13: #{decoder_forward.1} parent=11 // pred_check
          %p165 = pneg %p61
        $region14: #{decoder_forward.1} parent=11 // pred_check_branch
          %167 = sbr.rel (%p165) target = $region16
        $region15: #{decoder_forward.1} parent=11 // pred_region
          _
        $region16: #{decoder_forward.1} parent=11 // pred_fallthru
          _
        // Predicated region
        $region17: #{decoder_forward.1} parent=11 // pred_check
          %p168 = pneg %p82
        $region18: #{decoder_forward.1} parent=11 // pred_check_branch
          %170 = sbr.rel (%p168) target = $region20
        $region19: #{decoder_forward.1} parent=11 // pred_region
          _
        $region20: #{decoder_forward.1} parent=11 // pred_fallthru
          _
        // Predicated region
        $region21: #{decoder_forward.1} parent=11 // pred_check
          %p171 = pneg %p103
        $region22: #{decoder_forward.1} parent=11 // pred_check_branch
          %173 = sbr.rel (%p171) target = $region24
        $region23: #{decoder_forward.1} parent=11 // pred_region
          _
        $region24: #{decoder_forward.1} parent=11 // pred_fallthru
          _
        // Predicated region
        $region25: #{decoder_forward.1} parent=11 // pred_check
          %p174 = pneg %p124
        $region26: #{decoder_forward.1} parent=11 // pred_check_branch
          %176 = sbr.rel (%p174) target = $region28
        $region27: #{decoder_forward.1} parent=11 // pred_region
          _
        $region28: #{decoder_forward.1} parent=11 // pred_fallthru
          _
      $region12: #{decoder_forward.1} parent=5 // pred_fallthru
        _
      %p177 = scmp.lt.s32.totalorder %s14, 2
      // Predicated region
      $region29: #{decoder_forward.1} parent=5 // pred_check
        %p178 = pneg %p177
      $region30: #{decoder_forward.1} parent=5 // pred_check_branch
        %180 = sbr.rel (%p178) target = $region32
      $region31: #{decoder_forward.1} parent=5 // pred_region
        // Predicated region
        $region33: #{decoder_forward.1} parent=31 // pred_check
          %p181 = pneg %p34
        $region34: #{decoder_forward.1} parent=31 // pred_check_branch
          %183 = sbr.rel (%p181) target = $region36
        $region35: #{decoder_forward.1} parent=31 // pred_region
          %p184 = scmp.lt.s32.totalorder %s14, 1
          %s185 = scalar_select %p184, %s14, 1
          %s186 = smul.addr %s185, 8
          %s187 = scalar_lea.vmem %s0, %s186
        $region36: #{decoder_forward.1} parent=31 // pred_fallthru
          _
      $region32: #{decoder_forward.1} parent=5 // pred_fallthru
        _
      %p188 = scmp.le.s32.totalorder 1, %s14
      %p189 = scmp.lt.s32.totalorder %s14, 3
      %p190 = pnand %p188, %p189
      %p191 = pneg %p190
      // Predicated region
      $region37: #{decoder_forward.1} parent=5 // pred_check
        _
      $region38: #{decoder_forward.1} parent=5 // pred_check_branch
        %193 = sbr.rel (%p190) target = $region40
      $region39: #{decoder_forward.1} parent=5 // pred_region
        %s194 = ssub.s32 %s14, 1
        %p195 = scmp.lt.s32.totalorder %s19, 1
        %s196 = scalar_select %p195, %s19, 1
        %s197 = smul.addr %s196, 8
        %s198 = scalar_lea.vmem %s0, %s197
        %p199 = pneg %p40
        %p200 = pneg %p37
        %p201 = pneg %p61
        %p202 = pneg %p58
        %p203 = pneg %p82
        %p204 = pneg %p79
        %p205 = pneg %p103
        %p206 = pneg %p100
        %p207 = pneg %p124
        %p208 = pneg %p121
        %p209 = pneg %p150
        %p210 = pneg %p147
        %s211 = sand.u32 %s137, 1
        %s212 = scalar_lea.sflag [#allocation3], %s211
        %s213 = sand.u32 %s137, 1
        %s214 = smul.addr %s213, 8
        %s215 = scalar_lea.vmem [#allocation2], %s214
        %p216 = scmp.lt.s32.totalorder %s19, 1
        %s217 = scalar_select %p216, %s19, 1
        %s218 = smul.addr %s217, 8
        %s219 = scalar_lea.vmem %s0, %s218
        %v220 = vld [vmem:[%s219] sm:$0xff]
        %v221 = vld [vmem:[%s1] sm:$0xff]
        %v222 = vadd.f32 %v220, %v221
        %v223 = vld [vmem:[%s2] sm:$0xff]
        %v224 = vld [vmem:[%s2 + $0x8] sm:$0xff]
        %v225 = vld [vmem:[%s2 + $0x10] sm:$0xff]
        %v226 = vld [vmem:[%s2 + $0x18] sm:$0xff]
        %v227 = vld [vmem:[%s2 + $0x20] sm:$0xff]
        %v228 = vld [vmem:[%s2 + $0x28] sm:$0xff]
        %v229 = vld [vmem:[%s2 + $0x30] sm:$0xff]
        %v230 = vld [vmem:[%s2 + $0x38] sm:$0xff]
        %v231 = vld [vmem:[%s2 + $0x40] sm:$0xff]
        %v232 = vld [vmem:[%s2 + $0x48] sm:$0xff]
        %v233 = vld [vmem:[%s2 + $0x50] sm:$0xff]
        %v234 = vld [vmem:[%s2 + $0x58] sm:$0xff]
        %v235 = vld [vmem:[%s2 + $0x60] sm:$0xff]
        %v236 = vld [vmem:[%s2 + $0x68] sm:$0xff]
        %v237 = vld [vmem:[%s2 + $0x70] sm:$0xff]
        %v238 = vld [vmem:[%s2 + $0x78] sm:$0xff]
        %v239 = vld [vmem:[%s2 + $0x80] sm:$0xff]
        %v240 = vld [vmem:[%s2 + $0x88] sm:$0xff]
        %v241 = vld [vmem:[%s2 + $0x90] sm:$0xff]
        %v242 = vld [vmem:[%s2 + $0x98] sm:$0xff]
        %v243 = vld [vmem:[%s2 + $0xa0] sm:$0xff]
        %v244 = vld [vmem:[%s2 + $0xa8] sm:$0xff]
        %v245 = vld [vmem:[%s2 + $0xb0] sm:$0xff]
        %v246 = vld [vmem:[%s2 + $0xb8] sm:$0xff]
        %v247 = vld [vmem:[%s2 + $0xc0] sm:$0xff]
        %v248 = vld [vmem:[%s2 + $0xc8] sm:$0xff]
        %v249 = vld [vmem:[%s2 + $0xd0] sm:$0xff]
        %v250 = vld [vmem:[%s2 + $0xd8] sm:$0xff]
        %v251 = vld [vmem:[%s4] sm:$0xff]
        %v252 = vld [vmem:[%s4 + $0x8] sm:$0xff]
        %v253 = vld [vmem:[%s4 + $0x10] sm:$0x1]
        %v254 = vld [vmem:[%s3] sm:$0xff]
        %v255 = vld [vmem:[%s3 + $0x8] sm:$0xff]
        %v256 = vld [vmem:[%s3 + $0x10] sm:$0xff]
        %v257 = vld [vmem:[%s3 + $0x18] sm:$0xff]
        %v258 = vld [vmem:[%s3 + $0x20] sm:$0xff]
        %v259 = vld [vmem:[%s3 + $0x28] sm:$0xff]
        %v260 = vld [vmem:[%s3 + $0x30] sm:$0xff]
        %v261 = vld [vmem:[%s3 + $0x38] sm:$0xff]
        %v262 = vld [vmem:[%s3 + $0x40] sm:$0xff]
        %v263 = vld [vmem:[%s3 + $0x48] sm:$0xff]
        %v264 = vld [vmem:[%s3 + $0x50] sm:$0xff]
        %v265 = vld [vmem:[%s3 + $0x58] sm:$0xff]
        %v266 = vld [vmem:[%s3 + $0x60] sm:$0xff]
        %v267 = vld [vmem:[%s3 + $0x68] sm:$0xff]
        %v268 = vld [vmem:[%s3 + $0x70] sm:$0xff]
        %v269 = vld [vmem:[%s3 + $0x78] sm:$0xff]
        %vm270 = vcmask 261120
        %v271 = vsel %vm270, %v222, 0.0
        %272 = vadd.xlane.f32.xlu0 %v271
        %v273 = vpop.xlane.xlu0 %272
        %v274 = vrcp.pop 32.0
        %v275 = vmul.f32 %v273, %v274
        %v276 = vsub.f32 %v222, %v275
        %v277 = vmul.f32 %v276, %v276
        %v278 = vsel %vm270, %v277, 0.0
        %279 = vadd.xlane.f32.xlu0 %v278
        %v280 = vpop.xlane.xlu0 %279
        %v281 = vmul.f32 %v280, %v274
        %v282 = vadd.f32 %v281, 1e-05
        %v283 = vrsqrt.pop %v282
        %v284 = vmul.f32 %v276, %v283
        %v285 = vlaneseq
        %v286 = vshrl.u32 %v285, 7
        %v287 = vsub.s32 0, %v286
        %v288 = vrot.slane %v251, %v287
        %v289 = vmul.f32 %v284, %v288
        %v290 = vlaneseq
        %v291 = vshrl.u32 %v290, 7
        %v292 = vsub.s32 1, %v291
        %v293 = vrot.slane %v251, %v292
        %v294 = vadd.f32 %v289, %v293
        %v295 = vlaneseq
        %v296 = vshrl.u32 %v295, 7
        %v297 = vsub.s32 2, %v296
        %v298 = vrot.slane %v251, %v297
        %v300 = vsel %vm270, %v294, 0
        %302 = vmatprep.subr.mxu0 0.0
        %303 = vmatpush1.msra.mxu0 %v223
        %304 = vmatprep.subr.mxu0 0.0
        %305 = vmatpush1.msra.mxu0 %v230
        %306 = vmatprep.subr.mxu0 0.0
        %307 = vmatpush1.msra.mxu0 %v237
        %308 = vmatprep.subr.mxu0 0.0
        %309 = vmatpush1.msra.mxu0 %v244
        %310 = vmatprep.subr.mxu0 0.0
        %311 = vmatpush1.msra.mxu0 0.0
        %312 = vmatprep.subr.mxu0 0.0
        %313 = vmatpush1.msra.mxu0 0.0
        %314 = vmatprep.subr.mxu0 0.0
        %315 = vmatpush1.msra.mxu0 0.0
        %316 = vmatprep.subr.mxu0 0.0
        %317 = vmatpush1.msra.mxu0 0.0
        %318 = vmatprep.subr.mxu0 0.0
        %319 = vmatpush1.msra.mxu0 0.0
        %320 = vmatprep.subr.mxu0 0.0
        %321 = vmatpush1.msra.mxu0 0.0
        %322 = vmatprep.subr.mxu0 0.0
        %323 = vmatpush1.msra.mxu0 0.0
        %324 = vmatprep.subr.mxu0 0.0
        %325 = vmatpush1.msra.mxu0 0.0
        %326 = vmatprep.subr.mxu0 0.0
        %327 = vmatpush1.msra.mxu0 0.0
        %328 = vmatprep.subr.mxu0 0.0
        %329 = vmatpush1.msra.mxu0 0.0
        %330 = vmatprep.subr.mxu0 0.0
        %331 = vmatpush1.msra.mxu0 0.0
        %332 = vmatprep.subr.mxu0 0.0
        %333 = vmatpush1.msra.mxu0 0.0
        %334 = vmatprep.subr.mxu0 0.0
        %335 = vmatpush1.msra.mxu0 0.0
        %336 = vmatprep.subr.mxu0 0.0
        %337 = vmatpush1.msra.mxu0 0.0
        %338 = vmatprep.subr.mxu0 0.0
        %339 = vmatpush1.msra.mxu0 0.0
        %340 = vmatprep.subr.mxu0 0.0
        %341 = vmatpush1.msra.mxu0 0.0
        %342 = vmatprep.subr.mxu0 0.0
        %343 = vmatpush1.msra.mxu0 0.0
        %344 = vmatprep.subr.mxu0 0.0
        %345 = vmatpush1.msra.mxu0 0.0
        %346 = vmatprep.subr.mxu0 0.0
        %347 = vmatpush1.msra.mxu0 0.0
        %348 = vmatprep.subr.mxu0 0.0
        %349 = vmatpush1.msra.mxu0 0.0
        %350 = vmatprep.subr.mxu0 0.0
        %351 = vmatpush1.msra.mxu0 0.0
        %352 = vmatprep.subr.mxu0 0.0
        %353 = vmatpush1.msra.mxu0 0.0
        %354 = vmatprep.subr.mxu0 0.0
        %355 = vmatpush1.msra.mxu0 0.0
        %356 = vmatprep.subr.mxu0 0.0
        %357 = vmatpush1.msra.mxu0 0.0
        %358 = vmatprep.subr.mxu0 0.0
        %359 = vmatpush1.msra.mxu0 0.0
        %360 = vmatprep.subr.mxu0 0.0
        %361 = vmatpush1.msra.mxu0 0.0
        %362 = vmatprep.subr.mxu0 0.0
        %363 = vmatpush1.msra.mxu0 0.0
        %364 = vmatprep.subr.mxu0 0.0
        %365 = vmatpush1.msra.mxu0 0.0
        %366 = vmatprep.mubr.f32.mxu0 0.0
        %367 = vmatmul.mubr.f32.gmra.mrb[0].mxu0 %v300
        %v368 = vpop.f32.mrb[0].mxu0
        %v369 = vadd.f32 %v298, %v368
        %v370 = vpop.f32.mrb[0].mxu0
        %371 = vdwg.mxu0
        %373 = vrot.lane.b32.xlu0 %v369, 96
        %v374 = vpop.permute.xlu0 %373
        %vm375 = vcmask 64512
        %v376 = vsel %vm375, %v369, 0
        %v378 = vsel %vm375, %v374, 0
        %380 = vmatprep.subr.mxu0 0.0
        %381 = vmatpush1.xpose.msra.mxu0 %v378
        %382 = vmatprep.subr.mxu0 0.0
        %383 = vmatpush1.xpose.msra.mxu0 0.0
        %384 = vmatprep.subr.mxu0 0.0
        %385 = vmatpush1.xpose.msra.mxu0 0.0
        %386 = vmatprep.subr.mxu0 0.0
        %387 = vmatpush1.xpose.msra.mxu0 0.0
        %388 = vmatprep.subr.mxu0 0.0
        %389 = vmatpush1.xpose.msra.mxu0 0.0
        %390 = vmatprep.subr.mxu0 0.0
        %391 = vmatpush1.xpose.msra.mxu0 0.0
        %392 = vmatprep.subr.mxu0 0.0
        %393 = vmatpush1.xpose.msra.mxu0 0.0
        %394 = vmatprep.subr.mxu0 0.0
        %395 = vmatpush1.xpose.msra.mxu0 0.0
        %396 = vmatprep.subr.mxu0 0.0
        %397 = vmatpush1.xpose.msra.mxu0 0.0
        %398 = vmatprep.subr.mxu0 0.0
        %399 = vmatpush1.xpose.msra.mxu0 0.0
        %400 = vmatprep.subr.mxu0 0.0
        %401 = vmatpush1.xpose.msra.mxu0 0.0
        %402 = vmatprep.subr.mxu0 0.0
        %403 = vmatpush1.xpose.msra.mxu0 0.0
        %404 = vmatprep.subr.mxu0 0.0
        %405 = vmatpush1.xpose.msra.mxu0 0.0
        %406 = vmatprep.subr.mxu0 0.0
        %407 = vmatpush1.xpose.msra.mxu0 0.0
        %408 = vmatprep.subr.mxu0 0.0
        %409 = vmatpush1.xpose.msra.mxu0 0.0
        %410 = vmatprep.subr.mxu0 0.0
        %411 = vmatpush1.xpose.msra.mxu0 0.0
        %412 = vmatprep.subr.mxu0 0.0
        %413 = vmatpush1.xpose.msra.mxu0 0.0
        %414 = vmatprep.subr.mxu0 0.0
        %415 = vmatpush1.xpose.msra.mxu0 0.0
        %416 = vmatprep.subr.mxu0 0.0
        %417 = vmatpush1.xpose.msra.mxu0 0.0
        %418 = vmatprep.subr.mxu0 0.0
        %419 = vmatpush1.xpose.msra.mxu0 0.0
        %420 = vmatprep.subr.mxu0 0.0
        %421 = vmatpush1.xpose.msra.mxu0 0.0
        %422 = vmatprep.subr.mxu0 0.0
        %423 = vmatpush1.xpose.msra.mxu0 0.0
        %424 = vmatprep.subr.mxu0 0.0
        %425 = vmatpush1.xpose.msra.mxu0 0.0
        %426 = vmatprep.subr.mxu0 0.0
        %427 = vmatpush1.xpose.msra.mxu0 0.0
        %428 = vmatprep.subr.mxu0 0.0
        %429 = vmatpush1.xpose.msra.mxu0 0.0
        %430 = vmatprep.subr.mxu0 0.0
        %431 = vmatpush1.xpose.msra.mxu0 0.0
        %432 = vmatprep.subr.mxu0 0.0
        %433 = vmatpush1.xpose.msra.mxu0 0.0
        %434 = vmatprep.subr.mxu0 0.0
        %435 = vmatpush1.xpose.msra.mxu0 0.0
        %436 = vmatprep.subr.mxu0 0.0
        %437 = vmatpush1.xpose.msra.mxu0 0.0
        %438 = vmatprep.subr.mxu0 0.0
        %439 = vmatpush1.xpose.msra.mxu0 0.0
        %440 = vmatprep.subr.mxu0 0.0
        %441 = vmatpush1.xpose.msra.mxu0 0.0
        %442 = vmatprep.subr.mxu0 0.0
        %443 = vmatpush1.xpose.msra.mxu0 0.0
        %444 = vmatprep.mubr.f32.mxu0 0.0
        %445 = vmatmul.mubr.f32.gmra.mrb[0].mxu0 %v376
        %v446 = vpop.f32.mrb[0].mxu0
        %v447 = vadd.f32 0.0, %v446
        %v448 = vpop.f32.mrb[0].mxu0
        %449 = vdwg.mxu0
        %v450 = vmul.f32 %v447, 0.35355338
        %v451 = vsel %vm375, %v450, -inf
        %452 = vmax.xlane.f32.xlu0 %v451
        %v453 = vpop.xlane.xlu0 %452
        %v454 = vsub.f32 %v450, %v453
        %v455 = vmul.f32 %v454, 1.442695
        %v456 = vpow.pop %v455
        %v457 = vsel %vm375, %v456, 0.0
        %458 = vadd.xlane.f32.xlu0 %v457
        %v459 = vpop.xlane.xlu0 %458
        %v460 = vrcp.pop %v459
        %v461 = vmul.f32 %v456, %v460
        %462 = vrot.lane.b32.xlu0 %v369, 64
        %v463 = vpop.permute.xlu0 %462
        %v466 = vsel %vm375, %v461, 0
        %468 = vmatprep.subr.mxu0 0.0
        %469 = vmatpush1.msra.mxu0 %v463
        %470 = vmatprep.subr.mxu0 0.0
        %471 = vmatpush1.msra.mxu0 0.0
        %472 = vmatprep.subr.mxu0 0.0
        %473 = vmatpush1.msra.mxu0 0.0
        %474 = vmatprep.subr.mxu0 0.0
        %475 = vmatpush1.msra.mxu0 0.0
        %476 = vmatprep.subr.mxu0 0.0
        %477 = vmatpush1.msra.mxu0 0.0
        %478 = vmatprep.subr.mxu0 0.0
        %479 = vmatpush1.msra.mxu0 0.0
        %480 = vmatprep.subr.mxu0 0.0
        %481 = vmatpush1.msra.mxu0 0.0
        %482 = vmatprep.subr.mxu0 0.0
        %483 = vmatpush1.msra.mxu0 0.0
        %484 = vmatprep.subr.mxu0 0.0
        %485 = vmatpush1.msra.mxu0 0.0
        %486 = vmatprep.subr.mxu0 0.0
        %487 = vmatpush1.msra.mxu0 0.0
        %488 = vmatprep.subr.mxu0 0.0
        %489 = vmatpush1.msra.mxu0 0.0
        %490 = vmatprep.subr.mxu0 0.0
        %491 = vmatpush1.msra.mxu0 0.0
        %492 = vmatprep.subr.mxu0 0.0
        %493 = vmatpush1.msra.mxu0 0.0
        %494 = vmatprep.subr.mxu0 0.0
        %495 = vmatpush1.msra.mxu0 0.0
        %496 = vmatprep.subr.mxu0 0.0
        %497 = vmatpush1.msra.mxu0 0.0
        %498 = vmatprep.subr.mxu0 0.0
        %499 = vmatpush1.msra.mxu0 0.0
        %500 = vmatprep.subr.mxu0 0.0
        %501 = vmatpush1.msra.mxu0 0.0
        %502 = vmatprep.subr.mxu0 0.0
        %503 = vmatpush1.msra.mxu0 0.0
        %504 = vmatprep.subr.mxu0 0.0
        %505 = vmatpush1.msra.mxu0 0.0
        %506 = vmatprep.subr.mxu0 0.0
        %507 = vmatpush1.msra.mxu0 0.0
        %508 = vmatprep.subr.mxu0 0.0
        %509 = vmatpush1.msra.mxu0 0.0
        %510 = vmatprep.subr.mxu0 0.0
        %511 = vmatpush1.msra.mxu0 0.0
        %512 = vmatprep.subr.mxu0 0.0
        %513 = vmatpush1.msra.mxu0 0.0
        %514 = vmatprep.subr.mxu0 0.0
        %515 = vmatpush1.msra.mxu0 0.0
        %516 = vmatprep.subr.mxu0 0.0
        %517 = vmatpush1.msra.mxu0 0.0
        %518 = vmatprep.subr.mxu0 0.0
        %519 = vmatpush1.msra.mxu0 0.0
        %520 = vmatprep.subr.mxu0 0.0
        %521 = vmatpush1.msra.mxu0 0.0
        %522 = vmatprep.subr.mxu0 0.0
        %523 = vmatpush1.msra.mxu0 0.0
        %524 = vmatprep.subr.mxu0 0.0
        %525 = vmatpush1.msra.mxu0 0.0
        %526 = vmatprep.subr.mxu0 0.0
        %527 = vmatpush1.msra.mxu0 0.0
        %528 = vmatprep.subr.mxu0 0.0
        %529 = vmatpush1.msra.mxu0 0.0
        %530 = vmatprep.subr.mxu0 0.0
        %531 = vmatpush1.msra.mxu0 0.0
        %532 = vmatprep.mubr.f32.mxu0 0.0
        %533 = vmatmul.mubr.f32.gmra.mrb[0].mxu0 %v466
        %v534 = vpop.f32.mrb[0].mxu0
        %v535 = vadd.f32 0.0, %v534
        %v536 = vpop.f32.mrb[0].mxu0
        %537 = vdwg.mxu0
        %538 = vrot.lane.b32.xlu0 %v369, 120
        %v539 = vpop.permute.xlu0 %538
        %540 = vrot.lane.b32.xlu0 %v369, 88
        %v541 = vpop.permute.xlu0 %540
        %v542 = vsel %vm375, %v539, 0
        %v544 = vsel %vm375, %v541, 0
        %546 = vmatprep.subr.mxu0 0.0
        %547 = vmatpush1.xpose.msra.mxu0 %v544
        %548 = vmatprep.subr.mxu0 0.0
        %549 = vmatpush1.xpose.msra.mxu0 0.0
        %550 = vmatprep.subr.mxu0 0.0
        %551 = vmatpush1.xpose.msra.mxu0 0.0
        %552 = vmatprep.subr.mxu0 0.0
        %553 = vmatpush1.xpose.msra.mxu0 0.0
        %554 = vmatprep.subr.mxu0 0.0
        %555 = vmatpush1.xpose.msra.mxu0 0.0
        %556 = vmatprep.subr.mxu0 0.0
        %557 = vmatpush1.xpose.msra.mxu0 0.0
        %558 = vmatprep.subr.mxu0 0.0
        %559 = vmatpush1.xpose.msra.mxu0 0.0
        %560 = vmatprep.subr.mxu0 0.0
        %561 = vmatpush1.xpose.msra.mxu0 0.0
        %562 = vmatprep.subr.mxu0 0.0
        %563 = vmatpush1.xpose.msra.mxu0 0.0
        %564 = vmatprep.subr.mxu0 0.0
        %565 = vmatpush1.xpose.msra.mxu0 0.0
        %566 = vmatprep.subr.mxu0 0.0
        %567 = vmatpush1.xpose.msra.mxu0 0.0
        %568 = vmatprep.subr.mxu0 0.0
        %569 = vmatpush1.xpose.msra.mxu0 0.0
        %570 = vmatprep.subr.mxu0 0.0
        %571 = vmatpush1.xpose.msra.mxu0 0.0
        %572 = vmatprep.subr.mxu0 0.0
        %573 = vmatpush1.xpose.msra.mxu0 0.0
        %574 = vmatprep.subr.mxu0 0.0
        %575 = vmatpush1.xpose.msra.mxu0 0.0
        %576 = vmatprep.subr.mxu0 0.0
        %577 = vmatpush1.xpose.msra.mxu0 0.0
        %578 = vmatprep.subr.mxu0 0.0
        %579 = vmatpush1.xpose.msra.mxu0 0.0
        %580 = vmatprep.subr.mxu0 0.0
        %581 = vmatpush1.xpose.msra.mxu0 0.0
        %582 = vmatprep.subr.mxu0 0.0
        %583 = vmatpush1.xpose.msra.mxu0 0.0
        %584 = vmatprep.subr.mxu0 0.0
        %585 = vmatpush1.xpose.msra.mxu0 0.0
        %586 = vmatprep.subr.mxu0 0.0
        %587 = vmatpush1.xpose.msra.mxu0 0.0
        %588 = vmatprep.subr.mxu0 0.0
        %589 = vmatpush1.xpose.msra.mxu0 0.0
        %590 = vmatprep.subr.mxu0 0.0
        %591 = vmatpush1.xpose.msra.mxu0 0.0
        %592 = vmatprep.subr.mxu0 0.0
        %593 = vmatpush1.xpose.msra.mxu0 0.0
        %594 = vmatprep.subr.mxu0 0.0
        %595 = vmatpush1.xpose.msra.mxu0 0.0
        %596 = vmatprep.subr.mxu0 0.0
        %597 = vmatpush1.xpose.msra.mxu0 0.0
        %598 = vmatprep.subr.mxu0 0.0
        %599 = vmatpush1.xpose.msra.mxu0 0.0
        %600 = vmatprep.subr.mxu0 0.0
        %601 = vmatpush1.xpose.msra.mxu0 0.0
        %602 = vmatprep.subr.mxu0 0.0
        %603 = vmatpush1.xpose.msra.mxu0 0.0
        %604 = vmatprep.subr.mxu0 0.0
        %605 = vmatpush1.xpose.msra.mxu0 0.0
        %606 = vmatprep.subr.mxu0 0.0
        %607 = vmatpush1.xpose.msra.mxu0 0.0
        %608 = vmatprep.subr.mxu0 0.0
        %609 = vmatpush1.xpose.msra.mxu0 0.0
        %610 = vmatprep.mubr.f32.mxu0 0.0
        %611 = vmatmul.mubr.f32.gmra.mrb[0].mxu0 %v542
        %v612 = vpop.f32.mrb[0].mxu0
        %v613 = vadd.f32 0.0, %v612
        %v614 = vpop.f32.mrb[0].mxu0
        %615 = vdwg.mxu0
        %v616 = vmul.f32 %v613, 0.35355338
        %v617 = vsel %vm375, %v616, -inf
        %618 = vmax.xlane.f32.xlu0 %v617
        %v619 = vpop.xlane.xlu0 %618
        %v620 = vsub.f32 %v616, %v619
        %v621 = vmul.f32 %v620, 1.442695
        %v622 = vpow.pop %v621
        %v623 = vsel %vm375, %v622, 0.0
        %624 = vadd.xlane.f32.xlu0 %v623
        %v625 = vpop.xlane.xlu0 %624
        %v626 = vrcp.pop %v625
        %v627 = vmul.f32 %v622, %v626
        %628 = vrot.lane.b32.xlu0 %v369, 56
        %v629 = vpop.permute.xlu0 %628
        %v632 = vsel %vm375, %v627, 0
        %634 = vmatprep.subr.mxu0 0.0
        %635 = vmatpush1.msra.mxu0 %v629
        %636 = vmatprep.subr.mxu0 0.0
        %637 = vmatpush1.msra.mxu0 0.0
        %638 = vmatprep.subr.mxu0 0.0
        %639 = vmatpush1.msra.mxu0 0.0
        %640 = vmatprep.subr.mxu0 0.0
        %641 = vmatpush1.msra.mxu0 0.0
        %642 = vmatprep.subr.mxu0 0.0
        %643 = vmatpush1.msra.mxu0 0.0
        %644 = vmatprep.subr.mxu0 0.0
        %645 = vmatpush1.msra.mxu0 0.0
        %646 = vmatprep.subr.mxu0 0.0
        %647 = vmatpush1.msra.mxu0 0.0
        %648 = vmatprep.subr.mxu0 0.0
        %649 = vmatpush1.msra.mxu0 0.0
        %650 = vmatprep.subr.mxu0 0.0
        %651 = vmatpush1.msra.mxu0 0.0
        %652 = vmatprep.subr.mxu0 0.0
        %653 = vmatpush1.msra.mxu0 0.0
        %654 = vmatprep.subr.mxu0 0.0
        %655 = vmatpush1.msra.mxu0 0.0
        %656 = vmatprep.subr.mxu0 0.0
        %657 = vmatpush1.msra.mxu0 0.0
        %658 = vmatprep.subr.mxu0 0.0
        %659 = vmatpush1.msra.mxu0 0.0
        %660 = vmatprep.subr.mxu0 0.0
        %661 = vmatpush1.msra.mxu0 0.0
        %662 = vmatprep.subr.mxu0 0.0
        %663 = vmatpush1.msra.mxu0 0.0
        %664 = vmatprep.subr.mxu0 0.0
        %665 = vmatpush1.msra.mxu0 0.0
        %666 = vmatprep.subr.mxu0 0.0
        %667 = vmatpush1.msra.mxu0 0.0
        %668 = vmatprep.subr.mxu0 0.0
        %669 = vmatpush1.msra.mxu0 0.0
        %670 = vmatprep.subr.mxu0 0.0
        %671 = vmatpush1.msra.mxu0 0.0
        %672 = vmatprep.subr.mxu0 0.0
        %673 = vmatpush1.msra.mxu0 0.0
        %674 = vmatprep.subr.mxu0 0.0
        %675 = vmatpush1.msra.mxu0 0.0
        %676 = vmatprep.subr.mxu0 0.0
        %677 = vmatpush1.msra.mxu0 0.0
        %678 = vmatprep.subr.mxu0 0.0
        %679 = vmatpush1.msra.mxu0 0.0
        %680 = vmatprep.subr.mxu0 0.0
        %681 = vmatpush1.msra.mxu0 0.0
        %682 = vmatprep.subr.mxu0 0.0
        %683 = vmatpush1.msra.mxu0 0.0
        %684 = vmatprep.subr.mxu0 0.0
        %685 = vmatpush1.msra.mxu0 0.0
        %686 = vmatprep.subr.mxu0 0.0
        %687 = vmatpush1.msra.mxu0 0.0
        %688 = vmatprep.subr.mxu0 0.0
        %689 = vmatpush1.msra.mxu0 0.0
        %690 = vmatprep.subr.mxu0 0.0
        %691 = vmatpush1.msra.mxu0 0.0
        %692 = vmatprep.subr.mxu0 0.0
        %693 = vmatpush1.msra.mxu0 0.0
        %694 = vmatprep.subr.mxu0 0.0
        %695 = vmatpush1.msra.mxu0 0.0
        %696 = vmatprep.subr.mxu0 0.0
        %697 = vmatpush1.msra.mxu0 0.0
        %698 = vmatprep.mubr.f32.mxu0 0.0
        %699 = vmatmul.mubr.f32.gmra.mrb[0].mxu0 %v632
        %v700 = vpop.f32.mrb[0].mxu0
        %v701 = vadd.f32 0.0, %v700
        %v702 = vpop.f32.mrb[0].mxu0
        %703 = vdwg.mxu0
        %v705 = vsel %vm375, %v701, 0
        %707 = vmatprep.subr.mxu0 0.0
        %708 = vmatpush1.msra.mxu0 %v231
        %709 = vmatprep.subr.mxu0 0.0
        %710 = vmatpush1.msra.mxu0 0.0
        %711 = vmatprep.subr.mxu0 0.0
        %712 = vmatpush1.msra.mxu0 0.0
        %713 = vmatprep.subr.mxu0 0.0
        %714 = vmatpush1.msra.mxu0 0.0
        %715 = vmatprep.subr.mxu0 0.0
        %716 = vmatpush1.msra.mxu0 0.0
        %717 = vmatprep.subr.mxu0 0.0
        %718 = vmatpush1.msra.mxu0 0.0
        %719 = vmatprep.subr.mxu0 0.0
        %720 = vmatpush1.msra.mxu0 0.0
        %721 = vmatprep.subr.mxu0 0.0
        %722 = vmatpush1.msra.mxu0 0.0
        %723 = vmatprep.subr.mxu0 0.0
        %724 = vmatpush1.msra.mxu0 0.0
        %725 = vmatprep.subr.mxu0 0.0
        %726 = vmatpush1.msra.mxu0 0.0
        %727 = vmatprep.subr.mxu0 0.0
        %728 = vmatpush1.msra.mxu0 0.0
        %729 = vmatprep.subr.mxu0 0.0
        %730 = vmatpush1.msra.mxu0 0.0
        %731 = vmatprep.subr.mxu0 0.0
        %732 = vmatpush1.msra.mxu0 0.0
        %733 = vmatprep.subr.mxu0 0.0
        %734 = vmatpush1.msra.mxu0 0.0
        %735 = vmatprep.subr.mxu0 0.0
        %736 = vmatpush1.msra.mxu0 0.0
        %737 = vmatprep.subr.mxu0 0.0
        %738 = vmatpush1.msra.mxu0 0.0
        %739 = vmatprep.subr.mxu0 0.0
        %740 = vmatpush1.msra.mxu0 0.0
        %741 = vmatprep.subr.mxu0 0.0
        %742 = vmatpush1.msra.mxu0 0.0
        %743 = vmatprep.subr.mxu0 0.0
        %744 = vmatpush1.msra.mxu0 0.0
        %745 = vmatprep.subr.mxu0 0.0
        %746 = vmatpush1.msra.mxu0 0.0
        %747 = vmatprep.subr.mxu0 0.0
        %748 = vmatpush1.msra.mxu0 0.0
        %749 = vmatprep.subr.mxu0 0.0
        %750 = vmatpush1.msra.mxu0 0.0
        %751 = vmatprep.subr.mxu0 0.0
        %752 = vmatpush1.msra.mxu0 0.0
        %753 = vmatprep.subr.mxu0 0.0
        %754 = vmatpush1.msra.mxu0 0.0
        %755 = vmatprep.subr.mxu0 0.0
        %756 = vmatpush1.msra.mxu0 0.0
        %757 = vmatprep.subr.mxu0 0.0
        %758 = vmatpush1.msra.mxu0 0.0
        %759 = vmatprep.subr.mxu0 0.0
        %760 = vmatpush1.msra.mxu0 0.0
        %761 = vmatprep.subr.mxu0 0.0
        %762 = vmatpush1.msra.mxu0 0.0
        %763 = vmatprep.subr.mxu0 0.0
        %764 = vmatpush1.msra.mxu0 0.0
        %765 = vmatprep.subr.mxu0 0.0
        %766 = vmatpush1.msra.mxu0 0.0
        %767 = vmatprep.subr.mxu0 0.0
        %768 = vmatpush1.msra.mxu0 0.0
        %769 = vmatprep.subr.mxu0 0.0
        %770 = vmatpush1.msra.mxu0 0.0
        %771 = vmatprep.mubr.f32.mxu0 0.0
        %772 = vmatmul.mubr.f32.gmra.mrb[0].mxu0 %v705
        %v773 = vpop.f32.mrb[0].mxu0
        %v774 = vadd.f32 0.0, %v773
        %v775 = vpop.f32.mrb[0].mxu0
        %776 = vdwg.mxu0
        %v778 = vsel %vm375, %v535, 0
        %780 = vmatprep.subr.mxu0 0.0
        %781 = vmatpush1.msra.mxu0 %v224
        %782 = vmatprep.subr.mxu0 0.0
        %783 = vmatpush1.msra.mxu0 0.0
        %784 = vmatprep.subr.mxu0 0.0
        %785 = vmatpush1.msra.mxu0 0.0
        %786 = vmatprep.subr.mxu0 0.0
        %787 = vmatpush1.msra.mxu0 0.0
        %788 = vmatprep.subr.mxu0 0.0
        %789 = vmatpush1.msra.mxu0 0.0
        %790 = vmatprep.subr.mxu0 0.0
        %791 = vmatpush1.msra.mxu0 0.0
        %792 = vmatprep.subr.mxu0 0.0
        %793 = vmatpush1.msra.mxu0 0.0
        %794 = vmatprep.subr.mxu0 0.0
        %795 = vmatpush1.msra.mxu0 0.0
        %796 = vmatprep.subr.mxu0 0.0
        %797 = vmatpush1.msra.mxu0 0.0
        %798 = vmatprep.subr.mxu0 0.0
        %799 = vmatpush1.msra.mxu0 0.0
        %800 = vmatprep.subr.mxu0 0.0
        %801 = vmatpush1.msra.mxu0 0.0
        %802 = vmatprep.subr.mxu0 0.0
        %803 = vmatpush1.msra.mxu0 0.0
        %804 = vmatprep.subr.mxu0 0.0
        %805 = vmatpush1.msra.mxu0 0.0
        %806 = vmatprep.subr.mxu0 0.0
        %807 = vmatpush1.msra.mxu0 0.0
        %808 = vmatprep.subr.mxu0 0.0
        %809 = vmatpush1.msra.mxu0 0.0
        %810 = vmatprep.subr.mxu0 0.0
        %811 = vmatpush1.msra.mxu0 0.0
        %812 = vmatprep.subr.mxu0 0.0
        %813 = vmatpush1.msra.mxu0 0.0
        %814 = vmatprep.subr.mxu0 0.0
        %815 = vmatpush1.msra.mxu0 0.0
        %816 = vmatprep.subr.mxu0 0.0
        %817 = vmatpush1.msra.mxu0 0.0
        %818 = vmatprep.subr.mxu0 0.0
        %819 = vmatpush1.msra.mxu0 0.0
        %820 = vmatprep.subr.mxu0 0.0
        %821 = vmatpush1.msra.mxu0 0.0
        %822 = vmatprep.subr.mxu0 0.0
        %823 = vmatpush1.msra.mxu0 0.0
        %824 = vmatprep.subr.mxu0 0.0
        %825 = vmatpush1.msra.mxu0 0.0
        %826 = vmatprep.subr.mxu0 0.0
        %827 = vmatpush1.msra.mxu0 0.0
        %828 = vmatprep.subr.mxu0 0.0
        %829 = vmatpush1.msra.mxu0 0.0
        %830 = vmatprep.subr.mxu0 0.0
        %831 = vmatpush1.msra.mxu0 0.0
        %832 = vmatprep.subr.mxu0 0.0
        %833 = vmatpush1.msra.mxu0 0.0
        %834 = vmatprep.subr.mxu0 0.0
        %835 = vmatpush1.msra.mxu0 0.0
        %836 = vmatprep.subr.mxu0 0.0
        %837 = vmatpush1.msra.mxu0 0.0
        %838 = vmatprep.subr.mxu0 0.0
        %839 = vmatpush1.msra.mxu0 0.0
        %840 = vmatprep.subr.mxu0 0.0
        %841 = vmatpush1.msra.mxu0 0.0
        %842 = vmatprep.subr.mxu0 0.0
        %843 = vmatpush1.msra.mxu0 0.0
        %844 = vmatprep.mubr.f32.mxu0 0.0
        %845 = vmatmul.mubr.f32.gmra.mrb[0].mxu0 %v778
        %v846 = vpop.f32.mrb[0].mxu0
        %v847 = vadd.f32 %v774, %v846
        %v848 = vpop.f32.mrb[0].mxu0
        %849 = vdwg.mxu0
        %850 = vrot.lane.b32.xlu0 %v369, 112
        %v851 = vpop.permute.xlu0 %850
        %852 = vrot.lane.b32.xlu0 %v369, 80
        %v853 = vpop.permute.xlu0 %852
        %v854 = vsel %vm375, %v851, 0
        %v856 = vsel %vm375, %v853, 0
        %858 = vmatprep.subr.mxu0 0.0
        %859 = vmatpush1.xpose.msra.mxu0 %v856
        %860 = vmatprep.subr.mxu0 0.0
        %861 = vmatpush1.xpose.msra.mxu0 0.0
        %862 = vmatprep.subr.mxu0 0.0
        %863 = vmatpush1.xpose.msra.mxu0 0.0
        %864 = vmatprep.subr.mxu0 0.0
        %865 = vmatpush1.xpose.msra.mxu0 0.0
        %866 = vmatprep.subr.mxu0 0.0
        %867 = vmatpush1.xpose.msra.mxu0 0.0
        %868 = vmatprep.subr.mxu0 0.0
        %869 = vmatpush1.xpose.msra.mxu0 0.0
        %870 = vmatprep.subr.mxu0 0.0
        %871 = vmatpush1.xpose.msra.mxu0 0.0
        %872 = vmatprep.subr.mxu0 0.0
        %873 = vmatpush1.xpose.msra.mxu0 0.0
        %874 = vmatprep.subr.mxu0 0.0
        %875 = vmatpush1.xpose.msra.mxu0 0.0
        %876 = vmatprep.subr.mxu0 0.0
        %877 = vmatpush1.xpose.msra.mxu0 0.0
        %878 = vmatprep.subr.mxu0 0.0
        %879 = vmatpush1.xpose.msra.mxu0 0.0
        %880 = vmatprep.subr.mxu0 0.0
        %881 = vmatpush1.xpose.msra.mxu0 0.0
        %882 = vmatprep.subr.mxu0 0.0
        %883 = vmatpush1.xpose.msra.mxu0 0.0
        %884 = vmatprep.subr.mxu0 0.0
        %885 = vmatpush1.xpose.msra.mxu0 0.0
        %886 = vmatprep.subr.mxu0 0.0
        %887 = vmatpush1.xpose.msra.mxu0 0.0
        %888 = vmatprep.subr.mxu0 0.0
        %889 = vmatpush1.xpose.msra.mxu0 0.0
        %890 = vmatprep.subr.mxu0 0.0
        %891 = vmatpush1.xpose.msra.mxu0 0.0
        %892 = vmatprep.subr.mxu0 0.0
        %893 = vmatpush1.xpose.msra.mxu0 0.0
        %894 = vmatprep.subr.mxu0 0.0
        %895 = vmatpush1.xpose.msra.mxu0 0.0
        %896 = vmatprep.subr.mxu0 0.0
        %897 = vmatpush1.xpose.msra.mxu0 0.0
        %898 = vmatprep.subr.mxu0 0.0
        %899 = vmatpush1.xpose.msra.mxu0 0.0
        %900 = vmatprep.subr.mxu0 0.0
        %901 = vmatpush1.xpose.msra.mxu0 0.0
        %902 = vmatprep.subr.mxu0 0.0
        %903 = vmatpush1.xpose.msra.mxu0 0.0
        %904 = vmatprep.subr.mxu0 0.0
        %905 = vmatpush1.xpose.msra.mxu0 0.0
        %906 = vmatprep.subr.mxu0 0.0
        %907 = vmatpush1.xpose.msra.mxu0 0.0
        %908 = vmatprep.subr.mxu0 0.0
        %909 = vmatpush1.xpose.msra.mxu0 0.0
        %910 = vmatprep.subr.mxu0 0.0
        %911 = vmatpush1.xpose.msra.mxu0 0.0
        %912 = vmatprep.subr.mxu0 0.0
        %913 = vmatpush1.xpose.msra.mxu0 0.0
        %914 = vmatprep.subr.mxu0 0.0
        %915 = vmatpush1.xpose.msra.mxu0 0.0
        %916 = vmatprep.subr.mxu0 0.0
        %917 = vmatpush1.xpose.msra.mxu0 0.0
        %918 = vmatprep.subr.mxu0 0.0
        %919 = vmatpush1.xpose.msra.mxu0 0.0
        %920 = vmatprep.subr.mxu0 0.0
        %921 = vmatpush1.xpose.msra.mxu0 0.0
        %922 = vmatprep.mubr.f32.mxu0 0.0
        %923 = vmatmul.mubr.f32.gmra.mrb[0].mxu0 %v854
        %v924 = vpop.f32.mrb[0].mxu0
        %v925 = vadd.f32 0.0, %v924
        %v926 = vpop.f32.mrb[0].mxu0
        %927 = vdwg.mxu0
        %v928 = vmul.f32 %v925, 0.35355338
        %v929 = vsel %vm375, %v928, -inf
        %930 = vmax.xlane.f32.xlu0 %v929
        %v931 = vpop.xlane.xlu0 %930
        %v932 = vsub.f32 %v928, %v931
        %v933 = vmul.f32 %v932, 1.442695
        %v934 = vpow.pop %v933
        %v935 = vsel %vm375, %v934, 0.0
        %936 = vadd.xlane.f32.xlu0 %v935
        %v937 = vpop.xlane.xlu0 %936
        %v938 = vrcp.pop %v937
        %v939 = vmul.f32 %v934, %v938
        %940 = vrot.lane.b32.xlu0 %v369, 48
        %v941 = vpop.permute.xlu0 %940
        %v944 = vsel %vm375, %v939, 0
        %946 = vmatprep.subr.mxu0 0.0
        %947 = vmatpush1.msra.mxu0 %v941
        %948 = vmatprep.subr.mxu0 0.0
        %949 = vmatpush1.msra.mxu0 0.0
        %950 = vmatprep.subr.mxu0 0.0
        %951 = vmatpush1.msra.mxu0 0.0
        %952 = vmatprep.subr.mxu0 0.0
        %953 = vmatpush1.msra.mxu0 0.0
        %954 = vmatprep.subr.mxu0 0.0
        %955 = vmatpush1.msra.mxu0 0.0
        %956 = vmatprep.subr.mxu0 0.0
        %957 = vmatpush1.msra.mxu0 0.0
        %958 = vmatprep.subr.mxu0 0.0
        %959 = vmatpush1.msra.mxu0 0.0
        %960 = vmatprep.subr.mxu0 0.0
        %961 = vmatpush1.msra.mxu0 0.0
        %962 = vmatprep.subr.mxu0 0.0
        %963 = vmatpush1.msra.mxu0 0.0
        %964 = vmatprep.subr.mxu0 0.0
        %965 = vmatpush1.msra.mxu0 0.0
        %966 = vmatprep.subr.mxu0 0.0
        %967 = vmatpush1.msra.mxu0 0.0
        %968 = vmatprep.subr.mxu0 0.0
        %969 = vmatpush1.msra.mxu0 0.0
        %970 = vmatprep.subr.mxu0 0.0
        %971 = vmatpush1.msra.mxu0 0.0
        %972 = vmatprep.subr.mxu0 0.0
        %973 = vmatpush1.msra.mxu0 0.0
        %974 = vmatprep.subr.mxu0 0.0
        %975 = vmatpush1.msra.mxu0 0.0
        %976 = vmatprep.subr.mxu0 0.0
        %977 = vmatpush1.msra.mxu0 0.0
        %978 = vmatprep.subr.mxu0 0.0
        %979 = vmatpush1.msra.mxu0 0.0
        %980 = vmatprep.subr.mxu0 0.0
        %981 = vmatpush1.msra.mxu0 0.0
        %982 = vmatprep.subr.mxu0 0.0
        %983 = vmatpush1.msra.mxu0 0.0
        %984 = vmatprep.subr.mxu0 0.0
        %985 = vmatpush1.msra.mxu0 0.0
        %986 = vmatprep.subr.mxu0 0.0
        %987 = vmatpush1.msra.mxu0 0.0
        %988 = vmatprep.subr.mxu0 0.0
        %989 = vmatpush1.msra.mxu0 0.0
        %990 = vmatprep.subr.mxu0 0.0
        %991 = vmatpush1.msra.mxu0 0.0
        %992 = vmatprep.subr.mxu0 0.0
        %993 = vmatpush1.msra.mxu0 0.0
        %994 = vmatprep.subr.mxu0 0.0
        %995 = vmatpush1.msra.mxu0 0.0
        %996 = vmatprep.subr.mxu0 0.0
        %997 = vmatpush1.msra.mxu0 0.0
        %998 = vmatprep.subr.mxu0 0.0
        %999 = vmatpush1.msra.mxu0 0.0
        %1000 = vmatprep.subr.mxu0 0.0
        %1001 = vmatpush1.msra.mxu0 0.0
        %1002 = vmatprep.subr.mxu0 0.0
        %1003 = vmatpush1.msra.mxu0 0.0
        %1004 = vmatprep.subr.mxu0 0.0
        %1005 = vmatpush1.msra.mxu0 0.0
        %1006 = vmatprep.subr.mxu0 0.0
        %1007 = vmatpush1.msra.mxu0 0.0
        %1008 = vmatprep.subr.mxu0 0.0
        %1009 = vmatpush1.msra.mxu0 0.0
        %1010 = vmatprep.mubr.f32.mxu0 0.0
        %1011 = vmatmul.mubr.f32.gmra.mrb[0].mxu0 %v944
        %v1012 = vpop.f32.mrb[0].mxu0
        %v1013 = vadd.f32 0.0, %v1012
        %v1014 = vpop.f32.mrb[0].mxu0
        %1015 = vdwg.mxu0
        %v1017 = vsel %vm375, %v1013, 0
        %1019 = vmatprep.subr.mxu0 0.0
        %1020 = vmatpush1.msra.mxu0 %v238
        %1021 = vmatprep.subr.mxu0 0.0
        %1022 = vmatpush1.msra.mxu0 0.0
        %1023 = vmatprep.subr.mxu0 0.0
        %1024 = vmatpush1.msra.mxu0 0.0
        %1025 = vmatprep.subr.mxu0 0.0
        %1026 = vmatpush1.msra.mxu0 0.0
        %1027 = vmatprep.subr.mxu0 0.0
        %1028 = vmatpush1.msra.mxu0 0.0
        %1029 = vmatprep.subr.mxu0 0.0
        %1030 = vmatpush1.msra.mxu0 0.0
        %1031 = vmatprep.subr.mxu0 0.0
        %1032 = vmatpush1.msra.mxu0 0.0
        %1033 = vmatprep.subr.mxu0 0.0
        %1034 = vmatpush1.msra.mxu0 0.0
        %1035 = vmatprep.subr.mxu0 0.0
        %1036 = vmatpush1.msra.mxu0 0.0
        %1037 = vmatprep.subr.mxu0 0.0
        %1038 = vmatpush1.msra.mxu0 0.0
        %1039 = vmatprep.subr.mxu0 0.0
        %1040 = vmatpush1.msra.mxu0 0.0
        %1041 = vmatprep.subr.mxu0 0.0
        %1042 = vmatpush1.msra.mxu0 0.0
        %1043 = vmatprep.subr.mxu0 0.0
        %1044 = vmatpush1.msra.mxu0 0.0
        %1045 = vmatprep.subr.mxu0 0.0
        %1046 = vmatpush1.msra.mxu0 0.0
        %1047 = vmatprep.subr.mxu0 0.0
        %1048 = vmatpush1.msra.mxu0 0.0
        %1049 = vmatprep.subr.mxu0 0.0
        %1050 = vmatpush1.msra.mxu0 0.0
        %1051 = vmatprep.subr.mxu0 0.0
        %1052 = vmatpush1.msra.mxu0 0.0
        %1053 = vmatprep.subr.mxu0 0.0
        %1054 = vmatpush1.msra.mxu0 0.0
        %1055 = vmatprep.subr.mxu0 0.0
        %1056 = vmatpush1.msra.mxu0 0.0
        %1057 = vmatprep.subr.mxu0 0.0
        %1058 = vmatpush1.msra.mxu0 0.0
        %1059 = vmatprep.subr.mxu0 0.0
        %1060 = vmatpush1.msra.mxu0 0.0
        %1061 = vmatprep.subr.mxu0 0.0
        %1062 = vmatpush1.msra.mxu0 0.0
        %1063 = vmatprep.subr.mxu0 0.0
        %1064 = vmatpush1.msra.mxu0 0.0
        %1065 = vmatprep.subr.mxu0 0.0
        %1066 = vmatpush1.msra.mxu0 0.0
        %1067 = vmatprep.subr.mxu0 0.0
        %1068 = vmatpush1.msra.mxu0 0.0
        %1069 = vmatprep.subr.mxu0 0.0
        %1070 = vmatpush1.msra.mxu0 0.0
        %1071 = vmatprep.subr.mxu0 0.0
        %1072 = vmatpush1.msra.mxu0 0.0
        %1073 = vmatprep.subr.mxu0 0.0
        %1074 = vmatpush1.msra.mxu0 0.0
        %1075 = vmatprep.subr.mxu0 0.0
        %1076 = vmatpush1.msra.mxu0 0.0
        %1077 = vmatprep.subr.mxu0 0.0
        %1078 = vmatpush1.msra.mxu0 0.0
        %1079 = vmatprep.subr.mxu0 0.0
        %1080 = vmatpush1.msra.mxu0 0.0
        %1081 = vmatprep.subr.mxu0 0.0
        %1082 = vmatpush1.msra.mxu0 0.0
        %1083 = vmatprep.mubr.f32.mxu0 0.0
        %1084 = vmatmul.mubr.f32.gmra.mrb[0].mxu0 %v1017
        %v1085 = vpop.f32.mrb[0].mxu0
        %v1086 = vadd.f32 0.0, %v1085
        %v1087 = vpop.f32.mrb[0].mxu0
        %1088 = vdwg.mxu0
        %v1089 = vadd.f32 %v847, %v1086
        %1090 = vrot.lane.b32.xlu0 %v369, 104
        %v1091 = vpop.permute.xlu0 %1090
        %1092 = vrot.lane.b32.xlu0 %v369, 72
        %v1093 = vpop.permute.xlu0 %1092
        %v1094 = vsel %vm375, %v1091, 0
        %v1096 = vsel %vm375, %v1093, 0
        %1098 = vmatprep.subr.mxu0 0.0
        %1099 = vmatpush1.xpose.msra.mxu0 %v1096
        %1100 = vmatprep.subr.mxu0 0.0
        %1101 = vmatpush1.xpose.msra.mxu0 0.0
        %1102 = vmatprep.subr.mxu0 0.0
        %1103 = vmatpush1.xpose.msra.mxu0 0.0
        %1104 = vmatprep.subr.mxu0 0.0
        %1105 = vmatpush1.xpose.msra.mxu0 0.0
        %1106 = vmatprep.subr.mxu0 0.0
        %1107 = vmatpush1.xpose.msra.mxu0 0.0
        %1108 = vmatprep.subr.mxu0 0.0
        %1109 = vmatpush1.xpose.msra.mxu0 0.0
        %1110 = vmatprep.subr.mxu0 0.0
        %1111 = vmatpush1.xpose.msra.mxu0 0.0
        %1112 = vmatprep.subr.mxu0 0.0
        %1113 = vmatpush1.xpose.msra.mxu0 0.0
        %1114 = vmatprep.subr.mxu0 0.0
        %1115 = vmatpush1.xpose.msra.mxu0 0.0
        %1116 = vmatprep.subr.mxu0 0.0
        %1117 = vmatpush1.xpose.msra.mxu0 0.0
        %1118 = vmatprep.subr.mxu0 0.0
        %1119 = vmatpush1.xpose.msra.mxu0 0.0
        %1120 = vmatprep.subr.mxu0 0.0
        %1121 = vmatpush1.xpose.msra.mxu0 0.0
        %1122 = vmatprep.subr.mxu0 0.0
        %1123 = vmatpush1.xpose.msra.mxu0 0.0
        %1124 = vmatprep.subr.mxu0 0.0
        %1125 = vmatpush1.xpose.msra.mxu0 0.0
        %1126 = vmatprep.subr.mxu0 0.0
        %1127 = vmatpush1.xpose.msra.mxu0 0.0
        %1128 = vmatprep.subr.mxu0 0.0
        %1129 = vmatpush1.xpose.msra.mxu0 0.0
        %1130 = vmatprep.subr.mxu0 0.0
        %1131 = vmatpush1.xpose.msra.mxu0 0.0
        %1132 = vmatprep.subr.mxu0 0.0
        %1133 = vmatpush1.xpose.msra.mxu0 0.0
        %1134 = vmatprep.subr.mxu0 0.0
        %1135 = vmatpush1.xpose.msra.mxu0 0.0
        %1136 = vmatprep.subr.mxu0 0.0
        %1137 = vmatpush1.xpose.msra.mxu0 0.0
        %1138 = vmatprep.subr.mxu0 0.0
        %1139 = vmatpush1.xpose.msra.mxu0 0.0
        %1140 = vmatprep.subr.mxu0 0.0
        %1141 = vmatpush1.xpose.msra.mxu0 0.0
        %1142 = vmatprep.subr.mxu0 0.0
        %1143 = vmatpush1.xpose.msra.mxu0 0.0
        %1144 = vmatprep.subr.mxu0 0.0
        %1145 = vmatpush1.xpose.msra.mxu0 0.0
        %1146 = vmatprep.subr.mxu0 0.0
        %1147 = vmatpush1.xpose.msra.mxu0 0.0
        %1148 = vmatprep.subr.mxu0 0.0
        %1149 = vmatpush1.xpose.msra.mxu0 0.0
        %1150 = vmatprep.subr.mxu0 0.0
        %1151 = vmatpush1.xpose.msra.mxu0 0.0
        %1152 = vmatprep.subr.mxu0 0.0
        %1153 = vmatpush1.xpose.msra.mxu0 0.0
        %1154 = vmatprep.subr.mxu0 0.0
        %1155 = vmatpush1.xpose.msra.mxu0 0.0
        %1156 = vmatprep.subr.mxu0 0.0
        %1157 = vmatpush1.xpose.msra.mxu0 0.0
        %1158 = vmatprep.subr.mxu0 0.0
        %1159 = vmatpush1.xpose.msra.mxu0 0.0
        %1160 = vmatprep.subr.mxu0 0.0
        %1161 = vmatpush1.xpose.msra.mxu0 0.0
        %1162 = vmatprep.mubr.f32.mxu0 0.0
        %1163 = vmatmul.mubr.f32.gmra.mrb[0].mxu0 %v1094
        %v1164 = vpop.f32.mrb[0].mxu0
        %v1165 = vadd.f32 0.0, %v1164
        %v1166 = vpop.f32.mrb[0].mxu0
        %1167 = vdwg.mxu0
        %v1168 = vmul.f32 %v1165, 0.35355338
        %v1169 = vsel %vm375, %v1168, -inf
        %1170 = vmax.xlane.f32.xlu0 %v1169
        %v1171 = vpop.xlane.xlu0 %1170
        %v1172 = vsub.f32 %v1168, %v1171
        %v1173 = vmul.f32 %v1172, 1.442695
        %v1174 = vpow.pop %v1173
        %v1175 = vsel %vm375, %v1174, 0.0
        %1176 = vadd.xlane.f32.xlu0 %v1175
        %v1177 = vpop.xlane.xlu0 %1176
        %v1178 = vrcp.pop %v1177
        %v1179 = vmul.f32 %v1174, %v1178
        %1180 = vrot.lane.b32.xlu0 %v369, 40
        %v1181 = vpop.permute.xlu0 %1180
        %v1184 = vsel %vm375, %v1179, 0
        %1186 = vmatprep.subr.mxu0 0.0
        %1187 = vmatpush1.msra.mxu0 %v1181
        %1188 = vmatprep.subr.mxu0 0.0
        %1189 = vmatpush1.msra.mxu0 0.0
        %1190 = vmatprep.subr.mxu0 0.0
        %1191 = vmatpush1.msra.mxu0 0.0
        %1192 = vmatprep.subr.mxu0 0.0
        %1193 = vmatpush1.msra.mxu0 0.0
        %1194 = vmatprep.subr.mxu0 0.0
        %1195 = vmatpush1.msra.mxu0 0.0
        %1196 = vmatprep.subr.mxu0 0.0
        %1197 = vmatpush1.msra.mxu0 0.0
        %1198 = vmatprep.subr.mxu0 0.0
        %1199 = vmatpush1.msra.mxu0 0.0
        %1200 = vmatprep.subr.mxu0 0.0
        %1201 = vmatpush1.msra.mxu0 0.0
        %1202 = vmatprep.subr.mxu0 0.0
        %1203 = vmatpush1.msra.mxu0 0.0
        %1204 = vmatprep.subr.mxu0 0.0
        %1205 = vmatpush1.msra.mxu0 0.0
        %1206 = vmatprep.subr.mxu0 0.0
        %1207 = vmatpush1.msra.mxu0 0.0
        %1208 = vmatprep.subr.mxu0 0.0
        %1209 = vmatpush1.msra.mxu0 0.0
        %1210 = vmatprep.subr.mxu0 0.0
        %1211 = vmatpush1.msra.mxu0 0.0
        %1212 = vmatprep.subr.mxu0 0.0
        %1213 = vmatpush1.msra.mxu0 0.0
        %1214 = vmatprep.subr.mxu0 0.0
        %1215 = vmatpush1.msra.mxu0 0.0
        %1216 = vmatprep.subr.mxu0 0.0
        %1217 = vmatpush1.msra.mxu0 0.0
        %1218 = vmatprep.subr.mxu0 0.0
        %1219 = vmatpush1.msra.mxu0 0.0
        %1220 = vmatprep.subr.mxu0 0.0
        %1221 = vmatpush1.msra.mxu0 0.0
        %1222 = vmatprep.subr.mxu0 0.0
        %1223 = vmatpush1.msra.mxu0 0.0
        %1224 = vmatprep.subr.mxu0 0.0
        %1225 = vmatpush1.msra.mxu0 0.0
        %1226 = vmatprep.subr.mxu0 0.0
        %1227 = vmatpush1.msra.mxu0 0.0
        %1228 = vmatprep.subr.mxu0 0.0
        %1229 = vmatpush1.msra.mxu0 0.0
        %1230 = vmatprep.subr.mxu0 0.0
        %1231 = vmatpush1.msra.mxu0 0.0
        %1232 = vmatprep.subr.mxu0 0.0
        %1233 = vmatpush1.msra.mxu0 0.0
        %1234 = vmatprep.subr.mxu0 0.0
        %1235 = vmatpush1.msra.mxu0 0.0
        %1236 = vmatprep.subr.mxu0 0.0
        %1237 = vmatpush1.msra.mxu0 0.0
        %1238 = vmatprep.subr.mxu0 0.0
        %1239 = vmatpush1.msra.mxu0 0.0
        %1240 = vmatprep.subr.mxu0 0.0
        %1241 = vmatpush1.msra.mxu0 0.0
        %1242 = vmatprep.subr.mxu0 0.0
        %1243 = vmatpush1.msra.mxu0 0.0
        %1244 = vmatprep.subr.mxu0 0.0
        %1245 = vmatpush1.msra.mxu0 0.0
        %1246 = vmatprep.subr.mxu0 0.0
        %1247 = vmatpush1.msra.mxu0 0.0
        %1248 = vmatprep.subr.mxu0 0.0
        %1249 = vmatpush1.msra.mxu0 0.0
        %1250 = vmatprep.mubr.f32.mxu0 0.0
        %1251 = vmatmul.mubr.f32.gmra.mrb[0].mxu0 %v1184
        %v1252 = vpop.f32.mrb[0].mxu0
        %v1253 = vadd.f32 0.0, %v1252
        %v1254 = vpop.f32.mrb[0].mxu0
        %1255 = vdwg.mxu0
        %v1257 = vsel %vm375, %v1253, 0
        %1259 = vmatprep.subr.mxu0 0.0
        %1260 = vmatpush1.msra.mxu0 %v245
        %1261 = vmatprep.subr.mxu0 0.0
        %1262 = vmatpush1.msra.mxu0 0.0
        %1263 = vmatprep.subr.mxu0 0.0
        %1264 = vmatpush1.msra.mxu0 0.0
        %1265 = vmatprep.subr.mxu0 0.0
        %1266 = vmatpush1.msra.mxu0 0.0
        %1267 = vmatprep.subr.mxu0 0.0
        %1268 = vmatpush1.msra.mxu0 0.0
        %1269 = vmatprep.subr.mxu0 0.0
        %1270 = vmatpush1.msra.mxu0 0.0
        %1271 = vmatprep.subr.mxu0 0.0
        %1272 = vmatpush1.msra.mxu0 0.0
        %1273 = vmatprep.subr.mxu0 0.0
        %1274 = vmatpush1.msra.mxu0 0.0
        %1275 = vmatprep.subr.mxu0 0.0
        %1276 = vmatpush1.msra.mxu0 0.0
        %1277 = vmatprep.subr.mxu0 0.0
        %1278 = vmatpush1.msra.mxu0 0.0
        %1279 = vmatprep.subr.mxu0 0.0
        %1280 = vmatpush1.msra.mxu0 0.0
        %1281 = vmatprep.subr.mxu0 0.0
        %1282 = vmatpush1.msra.mxu0 0.0
        %1283 = vmatprep.subr.mxu0 0.0
        %1284 = vmatpush1.msra.mxu0 0.0
        %1285 = vmatprep.subr.mxu0 0.0
        %1286 = vmatpush1.msra.mxu0 0.0
        %1287 = vmatprep.subr.mxu0 0.0
        %1288 = vmatpush1.msra.mxu0 0.0
        %1289 = vmatprep.subr.mxu0 0.0
        %1290 = vmatpush1.msra.mxu0 0.0
        %1291 = vmatprep.subr.mxu0 0.0
        %1292 = vmatpush1.msra.mxu0 0.0
        %1293 = vmatprep.subr.mxu0 0.0
        %1294 = vmatpush1.msra.mxu0 0.0
        %1295 = vmatprep.subr.mxu0 0.0
        %1296 = vmatpush1.msra.mxu0 0.0
        %1297 = vmatprep.subr.mxu0 0.0
        %1298 = vmatpush1.msra.mxu0 0.0
        %1299 = vmatprep.subr.mxu0 0.0
        %1300 = vmatpush1.msra.mxu0 0.0
        %1301 = vmatprep.subr.mxu0 0.0
        %1302 = vmatpush1.msra.mxu0 0.0
        %1303 = vmatprep.subr.mxu0 0.0
        %1304 = vmatpush1.msra.mxu0 0.0
        %1305 = vmatprep.subr.mxu0 0.0
        %1306 = vmatpush1.msra.mxu0 0.0
        %1307 = vmatprep.subr.mxu0 0.0
        %1308 = vmatpush1.msra.mxu0 0.0
        %1309 = vmatprep.subr.mxu0 0.0
        %1310 = vmatpush1.msra.mxu0 0.0
        %1311 = vmatprep.subr.mxu0 0.0
        %1312 = vmatpush1.msra.mxu0 0.0
        %1313 = vmatprep.subr.mxu0 0.0
        %1314 = vmatpush1.msra.mxu0 0.0
        %1315 = vmatprep.subr.mxu0 0.0
        %1316 = vmatpush1.msra.mxu0 0.0
        %1317 = vmatprep.subr.mxu0 0.0
        %1318 = vmatpush1.msra.mxu0 0.0
        %1319 = vmatprep.subr.mxu0 0.0
        %1320 = vmatpush1.msra.mxu0 0.0
        %1321 = vmatprep.subr.mxu0 0.0
        %1322 = vmatpush1.msra.mxu0 0.0
        %1323 = vmatprep.mubr.f32.mxu0 0.0
        %1324 = vmatmul.mubr.f32.gmra.mrb[0].mxu0 %v1257
        %v1325 = vpop.f32.mrb[0].mxu0
        %v1326 = vadd.f32 0.0, %v1325
        %v1327 = vpop.f32.mrb[0].mxu0
        %1328 = vdwg.mxu0
        %v1329 = vadd.f32 %v1089, %v1326
        %v1330 = vadd.f32 %v222, %v1329
        %v1331 = vlaneseq
        %v1332 = vshrl.u32 %v1331, 7
        %v1333 = vsub.s32 3, %v1332
        %v1334 = vrot.slane %v251, %v1333
        %v1335 = vadd.f32 %v1330, %v1334
        %v1336 = vsel %vm270, %v1335, 0.0
        %1337 = vadd.xlane.f32.xlu0 %v1336
        %v1338 = vpop.xlane.xlu0 %1337
        %v1339 = vmul.f32 %v1338, %v274
        %v1340 = vsub.f32 %v1335, %v1339
        %v1341 = vmul.f32 %v1340, %v1340
        %v1342 = vsel %vm270, %v1341, 0.0
        %1343 = vadd.xlane.f32.xlu0 %v1342
        %v1344 = vpop.xlane.xlu0 %1343
        %v1345 = vmul.f32 %v1344, %v274
        %v1346 = vadd.f32 %v1345, 1e-05
        %v1347 = vrsqrt.pop %v1346
        %v1348 = vmul.f32 %v1340, %v1347
        %v1349 = vlaneseq
        %v1350 = vshrl.u32 %v1349, 7
        %v1351 = vsub.s32 4, %v1350
        %v1352 = vrot.slane %v251, %v1351
        %v1353 = vmul.f32 %v1348, %v1352
        %v1354 = vlaneseq
        %v1355 = vshrl.u32 %v1354, 7
        %v1356 = vsub.s32 5, %v1355
        %v1357 = vrot.slane %v251, %v1356
        %v1358 = vadd.f32 %v1353, %v1357
        %v1359 = vlaneseq
        %v1360 = vshrl.u32 %v1359, 7
        %v1361 = vsub.s32 6, %v1360
        %v1362 = vrot.slane %v251, %v1361
        %v1364 = vsel %vm270, %v1358, 0
        %1366 = vmatprep.subr.mxu0 0.0
        %1367 = vmatpush1.msra.mxu0 %v225
        %1368 = vmatprep.subr.mxu0 0.0
        %1369 = vmatpush1.msra.mxu0 %v232
        %1370 = vmatprep.subr.mxu0 0.0
        %1371 = vmatpush1.msra.mxu0 %v239
        %1372 = vmatprep.subr.mxu0 0.0
        %1373 = vmatpush1.msra.mxu0 %v246
        %1374 = vmatprep.subr.mxu0 0.0
        %1375 = vmatpush1.msra.mxu0 0.0
        %1376 = vmatprep.subr.mxu0 0.0
        %1377 = vmatpush1.msra.mxu0 0.0
        %1378 = vmatprep.subr.mxu0 0.0
        %1379 = vmatpush1.msra.mxu0 0.0
        %1380 = vmatprep.subr.mxu0 0.0
        %1381 = vmatpush1.msra.mxu0 0.0
        %1382 = vmatprep.subr.mxu0 0.0
        %1383 = vmatpush1.msra.mxu0 0.0
        %1384 = vmatprep.subr.mxu0 0.0
        %1385 = vmatpush1.msra.mxu0 0.0
        %1386 = vmatprep.subr.mxu0 0.0
        %1387 = vmatpush1.msra.mxu0 0.0
        %1388 = vmatprep.subr.mxu0 0.0
        %1389 = vmatpush1.msra.mxu0 0.0
        %1390 = vmatprep.subr.mxu0 0.0
        %1391 = vmatpush1.msra.mxu0 0.0
        %1392 = vmatprep.subr.mxu0 0.0
        %1393 = vmatpush1.msra.mxu0 0.0
        %1394 = vmatprep.subr.mxu0 0.0
        %1395 = vmatpush1.msra.mxu0 0.0
        %1396 = vmatprep.subr.mxu0 0.0
        %1397 = vmatpush1.msra.mxu0 0.0
        %1398 = vmatprep.subr.mxu0 0.0
        %1399 = vmatpush1.msra.mxu0 0.0
        %1400 = vmatprep.subr.mxu0 0.0
        %1401 = vmatpush1.msra.mxu0 0.0
        %1402 = vmatprep.subr.mxu0 0.0
        %1403 = vmatpush1.msra.mxu0 0.0
        %1404 = vmatprep.subr.mxu0 0.0
        %1405 = vmatpush1.msra.mxu0 0.0
        %1406 = vmatprep.subr.mxu0 0.0
        %1407 = vmatpush1.msra.mxu0 0.0
        %1408 = vmatprep.subr.mxu0 0.0
        %1409 = vmatpush1.msra.mxu0 0.0
        %1410 = vmatprep.subr.mxu0 0.0
        %1411 = vmatpush1.msra.mxu0 0.0
        %1412 = vmatprep.subr.mxu0 0.0
        %1413 = vmatpush1.msra.mxu0 0.0
        %1414 = vmatprep.subr.mxu0 0.0
        %1415 = vmatpush1.msra.mxu0 0.0
        %1416 = vmatprep.subr.mxu0 0.0
        %1417 = vmatpush1.msra.mxu0 0.0
        %1418 = vmatprep.subr.mxu0 0.0
        %1419 = vmatpush1.msra.mxu0 0.0
        %1420 = vmatprep.subr.mxu0 0.0
        %1421 = vmatpush1.msra.mxu0 0.0
        %1422 = vmatprep.subr.mxu0 0.0
        %1423 = vmatpush1.msra.mxu0 0.0
        %1424 = vmatprep.subr.mxu0 0.0
        %1425 = vmatpush1.msra.mxu0 0.0
        %1426 = vmatprep.subr.mxu0 0.0
        %1427 = vmatpush1.msra.mxu0 0.0
        %1428 = vmatprep.subr.mxu0 0.0
        %1429 = vmatpush1.msra.mxu0 0.0
        %1430 = vmatprep.mubr.f32.mxu0 0.0
        %1431 = vmatmul.mubr.f32.gmra.mrb[0].mxu0 %v1364
        %v1432 = vpop.f32.mrb[0].mxu0
        %v1433 = vadd.f32 %v1362, %v1432
        %v1434 = vpop.f32.mrb[0].mxu0
        %1435 = vdwg.mxu0
        %v1436 = vmul.f32 %v1433, %v1433
        %v1437 = vmul.f32 %v1433, %v1436
        %v1438 = vmul.f32 %v1437, 0.044715
        %v1439 = vadd.f32 %v1433, %v1438
        %v1440 = vmul.f32 %v1439, 0.7978846
        %v1441 = vtanh.pop %v1440
        %v1442 = vadd.f32 %v1441, 1.0
        %v1443 = vmul.f32 %v1442, 0.5
        %v1444 = vmul.f32 %v1433, %v1443
        %v1445 = vlaneseq
        %v1446 = vshrl.u32 %v1445, 7
        %v1447 = vsub.s32 7, %v1446
        %v1448 = vrot.slane %v251, %v1447
        %1449 = vmatprep.subr.mxu0 0.0
        %1450 = vmatpush1.msra.mxu0 %v254
        %1451 = vmatprep.subr.mxu0 0.0
        %1452 = vmatpush1.msra.mxu0 %v255
        %1453 = vmatprep.subr.mxu0 0.0
        %1454 = vmatpush1.msra.mxu0 %v256
        %1455 = vmatprep.subr.mxu0 0.0
        %1456 = vmatpush1.msra.mxu0 %v257
        %1457 = vmatprep.subr.mxu0 0.0
        %1458 = vmatpush1.msra.mxu0 %v258
        %1459 = vmatprep.subr.mxu0 0.0
        %1460 = vmatpush1.msra.mxu0 %v259
        %1461 = vmatprep.subr.mxu0 0.0
        %1462 = vmatpush1.msra.mxu0 %v260
        %1463 = vmatprep.subr.mxu0 0.0
        %1464 = vmatpush1.msra.mxu0 %v261
        %1465 = vmatprep.subr.mxu0 0.0
        %1466 = vmatpush1.msra.mxu0 %v262
        %1467 = vmatprep.subr.mxu0 0.0
        %1468 = vmatpush1.msra.mxu0 %v263
        %1469 = vmatprep.subr.mxu0 0.0
        %1470 = vmatpush1.msra.mxu0 %v264
        %1471 = vmatprep.subr.mxu0 0.0
        %1472 = vmatpush1.msra.mxu0 %v265
        %1473 = vmatprep.subr.mxu0 0.0
        %1474 = vmatpush1.msra.mxu0 %v266
        %1475 = vmatprep.subr.mxu0 0.0
        %1476 = vmatpush1.msra.mxu0 %v267
        %1477 = vmatprep.subr.mxu0 0.0
        %1478 = vmatpush1.msra.mxu0 %v268
        %1479 = vmatprep.subr.mxu0 0.0
        %1480 = vmatpush1.msra.mxu0 %v269
        %1481 = vmatprep.subr.mxu0 0.0
        %1482 = vmatpush1.msra.mxu0 0.0
        %1483 = vmatprep.subr.mxu0 0.0
        %1484 = vmatpush1.msra.mxu0 0.0
        %1485 = vmatprep.subr.mxu0 0.0
        %1486 = vmatpush1.msra.mxu0 0.0
        %1487 = vmatprep.subr.mxu0 0.0
        %1488 = vmatpush1.msra.mxu0 0.0
        %1489 = vmatprep.subr.mxu0 0.0
        %1490 = vmatpush1.msra.mxu0 0.0
        %1491 = vmatprep.subr.mxu0 0.0
        %1492 = vmatpush1.msra.mxu0 0.0
        %1493 = vmatprep.subr.mxu0 0.0
        %1494 = vmatpush1.msra.mxu0 0.0
        %1495 = vmatprep.subr.mxu0 0.0
        %1496 = vmatpush1.msra.mxu0 0.0
        %1497 = vmatprep.subr.mxu0 0.0
        %1498 = vmatpush1.msra.mxu0 0.0
        %1499 = vmatprep.subr.mxu0 0.0
        %1500 = vmatpush1.msra.mxu0 0.0
        %1501 = vmatprep.subr.mxu0 0.0
        %1502 = vmatpush1.msra.mxu0 0.0
        %1503 = vmatprep.subr.mxu0 0.0
        %1504 = vmatpush1.msra.mxu0 0.0
        %1505 = vmatprep.subr.mxu0 0.0
        %1506 = vmatpush1.msra.mxu0 0.0
        %1507 = vmatprep.subr.mxu0 0.0
        %1508 = vmatpush1.msra.mxu0 0.0
        %1509 = vmatprep.subr.mxu0 0.0
        %1510 = vmatpush1.msra.mxu0 0.0
        %1511 = vmatprep.subr.mxu0 0.0
        %1512 = vmatpush1.msra.mxu0 0.0
        %1513 = vmatprep.mubr.f32.mxu0 0.0
        %1514 = vmatmul.mubr.f32.gmra.mrb[0].mxu0 %v1444
        %v1515 = vpop.f32.mrb[0].mxu0
        %v1516 = vadd.f32 %v1448, %v1515
        %v1517 = vpop.f32.mrb[0].mxu0
        %1518 = vdwg.mxu0
        %v1519 = vadd.f32 %v1335, %v1516
        %v1520 = vld [vmem:[%s3] sm:$0xff]
        %v1521 = vld [vmem:[%s3 + $0x8] sm:$0xff]
        %v1522 = vld [vmem:[%s3 + $0x10] sm:$0xff]
        %v1523 = vld [vmem:[%s3 + $0x18] sm:$0xff]
        %v1524 = vld [vmem:[%s3 + $0x20] sm:$0xff]
        %v1525 = vld [vmem:[%s3 + $0x28] sm:$0xff]
        %v1526 = vld [vmem:[%s3 + $0x30] sm:$0xff]
        %v1527 = vld [vmem:[%s3 + $0x38] sm:$0xff]
        %v1528 = vld [vmem:[%s3 + $0x40] sm:$0xff]
        %v1529 = vld [vmem:[%s3 + $0x48] sm:$0xff]
        %v1530 = vld [vmem:[%s3 + $0x50] sm:$0xff]
        %v1531 = vld [vmem:[%s3 + $0x58] sm:$0xff]
        %v1532 = vld [vmem:[%s3 + $0x60] sm:$0xff]
        %v1533 = vld [vmem:[%s3 + $0x68] sm:$0xff]
        %v1534 = vld [vmem:[%s3 + $0x70] sm:$0xff]
        %v1535 = vld [vmem:[%s3 + $0x78] sm:$0xff]
        %v1536 = vsel %vm270, %v1519, 0.0
        %1537 = vadd.xlane.f32.xlu0 %v1536
        %v1538 = vpop.xlane.xlu0 %1537
        %v1539 = vmul.f32 %v1538, %v274
        %v1540 = vsub.f32 %v1519, %v1539
        %v1541 = vmul.f32 %v1540, %v1540
        %v1542 = vsel %vm270, %v1541, 0.0
        %1543 = vadd.xlane.f32.xlu0 %v1542
        %v1544 = vpop.xlane.xlu0 %1543
        %v1545 = vmul.f32 %v1544, %v274
        %v1546 = vadd.f32 %v1545, 1e-05
        %v1547 = vrsqrt.pop %v1546
        %v1548 = vmul.f32 %v1540, %v1547
        %v1549 = vlaneseq
        %v1550 = vshrl.u32 %v1549, 7
        %v1551 = vsub.s32 0, %v1550
        %v1552 = vrot.slane %v252, %v1551
        %v1553 = vmul.f32 %v1548, %v1552
        %v1554 = vlaneseq
        %v1555 = vshrl.u32 %v1554, 7
        %v1556 = vsub.s32 1, %v1555
        %v1557 = vrot.slane %v252, %v1556
        %v1558 = vadd.f32 %v1553, %v1557
        %v1559 = vlaneseq
        %v1560 = vshrl.u32 %v1559, 7
        %v1561 = vsub.s32 2, %v1560
        %v1562 = vrot.slane %v252, %v1561
        %v1564 = vsel %vm270, %v1558, 0
        %1566 = vmatprep.subr.mxu0 0.0
        %1567 = vmatpush1.msra.mxu0 %v226
        %1568 = vmatprep.subr.mxu0 0.0
        %1569 = vmatpush1.msra.mxu0 %v233
        %1570 = vmatprep.subr.mxu0 0.0
        %1571 = vmatpush1.msra.mxu0 %v240
        %1572 = vmatprep.subr.mxu0 0.0
        %1573 = vmatpush1.msra.mxu0 %v247
        %1574 = vmatprep.subr.mxu0 0.0
        %1575 = vmatpush1.msra.mxu0 0.0
        %1576 = vmatprep.subr.mxu0 0.0
        %1577 = vmatpush1.msra.mxu0 0.0
        %1578 = vmatprep.subr.mxu0 0.0
        %1579 = vmatpush1.msra.mxu0 0.0
        %1580 = vmatprep.subr.mxu0 0.0
        %1581 = vmatpush1.msra.mxu0 0.0
        %1582 = vmatprep.subr.mxu0 0.0
        %1583 = vmatpush1.msra.mxu0 0.0
        %1584 = vmatprep.subr.mxu0 0.0
        %1585 = vmatpush1.msra.mxu0 0.0
        %1586 = vmatprep.subr.mxu0 0.0
        %1587 = vmatpush1.msra.mxu0 0.0
        %1588 = vmatprep.subr.mxu0 0.0
        %1589 = vmatpush1.msra.mxu0 0.0
        %1590 = vmatprep.subr.mxu0 0.0
        %1591 = vmatpush1.msra.mxu0 0.0
        %1592 = vmatprep.subr.mxu0 0.0
        %1593 = vmatpush1.msra.mxu0 0.0
        %1594 = vmatprep.subr.mxu0 0.0
        %1595 = vmatpush1.msra.mxu0 0.0
        %1596 = vmatprep.subr.mxu0 0.0
        %1597 = vmatpush1.msra.mxu0 0.0
        %1598 = vmatprep.subr.mxu0 0.0
        %1599 = vmatpush1.msra.mxu0 0.0
        %1600 = vmatprep.subr.mxu0 0.0
        %1601 = vmatpush1.msra.mxu0 0.0
        %1602 = vmatprep.subr.mxu0 0.0
        %1603 = vmatpush1.msra.mxu0 0.0
        %1604 = vmatprep.subr.mxu0 0.0
        %1605 = vmatpush1.msra.mxu0 0.0
        %1606 = vmatprep.subr.mxu0 0.0
        %1607 = vmatpush1.msra.mxu0 0.0
        %1608 = vmatprep.subr.mxu0 0.0
        %1609 = vmatpush1.msra.mxu0 0.0
        %1610 = vmatprep.subr.mxu0 0.0
        %1611 = vmatpush1.msra.mxu0 0.0
        %1612 = vmatprep.subr.mxu0 0.0
        %1613 = vmatpush1.msra.mxu0 0.0
        %1614 = vmatprep.subr.mxu0 0.0
        %1615 = vmatpush1.msra.mxu0 0.0
        %1616 = vmatprep.subr.mxu0 0.0
        %1617 = vmatpush1.msra.mxu0 0.0
        %1618 = vmatprep.subr.mxu0 0.0
        %1619 = vmatpush1.msra.mxu0 0.0
        %1620 = vmatprep.subr.mxu0 0.0
        %1621 = vmatpush1.msra.mxu0 0.0
        %1622 = vmatprep.subr.mxu0 0.0
        %1623 = vmatpush1.msra.mxu0 0.0
        %1624 = vmatprep.subr.mxu0 0.0
        %1625 = vmatpush1.msra.mxu0 0.0
        %1626 = vmatprep.subr.mxu0 0.0
        %1627 = vmatpush1.msra.mxu0 0.0
        %1628 = vmatprep.subr.mxu0 0.0
        %1629 = vmatpush1.msra.mxu0 0.0
        %1630 = vmatprep.mubr.f32.mxu0 0.0
        %1631 = vmatmul.mubr.f32.gmra.mrb[0].mxu0 %v1564
        %v1632 = vpop.f32.mrb[0].mxu0
        %v1633 = vadd.f32 %v1562, %v1632
        %v1634 = vpop.f32.mrb[0].mxu0
        %1635 = vdwg.mxu0
        %1637 = vrot.lane.b32.xlu0 %v1633, 96
        %v1638 = vpop.permute.xlu0 %1637
        %v1639 = vsel %vm375, %v1633, 0
        %v1641 = vsel %vm375, %v1638, 0
        %1643 = vmatprep.subr.mxu0 0.0
        %1644 = vmatpush1.xpose.msra.mxu0 %v1641
        %1645 = vmatprep.subr.mxu0 0.0
        %1646 = vmatpush1.xpose.msra.mxu0 0.0
        %1647 = vmatprep.subr.mxu0 0.0
        %1648 = vmatpush1.xpose.msra.mxu0 0.0
        %1649 = vmatprep.subr.mxu0 0.0
        %1650 = vmatpush1.xpose.msra.mxu0 0.0
        %1651 = vmatprep.subr.mxu0 0.0
        %1652 = vmatpush1.xpose.msra.mxu0 0.0
        %1653 = vmatprep.subr.mxu0 0.0
        %1654 = vmatpush1.xpose.msra.mxu0 0.0
        %1655 = vmatprep.subr.mxu0 0.0
        %1656 = vmatpush1.xpose.msra.mxu0 0.0
        %1657 = vmatprep.subr.mxu0 0.0
        %1658 = vmatpush1.xpose.msra.mxu0 0.0
        %1659 = vmatprep.subr.mxu0 0.0
        %1660 = vmatpush1.xpose.msra.mxu0 0.0
        %1661 = vmatprep.subr.mxu0 0.0
        %1662 = vmatpush1.xpose.msra.mxu0 0.0
        %1663 = vmatprep.subr.mxu0 0.0
        %1664 = vmatpush1.xpose.msra.mxu0 0.0
        %1665 = vmatprep.subr.mxu0 0.0
        %1666 = vmatpush1.xpose.msra.mxu0 0.0
        %1667 = vmatprep.subr.mxu0 0.0
        %1668 = vmatpush1.xpose.msra.mxu0 0.0
        %1669 = vmatprep.subr.mxu0 0.0
        %1670 = vmatpush1.xpose.msra.mxu0 0.0
        %1671 = vmatprep.subr.mxu0 0.0
        %1672 = vmatpush1.xpose.msra.mxu0 0.0
        %1673 = vmatprep.subr.mxu0 0.0
        %1674 = vmatpush1.xpose.msra.mxu0 0.0
        %1675 = vmatprep.subr.mxu0 0.0
        %1676 = vmatpush1.xpose.msra.mxu0 0.0
        %1677 = vmatprep.subr.mxu0 0.0
        %1678 = vmatpush1.xpose.msra.mxu0 0.0
        %1679 = vmatprep.subr.mxu0 0.0
        %1680 = vmatpush1.xpose.msra.mxu0 0.0
        %1681 = vmatprep.subr.mxu0 0.0
        %1682 = vmatpush1.xpose.msra.mxu0 0.0
        %1683 = vmatprep.subr.mxu0 0.0
        %1684 = vmatpush1.xpose.msra.mxu0 0.0
        %1685 = vmatprep.subr.mxu0 0.0
        %1686 = vmatpush1.xpose.msra.mxu0 0.0
        %1687 = vmatprep.subr.mxu0 0.0
        %1688 = vmatpush1.xpose.msra.mxu0 0.0
        %1689 = vmatprep.subr.mxu0 0.0
        %1690 = vmatpush1.xpose.msra.mxu0 0.0
        %1691 = vmatprep.subr.mxu0 0.0
        %1692 = vmatpush1.xpose.msra.mxu0 0.0
        %1693 = vmatprep.subr.mxu0 0.0
        %1694 = vmatpush1.xpose.msra.mxu0 0.0
        %1695 = vmatprep.subr.mxu0 0.0
        %1696 = vmatpush1.xpose.msra.mxu0 0.0
        %1697 = vmatprep.subr.mxu0 0.0
        %1698 = vmatpush1.xpose.msra.mxu0 0.0
        %1699 = vmatprep.subr.mxu0 0.0
        %1700 = vmatpush1.xpose.msra.mxu0 0.0
        %1701 = vmatprep.subr.mxu0 0.0
        %1702 = vmatpush1.xpose.msra.mxu0 0.0
        %1703 = vmatprep.subr.mxu0 0.0
        %1704 = vmatpush1.xpose.msra.mxu0 0.0
        %1705 = vmatprep.subr.mxu0 0.0
        %1706 = vmatpush1.xpose.msra.mxu0 0.0
        %1707 = vmatprep.mubr.f32.mxu0 0.0
        %1708 = vmatmul.mubr.f32.gmra.mrb[0].mxu0 %v1639
        %v1709 = vpop.f32.mrb[0].mxu0
        %v1710 = vadd.f32 0.0, %v1709
        %v1711 = vpop.f32.mrb[0].mxu0
        %1712 = vdwg.mxu0
        %v1713 = vmul.f32 %v1710, 0.35355338
        %v1714 = vsel %vm375, %v1713, -inf
        %1715 = vmax.xlane.f32.xlu0 %v1714
        %v1716 = vpop.xlane.xlu0 %1715
        %v1717 = vsub.f32 %v1713, %v1716
        %v1718 = vmul.f32 %v1717, 1.442695
        %v1719 = vpow.pop %v1718
        %v1720 = vsel %vm375, %v1719, 0.0
        %1721 = vadd.xlane.f32.xlu0 %v1720
        %v1722 = vpop.xlane.xlu0 %1721
        %v1723 = vrcp.pop %v1722
        %v1724 = vmul.f32 %v1719, %v1723
        %1725 = vrot.lane.b32.xlu0 %v1633, 64
        %v1726 = vpop.permute.xlu0 %1725
        %v1729 = vsel %vm375, %v1724, 0
        %1731 = vmatprep.subr.mxu0 0.0
        %1732 = vmatpush1.msra.mxu0 %v1726
        %1733 = vmatprep.subr.mxu0 0.0
        %1734 = vmatpush1.msra.mxu0 0.0
        %1735 = vmatprep.subr.mxu0 0.0
        %1736 = vmatpush1.msra.mxu0 0.0
        %1737 = vmatprep.subr.mxu0 0.0
        %1738 = vmatpush1.msra.mxu0 0.0
        %1739 = vmatprep.subr.mxu0 0.0
        %1740 = vmatpush1.msra.mxu0 0.0
        %1741 = vmatprep.subr.mxu0 0.0
        %1742 = vmatpush1.msra.mxu0 0.0
        %1743 = vmatprep.subr.mxu0 0.0
        %1744 = vmatpush1.msra.mxu0 0.0
        %1745 = vmatprep.subr.mxu0 0.0
        %1746 = vmatpush1.msra.mxu0 0.0
        %1747 = vmatprep.subr.mxu0 0.0
        %1748 = vmatpush1.msra.mxu0 0.0
        %1749 = vmatprep.subr.mxu0 0.0
        %1750 = vmatpush1.msra.mxu0 0.0
        %1751 = vmatprep.subr.mxu0 0.0
        %1752 = vmatpush1.msra.mxu0 0.0
        %1753 = vmatprep.subr.mxu0 0.0
        %1754 = vmatpush1.msra.mxu0 0.0
        %1755 = vmatprep.subr.mxu0 0.0
        %1756 = vmatpush1.msra.mxu0 0.0
        %1757 = vmatprep.subr.mxu0 0.0
        %1758 = vmatpush1.msra.mxu0 0.0
        %1759 = vmatprep.subr.mxu0 0.0
        %1760 = vmatpush1.msra.mxu0 0.0
        %1761 = vmatprep.subr.mxu0 0.0
        %1762 = vmatpush1.msra.mxu0 0.0
        %1763 = vmatprep.subr.mxu0 0.0
        %1764 = vmatpush1.msra.mxu0 0.0
        %1765 = vmatprep.subr.mxu0 0.0
        %1766 = vmatpush1.msra.mxu0 0.0
        %1767 = vmatprep.subr.mxu0 0.0
        %1768 = vmatpush1.msra.mxu0 0.0
        %1769 = vmatprep.subr.mxu0 0.0
        %1770 = vmatpush1.msra.mxu0 0.0
        %1771 = vmatprep.subr.mxu0 0.0
        %1772 = vmatpush1.msra.mxu0 0.0
        %1773 = vmatprep.subr.mxu0 0.0
        %1774 = vmatpush1.msra.mxu0 0.0
        %1775 = vmatprep.subr.mxu0 0.0
        %1776 = vmatpush1.msra.mxu0 0.0
        %1777 = vmatprep.subr.mxu0 0.0
        %1778 = vmatpush1.msra.mxu0 0.0
        %1779 = vmatprep.subr.mxu0 0.0
        %1780 = vmatpush1.msra.mxu0 0.0
        %1781 = vmatprep.subr.mxu0 0.0
        %1782 = vmatpush1.msra.mxu0 0.0
        %1783 = vmatprep.subr.mxu0 0.0
        %1784 = vmatpush1.msra.mxu0 0.0
        %1785 = vmatprep.subr.mxu0 0.0
        %1786 = vmatpush1.msra.mxu0 0.0
        %1787 = vmatprep.subr.mxu0 0.0
        %1788 = vmatpush1.msra.mxu0 0.0
        %1789 = vmatprep.subr.mxu0 0.0
        %1790 = vmatpush1.msra.mxu0 0.0
        %1791 = vmatprep.subr.mxu0 0.0
        %1792 = vmatpush1.msra.mxu0 0.0
        %1793 = vmatprep.subr.mxu0 0.0
        %1794 = vmatpush1.msra.mxu0 0.0
        %1795 = vmatprep.mubr.f32.mxu0 0.0
        %1796 = vmatmul.mubr.f32.gmra.mrb[0].mxu0 %v1729
        %v1797 = vpop.f32.mrb[0].mxu0
        %v1798 = vadd.f32 0.0, %v1797
        %v1799 = vpop.f32.mrb[0].mxu0
        %1800 = vdwg.mxu0
        %1801 = vrot.lane.b32.xlu0 %v1633, 120
        %v1802 = vpop.permute.xlu0 %1801
        %1803 = vrot.lane.b32.xlu0 %v1633, 88
        %v1804 = vpop.permute.xlu0 %1803
        %v1805 = vsel %vm375, %v1802, 0
        %v1807 = vsel %vm375, %v1804, 0
        %1809 = vmatprep.subr.mxu0 0.0
        %1810 = vmatpush1.xpose.msra.mxu0 %v1807
        %1811 = vmatprep.subr.mxu0 0.0
        %1812 = vmatpush1.xpose.msra.mxu0 0.0
        %1813 = vmatprep.subr.mxu0 0.0
        %1814 = vmatpush1.xpose.msra.mxu0 0.0
        %1815 = vmatprep.subr.mxu0 0.0
        %1816 = vmatpush1.xpose.msra.mxu0 0.0
        %1817 = vmatprep.subr.mxu0 0.0
        %1818 = vmatpush1.xpose.msra.mxu0 0.0
        %1819 = vmatprep.subr.mxu0 0.0
        %1820 = vmatpush1.xpose.msra.mxu0 0.0
        %1821 = vmatprep.subr.mxu0 0.0
        %1822 = vmatpush1.xpose.msra.mxu0 0.0
        %1823 = vmatprep.subr.mxu0 0.0
        %1824 = vmatpush1.xpose.msra.mxu0 0.0
        %1825 = vmatprep.subr.mxu0 0.0
        %1826 = vmatpush1.xpose.msra.mxu0 0.0
        %1827 = vmatprep.subr.mxu0 0.0
        %1828 = vmatpush1.xpose.msra.mxu0 0.0
        %1829 = vmatprep.subr.mxu0 0.0
        %1830 = vmatpush1.xpose.msra.mxu0 0.0
        %1831 = vmatprep.subr.mxu0 0.0
        %1832 = vmatpush1.xpose.msra.mxu0 0.0
        %1833 = vmatprep.subr.mxu0 0.0
        %1834 = vmatpush1.xpose.msra.mxu0 0.0
        %1835 = vmatprep.subr.mxu0 0.0
        %1836 = vmatpush1.xpose.msra.mxu0 0.0
        %1837 = vmatprep.subr.mxu0 0.0
        %1838 = vmatpush1.xpose.msra.mxu0 0.0
        %1839 = vmatprep.subr.mxu0 0.0
        %1840 = vmatpush1.xpose.msra.mxu0 0.0
        %1841 = vmatprep.subr.mxu0 0.0
        %1842 = vmatpush1.xpose.msra.mxu0 0.0
        %1843 = vmatprep.subr.mxu0 0.0
        %1844 = vmatpush1.xpose.msra.mxu0 0.0
        %1845 = vmatprep.subr.mxu0 0.0
        %1846 = vmatpush1.xpose.msra.mxu0 0.0
        %1847 = vmatprep.subr.mxu0 0.0
        %1848 = vmatpush1.xpose.msra.mxu0 0.0
        %1849 = vmatprep.subr.mxu0 0.0
        %1850 = vmatpush1.xpose.msra.mxu0 0.0
        %1851 = vmatprep.subr.mxu0 0.0
        %1852 = vmatpush1.xpose.msra.mxu0 0.0
        %1853 = vmatprep.subr.mxu0 0.0
        %1854 = vmatpush1.xpose.msra.mxu0 0.0
        %1855 = vmatprep.subr.mxu0 0.0
        %1856 = vmatpush1.xpose.msra.mxu0 0.0
        %1857 = vmatprep.subr.mxu0 0.0
        %1858 = vmatpush1.xpose.msra.mxu0 0.0
        %1859 = vmatprep.subr.mxu0 0.0
        %1860 = vmatpush1.xpose.msra.mxu0 0.0
        %1861 = vmatprep.subr.mxu0 0.0
        %1862 = vmatpush1.xpose.msra.mxu0 0.0
        %1863 = vmatprep.subr.mxu0 0.0
        %1864 = vmatpush1.xpose.msra.mxu0 0.0
        %1865 = vmatprep.subr.mxu0 0.0
        %1866 = vmatpush1.xpose.msra.mxu0 0.0
        %1867 = vmatprep.subr.mxu0 0.0
        %1868 = vmatpush1.xpose.msra.mxu0 0.0
        %1869 = vmatprep.subr.mxu0 0.0
        %1870 = vmatpush1.xpose.msra.mxu0 0.0
        %1871 = vmatprep.subr.mxu0 0.0
        %1872 = vmatpush1.xpose.msra.mxu0 0.0
        %1873 = vmatprep.mubr.f32.mxu0 0.0
        %1874 = vmatmul.mubr.f32.gmra.mrb[0].mxu0 %v1805
        %v1875 = vpop.f32.mrb[0].mxu0
        %v1876 = vadd.f32 0.0, %v1875
        %v1877 = vpop.f32.mrb[0].mxu0
        %1878 = vdwg.mxu0
        %v1879 = vmul.f32 %v1876, 0.35355338
        %v1880 = vsel %vm375, %v1879, -inf
        %1881 = vmax.xlane.f32.xlu0 %v1880
        %v1882 = vpop.xlane.xlu0 %1881
        %v1883 = vsub.f32 %v1879, %v1882
        %v1884 = vmul.f32 %v1883, 1.442695
        %v1885 = vpow.pop %v1884
        %v1886 = vsel %vm375, %v1885, 0.0
        %1887 = vadd.xlane.f32.xlu0 %v1886
        %v1888 = vpop.xlane.xlu0 %1887
        %v1889 = vrcp.pop %v1888
        %v1890 = vmul.f32 %v1885, %v1889
        %1891 = vrot.lane.b32.xlu0 %v1633, 56
        %v1892 = vpop.permute.xlu0 %1891
        %v1895 = vsel %vm375, %v1890, 0
        %1897 = vmatprep.subr.mxu0 0.0
        %1898 = vmatpush1.msra.mxu0 %v1892
        %1899 = vmatprep.subr.mxu0 0.0
        %1900 = vmatpush1.msra.mxu0 0.0
        %1901 = vmatprep.subr.mxu0 0.0
        %1902 = vmatpush1.msra.mxu0 0.0
        %1903 = vmatprep.subr.mxu0 0.0
        %1904 = vmatpush1.msra.mxu0 0.0
        %1905 = vmatprep.subr.mxu0 0.0
        %1906 = vmatpush1.msra.mxu0 0.0
        %1907 = vmatprep.subr.mxu0 0.0
        %1908 = vmatpush1.msra.mxu0 0.0
        %1909 = vmatprep.subr.mxu0 0.0
        %1910 = vmatpush1.msra.mxu0 0.0
        %1911 = vmatprep.subr.mxu0 0.0
        %1912 = vmatpush1.msra.mxu0 0.0
        %1913 = vmatprep.subr.mxu0 0.0
        %1914 = vmatpush1.msra.mxu0 0.0
        %1915 = vmatprep.subr.mxu0 0.0
        %1916 = vmatpush1.msra.mxu0 0.0
        %1917 = vmatprep.subr.mxu0 0.0
        %1918 = vmatpush1.msra.mxu0 0.0
        %1919 = vmatprep.subr.mxu0 0.0
        %1920 = vmatpush1.msra.mxu0 0.0
        %1921 = vmatprep.subr.mxu0 0.0
        %1922 = vmatpush1.msra.mxu0 0.0
        %1923 = vmatprep.subr.mxu0 0.0
        %1924 = vmatpush1.msra.mxu0 0.0
        %1925 = vmatprep.subr.mxu0 0.0
        %1926 = vmatpush1.msra.mxu0 0.0
        %1927 = vmatprep.subr.mxu0 0.0
        %1928 = vmatpush1.msra.mxu0 0.0
        %1929 = vmatprep.subr.mxu0 0.0
        %1930 = vmatpush1.msra.mxu0 0.0
        %1931 = vmatprep.subr.mxu0 0.0
        %1932 = vmatpush1.msra.mxu0 0.0
        %1933 = vmatprep.subr.mxu0 0.0
        %1934 = vmatpush1.msra.mxu0 0.0
        %1935 = vmatprep.subr.mxu0 0.0
        %1936 = vmatpush1.msra.mxu0 0.0
        %1937 = vmatprep.subr.mxu0 0.0
        %1938 = vmatpush1.msra.mxu0 0.0
        %1939 = vmatprep.subr.mxu0 0.0
        %1940 = vmatpush1.msra.mxu0 0.0
        %1941 = vmatprep.subr.mxu0 0.0
        %1942 = vmatpush1.msra.mxu0 0.0
        %1943 = vmatprep.subr.mxu0 0.0
        %1944 = vmatpush1.msra.mxu0 0.0
        %1945 = vmatprep.subr.mxu0 0.0
        %1946 = vmatpush1.msra.mxu0 0.0
        %1947 = vmatprep.subr.mxu0 0.0
        %1948 = vmatpush1.msra.mxu0 0.0
        %1949 = vmatprep.subr.mxu0 0.0
        %1950 = vmatpush1.msra.mxu0 0.0
        %1951 = vmatprep.subr.mxu0 0.0
        %1952 = vmatpush1.msra.mxu0 0.0
        %1953 = vmatprep.subr.mxu0 0.0
        %1954 = vmatpush1.msra.mxu0 0.0
        %1955 = vmatprep.subr.mxu0 0.0
        %1956 = vmatpush1.msra.mxu0 0.0
        %1957 = vmatprep.subr.mxu0 0.0
        %1958 = vmatpush1.msra.mxu0 0.0
        %1959 = vmatprep.subr.mxu0 0.0
        %1960 = vmatpush1.msra.mxu0 0.0
        %1961 = vmatprep.mubr.f32.mxu0 0.0
        %1962 = vmatmul.mubr.f32.gmra.mrb[0].mxu0 %v1895
        %v1963 = vpop.f32.mrb[0].mxu0
        %v1964 = vadd.f32 0.0, %v1963
        %v1965 = vpop.f32.mrb[0].mxu0
        %1966 = vdwg.mxu0
        %v1968 = vsel %vm375, %v1964, 0
        %1970 = vmatprep.subr.mxu0 0.0
        %1971 = vmatpush1.msra.mxu0 %v234
        %1972 = vmatprep.subr.mxu0 0.0
        %1973 = vmatpush1.msra.mxu0 0.0
        %1974 = vmatprep.subr.mxu0 0.0
        %1975 = vmatpush1.msra.mxu0 0.0
        %1976 = vmatprep.subr.mxu0 0.0
        %1977 = vmatpush1.msra.mxu0 0.0
        %1978 = vmatprep.subr.mxu0 0.0
        %1979 = vmatpush1.msra.mxu0 0.0
        %1980 = vmatprep.subr.mxu0 0.0
        %1981 = vmatpush1.msra.mxu0 0.0
        %1982 = vmatprep.subr.mxu0 0.0
        %1983 = vmatpush1.msra.mxu0 0.0
        %1984 = vmatprep.subr.mxu0 0.0
        %1985 = vmatpush1.msra.mxu0 0.0
        %1986 = vmatprep.subr.mxu0 0.0
        %1987 = vmatpush1.msra.mxu0 0.0
        %1988 = vmatprep.subr.mxu0 0.0
        %1989 = vmatpush1.msra.mxu0 0.0
        %1990 = vmatprep.subr.mxu0 0.0
        %1991 = vmatpush1.msra.mxu0 0.0
        %1992 = vmatprep.subr.mxu0 0.0
        %1993 = vmatpush1.msra.mxu0 0.0
        %1994 = vmatprep.subr.mxu0 0.0
        %1995 = vmatpush1.msra.mxu0 0.0
        %1996 = vmatprep.subr.mxu0 0.0
        %1997 = vmatpush1.msra.mxu0 0.0
        %1998 = vmatprep.subr.mxu0 0.0
        %1999 = vmatpush1.msra.mxu0 0.0
        %2000 = vmatprep.subr.mxu0 0.0
        %2001 = vmatpush1.msra.mxu0 0.0
        %2002 = vmatprep.subr.mxu0 0.0
        %2003 = vmatpush1.msra.mxu0 0.0
        %2004 = vmatprep.subr.mxu0 0.0
        %2005 = vmatpush1.msra.mxu0 0.0
        %2006 = vmatprep.subr.mxu0 0.0
        %2007 = vmatpush1.msra.mxu0 0.0
        %2008 = vmatprep.subr.mxu0 0.0
        %2009 = vmatpush1.msra.mxu0 0.0
        %2010 = vmatprep.subr.mxu0 0.0
        %2011 = vmatpush1.msra.mxu0 0.0
        %2012 = vmatprep.subr.mxu0 0.0
        %2013 = vmatpush1.msra.mxu0 0.0
        %2014 = vmatprep.subr.mxu0 0.0
        %2015 = vmatpush1.msra.mxu0 0.0
        %2016 = vmatprep.subr.mxu0 0.0
        %2017 = vmatpush1.msra.mxu0 0.0
        %2018 = vmatprep.subr.mxu0 0.0
        %2019 = vmatpush1.msra.mxu0 0.0
        %2020 = vmatprep.subr.mxu0 0.0
        %2021 = vmatpush1.msra.mxu0 0.0
        %2022 = vmatprep.subr.mxu0 0.0
        %2023 = vmatpush1.msra.mxu0 0.0
        %2024 = vmatprep.subr.mxu0 0.0
        %2025 = vmatpush1.msra.mxu0 0.0
        %2026 = vmatprep.subr.mxu0 0.0
        %2027 = vmatpush1.msra.mxu0 0.0
        %2028 = vmatprep.subr.mxu0 0.0
        %2029 = vmatpush1.msra.mxu0 0.0
        %2030 = vmatprep.subr.mxu0 0.0
        %2031 = vmatpush1.msra.mxu0 0.0
        %2032 = vmatprep.subr.mxu0 0.0
        %2033 = vmatpush1.msra.mxu0 0.0
        %2034 = vmatprep.mubr.f32.mxu0 0.0
        %2035 = vmatmul.mubr.f32.gmra.mrb[0].mxu0 %v1968
        %v2036 = vpop.f32.mrb[0].mxu0
        %v2037 = vadd.f32 0.0, %v2036
        %v2038 = vpop.f32.mrb[0].mxu0
        %2039 = vdwg.mxu0
        %v2041 = vsel %vm375, %v1798, 0
        %2043 = vmatprep.subr.mxu0 0.0
        %2044 = vmatpush1.msra.mxu0 %v227
        %2045 = vmatprep.subr.mxu0 0.0
        %2046 = vmatpush1.msra.mxu0 0.0
        %2047 = vmatprep.subr.mxu0 0.0
        %2048 = vmatpush1.msra.mxu0 0.0
        %2049 = vmatprep.subr.mxu0 0.0
        %2050 = vmatpush1.msra.mxu0 0.0
        %2051 = vmatprep.subr.mxu0 0.0
        %2052 = vmatpush1.msra.mxu0 0.0
        %2053 = vmatprep.subr.mxu0 0.0
        %2054 = vmatpush1.msra.mxu0 0.0
        %2055 = vmatprep.subr.mxu0 0.0
        %2056 = vmatpush1.msra.mxu0 0.0
        %2057 = vmatprep.subr.mxu0 0.0
        %2058 = vmatpush1.msra.mxu0 0.0
        %2059 = vmatprep.subr.mxu0 0.0
        %2060 = vmatpush1.msra.mxu0 0.0
        %2061 = vmatprep.subr.mxu0 0.0
        %2062 = vmatpush1.msra.mxu0 0.0
        %2063 = vmatprep.subr.mxu0 0.0
        %2064 = vmatpush1.msra.mxu0 0.0
        %2065 = vmatprep.subr.mxu0 0.0
        %2066 = vmatpush1.msra.mxu0 0.0
        %2067 = vmatprep.subr.mxu0 0.0
        %2068 = vmatpush1.msra.mxu0 0.0
        %2069 = vmatprep.subr.mxu0 0.0
        %2070 = vmatpush1.msra.mxu0 0.0
        %2071 = vmatprep.subr.mxu0 0.0
        %2072 = vmatpush1.msra.mxu0 0.0
        %2073 = vmatprep.subr.mxu0 0.0
        %2074 = vmatpush1.msra.mxu0 0.0
        %2075 = vmatprep.subr.mxu0 0.0
        %2076 = vmatpush1.msra.mxu0 0.0
        %2077 = vmatprep.subr.mxu0 0.0
        %2078 = vmatpush1.msra.mxu0 0.0
        %2079 = vmatprep.subr.mxu0 0.0
        %2080 = vmatpush1.msra.mxu0 0.0
        %2081 = vmatprep.subr.mxu0 0.0
        %2082 = vmatpush1.msra.mxu0 0.0
        %2083 = vmatprep.subr.mxu0 0.0
        %2084 = vmatpush1.msra.mxu0 0.0
        %2085 = vmatprep.subr.mxu0 0.0
        %2086 = vmatpush1.msra.mxu0 0.0
        %2087 = vmatprep.subr.mxu0 0.0
        %2088 = vmatpush1.msra.mxu0 0.0
        %2089 = vmatprep.subr.mxu0 0.0
        %2090 = vmatpush1.msra.mxu0 0.0
        %2091 = vmatprep.subr.mxu0 0.0
        %2092 = vmatpush1.msra.mxu0 0.0
        %2093 = vmatprep.subr.mxu0 0.0
        %2094 = vmatpush1.msra.mxu0 0.0
        %2095 = vmatprep.subr.mxu0 0.0
        %2096 = vmatpush1.msra.mxu0 0.0
        %2097 = vmatprep.subr.mxu0 0.0
        %2098 = vmatpush1.msra.mxu0 0.0
        %2099 = vmatprep.subr.mxu0 0.0
        %2100 = vmatpush1.msra.mxu0 0.0
        %2101 = vmatprep.subr.mxu0 0.0
        %2102 = vmatpush1.msra.mxu0 0.0
        %2103 = vmatprep.subr.mxu0 0.0
        %2104 = vmatpush1.msra.mxu0 0.0
        %2105 = vmatprep.subr.mxu0 0.0
        %2106 = vmatpush1.msra.mxu0 0.0
        %2107 = vmatprep.mubr.f32.mxu0 0.0
        %2108 = vmatmul.mubr.f32.gmra.mrb[0].mxu0 %v2041
        %v2109 = vpop.f32.mrb[0].mxu0
        %v2110 = vadd.f32 %v2037, %v2109
        %v2111 = vpop.f32.mrb[0].mxu0
        %2112 = vdwg.mxu0
        %2113 = vrot.lane.b32.xlu0 %v1633, 112
        %v2114 = vpop.permute.xlu0 %2113
        %2115 = vrot.lane.b32.xlu0 %v1633, 80
        %v2116 = vpop.permute.xlu0 %2115
        %v2117 = vsel %vm375, %v2114, 0
        %v2119 = vsel %vm375, %v2116, 0
        %2121 = vmatprep.subr.mxu0 0.0
        %2122 = vmatpush1.xpose.msra.mxu0 %v2119
        %2123 = vmatprep.subr.mxu0 0.0
        %2124 = vmatpush1.xpose.msra.mxu0 0.0
        %2125 = vmatprep.subr.mxu0 0.0
        %2126 = vmatpush1.xpose.msra.mxu0 0.0
        %2127 = vmatprep.subr.mxu0 0.0
        %2128 = vmatpush1.xpose.msra.mxu0 0.0
        %2129 = vmatprep.subr.mxu0 0.0
        %2130 = vmatpush1.xpose.msra.mxu0 0.0
        %2131 = vmatprep.subr.mxu0 0.0
        %2132 = vmatpush1.xpose.msra.mxu0 0.0
        %2133 = vmatprep.subr.mxu0 0.0
        %2134 = vmatpush1.xpose.msra.mxu0 0.0
        %2135 = vmatprep.subr.mxu0 0.0
        %2136 = vmatpush1.xpose.msra.mxu0 0.0
        %2137 = vmatprep.subr.mxu0 0.0
        %2138 = vmatpush1.xpose.msra.mxu0 0.0
        %2139 = vmatprep.subr.mxu0 0.0
        %2140 = vmatpush1.xpose.msra.mxu0 0.0
        %2141 = vmatprep.subr.mxu0 0.0
        %2142 = vmatpush1.xpose.msra.mxu0 0.0
        %2143 = vmatprep.subr.mxu0 0.0
        %2144 = vmatpush1.xpose.msra.mxu0 0.0
        %2145 = vmatprep.subr.mxu0 0.0
        %2146 = vmatpush1.xpose.msra.mxu0 0.0
        %2147 = vmatprep.subr.mxu0 0.0
        %2148 = vmatpush1.xpose.msra.mxu0 0.0
        %2149 = vmatprep.subr.mxu0 0.0
        %2150 = vmatpush1.xpose.msra.mxu0 0.0
        %2151 = vmatprep.subr.mxu0 0.0
        %2152 = vmatpush1.xpose.msra.mxu0 0.0
        %2153 = vmatprep.subr.mxu0 0.0
        %2154 = vmatpush1.xpose.msra.mxu0 0.0
        %2155 = vmatprep.subr.mxu0 0.0
        %2156 = vmatpush1.xpose.msra.mxu0 0.0
        %2157 = vmatprep.subr.mxu0 0.0
        %2158 = vmatpush1.xpose.msra.mxu0 0.0
        %2159 = vmatprep.subr.mxu0 0.0
        %2160 = vmatpush1.xpose.msra.mxu0 0.0
        %2161 = vmatprep.subr.mxu0 0.0
        %2162 = vmatpush1.xpose.msra.mxu0 0.0
        %2163 = vmatprep.subr.mxu0 0.0
        %2164 = vmatpush1.xpose.msra.mxu0 0.0
        %2165 = vmatprep.subr.mxu0 0.0
        %2166 = vmatpush1.xpose.msra.mxu0 0.0
        %2167 = vmatprep.subr.mxu0 0.0
        %2168 = vmatpush1.xpose.msra.mxu0 0.0
        %2169 = vmatprep.subr.mxu0 0.0
        %2170 = vmatpush1.xpose.msra.mxu0 0.0
        %2171 = vmatprep.subr.mxu0 0.0
        %2172 = vmatpush1.xpose.msra.mxu0 0.0
        %2173 = vmatprep.subr.mxu0 0.0
        %2174 = vmatpush1.xpose.msra.mxu0 0.0
        %2175 = vmatprep.subr.mxu0 0.0
        %2176 = vmatpush1.xpose.msra.mxu0 0.0
        %2177 = vmatprep.subr.mxu0 0.0
        %2178 = vmatpush1.xpose.msra.mxu0 0.0
        %2179 = vmatprep.subr.mxu0 0.0
        %2180 = vmatpush1.xpose.msra.mxu0 0.0
        %2181 = vmatprep.subr.mxu0 0.0
        %2182 = vmatpush1.xpose.msra.mxu0 0.0
        %2183 = vmatprep.subr.mxu0 0.0
        %2184 = vmatpush1.xpose.msra.mxu0 0.0
        %2185 = vmatprep.mubr.f32.mxu0 0.0
        %2186 = vmatmul.mubr.f32.gmra.mrb[0].mxu0 %v2117
        %v2187 = vpop.f32.mrb[0].mxu0
        %v2188 = vadd.f32 0.0, %v2187
        %v2189 = vpop.f32.mrb[0].mxu0
        %2190 = vdwg.mxu0
        %v2191 = vmul.f32 %v2188, 0.35355338
        %v2192 = vsel %vm375, %v2191, -inf
        %2193 = vmax.xlane.f32.xlu0 %v2192
        %v2194 = vpop.xlane.xlu0 %2193
        %v2195 = vsub.f32 %v2191, %v2194
        %v2196 = vmul.f32 %v2195, 1.442695
        %v2197 = vpow.pop %v2196
        %v2198 = vsel %vm375, %v2197, 0.0
        %2199 = vadd.xlane.f32.xlu0 %v2198
        %v2200 = vpop.xlane.xlu0 %2199
        %v2201 = vrcp.pop %v2200
        %v2202 = vmul.f32 %v2197, %v2201
        %2203 = vrot.lane.b32.xlu0 %v1633, 48
        %v2204 = vpop.permute.xlu0 %2203
        %v2207 = vsel %vm375, %v2202, 0
        %2209 = vmatprep.subr.mxu0 0.0
        %2210 = vmatpush1.msra.mxu0 %v2204
        %2211 = vmatprep.subr.mxu0 0.0
        %2212 = vmatpush1.msra.mxu0 0.0
        %2213 = vmatprep.subr.mxu0 0.0
        %2214 = vmatpush1.msra.mxu0 0.0
        %2215 = vmatprep.subr.mxu0 0.0
        %2216 = vmatpush1.msra.mxu0 0.0
        %2217 = vmatprep.subr.mxu0 0.0
        %2218 = vmatpush1.msra.mxu0 0.0
        %2219 = vmatprep.subr.mxu0 0.0
        %2220 = vmatpush1.msra.mxu0 0.0
        %2221 = vmatprep.subr.mxu0 0.0
        %2222 = vmatpush1.msra.mxu0 0.0
        %2223 = vmatprep.subr.mxu0 0.0
        %2224 = vmatpush1.msra.mxu0 0.0
        %2225 = vmatprep.subr.mxu0 0.0
        %2226 = vmatpush1.msra.mxu0 0.0
        %2227 = vmatprep.subr.mxu0 0.0
        %2228 = vmatpush1.msra.mxu0 0.0
        %2229 = vmatprep.subr.mxu0 0.0
        %2230 = vmatpush1.msra.mxu0 0.0
        %2231 = vmatprep.subr.mxu0 0.0
        %2232 = vmatpush1.msra.mxu0 0.0
        %2233 = vmatprep.subr.mxu0 0.0
        %2234 = vmatpush1.msra.mxu0 0.0
        %2235 = vmatprep.subr.mxu0 0.0
        %2236 = vmatpush1.msra.mxu0 0.0
        %2237 = vmatprep.subr.mxu0 0.0
        %2238 = vmatpush1.msra.mxu0 0.0
        %2239 = vmatprep.subr.mxu0 0.0
        %2240 = vmatpush1.msra.mxu0 0.0
        %2241 = vmatprep.subr.mxu0 0.0
        %2242 = vmatpush1.msra.mxu0 0.0
        %2243 = vmatprep.subr.mxu0 0.0
        %2244 = vmatpush1.msra.mxu0 0.0
        %2245 = vmatprep.subr.mxu0 0.0
        %2246 = vmatpush1.msra.mxu0 0.0
        %2247 = vmatprep.subr.mxu0 0.0
        %2248 = vmatpush1.msra.mxu0 0.0
        %2249 = vmatprep.subr.mxu0 0.0
        %2250 = vmatpush1.msra.mxu0 0.0
        %2251 = vmatprep.subr.mxu0 0.0
        %2252 = vmatpush1.msra.mxu0 0.0
        %2253 = vmatprep.subr.mxu0 0.0
        %2254 = vmatpush1.msra.mxu0 0.0
        %2255 = vmatprep.subr.mxu0 0.0
        %2256 = vmatpush1.msra.mxu0 0.0
        %2257 = vmatprep.subr.mxu0 0.0
        %2258 = vmatpush1.msra.mxu0 0.0
        %2259 = vmatprep.subr.mxu0 0.0
        %2260 = vmatpush1.msra.mxu0 0.0
        %2261 = vmatprep.subr.mxu0 0.0
        %2262 = vmatpush1.msra.mxu0 0.0
        %2263 = vmatprep.subr.mxu0 0.0
        %2264 = vmatpush1.msra.mxu0 0.0
        %2265 = vmatprep.subr.mxu0 0.0
        %2266 = vmatpush1.msra.mxu0 0.0
        %2267 = vmatprep.subr.mxu0 0.0
        %2268 = vmatpush1.msra.mxu0 0.0
        %2269 = vmatprep.subr.mxu0 0.0
        %2270 = vmatpush1.msra.mxu0 0.0
        %2271 = vmatprep.subr.mxu0 0.0
        %2272 = vmatpush1.msra.mxu0 0.0
        %2273 = vmatprep.mubr.f32.mxu0 0.0
        %2274 = vmatmul.mubr.f32.gmra.mrb[0].mxu0 %v2207
        %v2275 = vpop.f32.mrb[0].mxu0
        %v2276 = vadd.f32 0.0, %v2275
        %v2277 = vpop.f32.mrb[0].mxu0
        %2278 = vdwg.mxu0
        %v2280 = vsel %vm375, %v2276, 0
        %2282 = vmatprep.subr.mxu0 0.0
        %2283 = vmatpush1.msra.mxu0 %v241
        %2284 = vmatprep.subr.mxu0 0.0
        %2285 = vmatpush1.msra.mxu0 0.0
        %2286 = vmatprep.subr.mxu0 0.0
        %2287 = vmatpush1.msra.mxu0 0.0
        %2288 = vmatprep.subr.mxu0 0.0
        %2289 = vmatpush1.msra.mxu0 0.0
        %2290 = vmatprep.subr.mxu0 0.0
        %2291 = vmatpush1.msra.mxu0 0.0
        %2292 = vmatprep.subr.mxu0 0.0
        %2293 = vmatpush1.msra.mxu0 0.0
        %2294 = vmatprep.subr.mxu0 0.0
        %2295 = vmatpush1.msra.mxu0 0.0
        %2296 = vmatprep.subr.mxu0 0.0
        %2297 = vmatpush1.msra.mxu0 0.0
        %2298 = vmatprep.subr.mxu0 0.0
        %2299 = vmatpush1.msra.mxu0 0.0
        %2300 = vmatprep.subr.mxu0 0.0
        %2301 = vmatpush1.msra.mxu0 0.0
        %2302 = vmatprep.subr.mxu0 0.0
        %2303 = vmatpush1.msra.mxu0 0.0
        %2304 = vmatprep.subr.mxu0 0.0
        %2305 = vmatpush1.msra.mxu0 0.0
        %2306 = vmatprep.subr.mxu0 0.0
        %2307 = vmatpush1.msra.mxu0 0.0
        %2308 = vmatprep.subr.mxu0 0.0
        %2309 = vmatpush1.msra.mxu0 0.0
        %2310 = vmatprep.subr.mxu0 0.0
        %2311 = vmatpush1.msra.mxu0 0.0
        %2312 = vmatprep.subr.mxu0 0.0
        %2313 = vmatpush1.msra.mxu0 0.0
        %2314 = vmatprep.subr.mxu0 0.0
        %2315 = vmatpush1.msra.mxu0 0.0
        %2316 = vmatprep.subr.mxu0 0.0
        %2317 = vmatpush1.msra.mxu0 0.0
        %2318 = vmatprep.subr.mxu0 0.0
        %2319 = vmatpush1.msra.mxu0 0.0
        %2320 = vmatprep.subr.mxu0 0.0
        %2321 = vmatpush1.msra.mxu0 0.0
        %2322 = vmatprep.subr.mxu0 0.0
        %2323 = vmatpush1.msra.mxu0 0.0
        %2324 = vmatprep.subr.mxu0 0.0
        %2325 = vmatpush1.msra.mxu0 0.0
        %2326 = vmatprep.subr.mxu0 0.0
        %2327 = vmatpush1.msra.mxu0 0.0
        %2328 = vmatprep.subr.mxu0 0.0
        %2329 = vmatpush1.msra.mxu0 0.0
        %2330 = vmatprep.subr.mxu0 0.0
        %2331 = vmatpush1.msra.mxu0 0.0
        %2332 = vmatprep.subr.mxu0 0.0
        %2333 = vmatpush1.msra.mxu0 0.0
        %2334 = vmatprep.subr.mxu0 0.0
        %2335 = vmatpush1.msra.mxu0 0.0
        %2336 = vmatprep.subr.mxu0 0.0
        %2337 = vmatpush1.msra.mxu0 0.0
        %2338 = vmatprep.subr.mxu0 0.0
        %2339 = vmatpush1.msra.mxu0 0.0
        %2340 = vmatprep.subr.mxu0 0.0
        %2341 = vmatpush1.msra.mxu0 0.0
        %2342 = vmatprep.subr.mxu0 0.0
        %2343 = vmatpush1.msra.mxu0 0.0
        %2344 = vmatprep.subr.mxu0 0.0
        %2345 = vmatpush1.msra.mxu0 0.0
        %2346 = vmatprep.mubr.f32.mxu0 0.0
        %2347 = vmatmul.mubr.f32.gmra.mrb[0].mxu0 %v2280
        %v2348 = vpop.f32.mrb[0].mxu0
        %v2349 = vadd.f32 0.0, %v2348
        %v2350 = vpop.f32.mrb[0].mxu0
        %2351 = vdwg.mxu0
        %v2352 = vadd.f32 %v2110, %v2349
        %2353 = vrot.lane.b32.xlu0 %v1633, 104
        %v2354 = vpop.permute.xlu0 %2353
        %2355 = vrot.lane.b32.xlu0 %v1633, 72
        %v2356 = vpop.permute.xlu0 %2355
        %v2357 = vsel %vm375, %v2354, 0
        %v2359 = vsel %vm375, %v2356, 0
        %2361 = vmatprep.subr.mxu0 0.0
        %2362 = vmatpush1.xpose.msra.mxu0 %v2359
        %2363 = vmatprep.subr.mxu0 0.0
        %2364 = vmatpush1.xpose.msra.mxu0 0.0
        %2365 = vmatprep.subr.mxu0 0.0
        %2366 = vmatpush1.xpose.msra.mxu0 0.0
        %2367 = vmatprep.subr.mxu0 0.0
        %2368 = vmatpush1.xpose.msra.mxu0 0.0
        %2369 = vmatprep.subr.mxu0 0.0
        %2370 = vmatpush1.xpose.msra.mxu0 0.0
        %2371 = vmatprep.subr.mxu0 0.0
        %2372 = vmatpush1.xpose.msra.mxu0 0.0
        %2373 = vmatprep.subr.mxu0 0.0
        %2374 = vmatpush1.xpose.msra.mxu0 0.0
        %2375 = vmatprep.subr.mxu0 0.0
        %2376 = vmatpush1.xpose.msra.mxu0 0.0
        %2377 = vmatprep.subr.mxu0 0.0
        %2378 = vmatpush1.xpose.msra.mxu0 0.0
        %2379 = vmatprep.subr.mxu0 0.0
        %2380 = vmatpush1.xpose.msra.mxu0 0.0
        %2381 = vmatprep.subr.mxu0 0.0
        %2382 = vmatpush1.xpose.msra.mxu0 0.0
        %2383 = vmatprep.subr.mxu0 0.0
        %2384 = vmatpush1.xpose.msra.mxu0 0.0
        %2385 = vmatprep.subr.mxu0 0.0
        %2386 = vmatpush1.xpose.msra.mxu0 0.0
        %2387 = vmatprep.subr.mxu0 0.0
        %2388 = vmatpush1.xpose.msra.mxu0 0.0
        %2389 = vmatprep.subr.mxu0 0.0
        %2390 = vmatpush1.xpose.msra.mxu0 0.0
        %2391 = vmatprep.subr.mxu0 0.0
        %2392 = vmatpush1.xpose.msra.mxu0 0.0
        %2393 = vmatprep.subr.mxu0 0.0
        %2394 = vmatpush1.xpose.msra.mxu0 0.0
        %2395 = vmatprep.subr.mxu0 0.0
        %2396 = vmatpush1.xpose.msra.mxu0 0.0
        %2397 = vmatprep.subr.mxu0 0.0
        %2398 = vmatpush1.xpose.msra.mxu0 0.0
        %2399 = vmatprep.subr.mxu0 0.0
        %2400 = vmatpush1.xpose.msra.mxu0 0.0
        %2401 = vmatprep.subr.mxu0 0.0
        %2402 = vmatpush1.xpose.msra.mxu0 0.0
        %2403 = vmatprep.subr.mxu0 0.0
        %2404 = vmatpush1.xpose.msra.mxu0 0.0
        %2405 = vmatprep.subr.mxu0 0.0
        %2406 = vmatpush1.xpose.msra.mxu0 0.0
        %2407 = vmatprep.subr.mxu0 0.0
        %2408 = vmatpush1.xpose.msra.mxu0 0.0
        %2409 = vmatprep.subr.mxu0 0.0
        %2410 = vmatpush1.xpose.msra.mxu0 0.0
        %2411 = vmatprep.subr.mxu0 0.0
        %2412 = vmatpush1.xpose.msra.mxu0 0.0
        %2413 = vmatprep.subr.mxu0 0.0
        %2414 = vmatpush1.xpose.msra.mxu0 0.0
        %2415 = vmatprep.subr.mxu0 0.0
        %2416 = vmatpush1.xpose.msra.mxu0 0.0
        %2417 = vmatprep.subr.mxu0 0.0
        %2418 = vmatpush1.xpose.msra.mxu0 0.0
        %2419 = vmatprep.subr.mxu0 0.0
        %2420 = vmatpush1.xpose.msra.mxu0 0.0
        %2421 = vmatprep.subr.mxu0 0.0
        %2422 = vmatpush1.xpose.msra.mxu0 0.0
        %2423 = vmatprep.subr.mxu0 0.0
        %2424 = vmatpush1.xpose.msra.mxu0 0.0
        %2425 = vmatprep.mubr.f32.mxu0 0.0
        %2426 = vmatmul.mubr.f32.gmra.mrb[0].mxu0 %v2357
        %v2427 = vpop.f32.mrb[0].mxu0
        %v2428 = vadd.f32 0.0, %v2427
        %v2429 = vpop.f32.mrb[0].mxu0
        %2430 = vdwg.mxu0
        %v2431 = vmul.f32 %v2428, 0.35355338
        %v2432 = vsel %vm375, %v2431, -inf
        %2433 = vmax.xlane.f32.xlu0 %v2432
        %v2434 = vpop.xlane.xlu0 %2433
        %v2435 = vsub.f32 %v2431, %v2434
        %v2436 = vmul.f32 %v2435, 1.442695
        %v2437 = vpow.pop %v2436
        %v2438 = vsel %vm375, %v2437, 0.0
        %2439 = vadd.xlane.f32.xlu0 %v2438
        %v2440 = vpop.xlane.xlu0 %2439
        %v2441 = vrcp.pop %v2440
        %v2442 = vmul.f32 %v2437, %v2441
        %2443 = vrot.lane.b32.xlu0 %v1633, 40
        %v2444 = vpop.permute.xlu0 %2443
        %v2447 = vsel %vm375, %v2442, 0
        %2449 = vmatprep.subr.mxu0 0.0
        %2450 = vmatpush1.msra.mxu0 %v2444
        %2451 = vmatprep.subr.mxu0 0.0
        %2452 = vmatpush1.msra.mxu0 0.0
        %2453 = vmatprep.subr.mxu0 0.0
        %2454 = vmatpush1.msra.mxu0 0.0
        %2455 = vmatprep.subr.mxu0 0.0
        %2456 = vmatpush1.msra.mxu0 0.0
        %2457 = vmatprep.subr.mxu0 0.0
        %2458 = vmatpush1.msra.mxu0 0.0
        %2459 = vmatprep.subr.mxu0 0.0
        %2460 = vmatpush1.msra.mxu0 0.0
        %2461 = vmatprep.subr.mxu0 0.0
        %2462 = vmatpush1.msra.mxu0 0.0
        %2463 = vmatprep.subr.mxu0 0.0
        %2464 = vmatpush1.msra.mxu0 0.0
        %2465 = vmatprep.subr.mxu0 0.0
        %2466 = vmatpush1.msra.mxu0 0.0
        %2467 = vmatprep.subr.mxu0 0.0
        %2468 = vmatpush1.msra.mxu0 0.0
        %2469 = vmatprep.subr.mxu0 0.0
        %2470 = vmatpush1.msra.mxu0 0.0
        %2471 = vmatprep.subr.mxu0 0.0
        %2472 = vmatpush1.msra.mxu0 0.0
        %2473 = vmatprep.subr.mxu0 0.0
        %2474 = vmatpush1.msra.mxu0 0.0
        %2475 = vmatprep.subr.mxu0 0.0
        %2476 = vmatpush1.msra.mxu0 0.0
        %2477 = vmatprep.subr.mxu0 0.0
        %2478 = vmatpush1.msra.mxu0 0.0
        %2479 = vmatprep.subr.mxu0 0.0
        %2480 = vmatpush1.msra.mxu0 0.0
        %2481 = vmatprep.subr.mxu0 0.0
        %2482 = vmatpush1.msra.mxu0 0.0
        %2483 = vmatprep.subr.mxu0 0.0
        %2484 = vmatpush1.msra.mxu0 0.0
        %2485 = vmatprep.subr.mxu0 0.0
        %2486 = vmatpush1.msra.mxu0 0.0
        %2487 = vmatprep.subr.mxu0 0.0
        %2488 = vmatpush1.msra.mxu0 0.0
        %2489 = vmatprep.subr.mxu0 0.0
        %2490 = vmatpush1.msra.mxu0 0.0
        %2491 = vmatprep.subr.mxu0 0.0
        %2492 = vmatpush1.msra.mxu0 0.0
        %2493 = vmatprep.subr.mxu0 0.0
        %2494 = vmatpush1.msra.mxu0 0.0
        %2495 = vmatprep.subr.mxu0 0.0
        %2496 = vmatpush1.msra.mxu0 0.0
        %2497 = vmatprep.subr.mxu0 0.0
        %2498 = vmatpush1.msra.mxu0 0.0
        %2499 = vmatprep.subr.mxu0 0.0
        %2500 = vmatpush1.msra.mxu0 0.0
        %2501 = vmatprep.subr.mxu0 0.0
        %2502 = vmatpush1.msra.mxu0 0.0
        %2503 = vmatprep.subr.mxu0 0.0
        %2504 = vmatpush1.msra.mxu0 0.0
        %2505 = vmatprep.subr.mxu0 0.0
        %2506 = vmatpush1.msra.mxu0 0.0
        %2507 = vmatprep.subr.mxu0 0.0
        %2508 = vmatpush1.msra.mxu0 0.0
        %2509 = vmatprep.subr.mxu0 0.0
        %2510 = vmatpush1.msra.mxu0 0.0
        %2511 = vmatprep.subr.mxu0 0.0
        %2512 = vmatpush1.msra.mxu0 0.0
        %2513 = vmatprep.mubr.f32.mxu0 0.0
        %2514 = vmatmul.mubr.f32.gmra.mrb[0].mxu0 %v2447
        %v2515 = vpop.f32.mrb[0].mxu0
        %v2516 = vadd.f32 0.0, %v2515
        %v2517 = vpop.f32.mrb[0].mxu0
        %2518 = vdwg.mxu0
        %v2520 = vsel %vm375, %v2516, 0
        %2522 = vmatprep.subr.mxu0 0.0
        %2523 = vmatpush1.msra.mxu0 %v248
        %2524 = vmatprep.subr.mxu0 0.0
        %2525 = vmatpush1.msra.mxu0 0.0
        %2526 = vmatprep.subr.mxu0 0.0
        %2527 = vmatpush1.msra.mxu0 0.0
        %2528 = vmatprep.subr.mxu0 0.0
        %2529 = vmatpush1.msra.mxu0 0.0
        %2530 = vmatprep.subr.mxu0 0.0
        %2531 = vmatpush1.msra.mxu0 0.0
        %2532 = vmatprep.subr.mxu0 0.0
        %2533 = vmatpush1.msra.mxu0 0.0
        %2534 = vmatprep.subr.mxu0 0.0
        %2535 = vmatpush1.msra.mxu0 0.0
        %2536 = vmatprep.subr.mxu0 0.0
        %2537 = vmatpush1.msra.mxu0 0.0
        %2538 = vmatprep.subr.mxu0 0.0
        %2539 = vmatpush1.msra.mxu0 0.0
        %2540 = vmatprep.subr.mxu0 0.0
        %2541 = vmatpush1.msra.mxu0 0.0
        %2542 = vmatprep.subr.mxu0 0.0
        %2543 = vmatpush1.msra.mxu0 0.0
        %2544 = vmatprep.subr.mxu0 0.0
        %2545 = vmatpush1.msra.mxu0 0.0
        %2546 = vmatprep.subr.mxu0 0.0
        %2547 = vmatpush1.msra.mxu0 0.0
        %2548 = vmatprep.subr.mxu0 0.0
        %2549 = vmatpush1.msra.mxu0 0.0
        %2550 = vmatprep.subr.mxu0 0.0
        %2551 = vmatpush1.msra.mxu0 0.0
        %2552 = vmatprep.subr.mxu0 0.0
        %2553 = vmatpush1.msra.mxu0 0.0
        %2554 = vmatprep.subr.mxu0 0.0
        %2555 = vmatpush1.msra.mxu0 0.0
        %2556 = vmatprep.subr.mxu0 0.0
        %2557 = vmatpush1.msra.mxu0 0.0
        %2558 = vmatprep.subr.mxu0 0.0
        %2559 = vmatpush1.msra.mxu0 0.0
        %2560 = vmatprep.subr.mxu0 0.0
        %2561 = vmatpush1.msra.mxu0 0.0
        %2562 = vmatprep.subr.mxu0 0.0
        %2563 = vmatpush1.msra.mxu0 0.0
        %2564 = vmatprep.subr.mxu0 0.0
        %2565 = vmatpush1.msra.mxu0 0.0
        %2566 = vmatprep.subr.mxu0 0.0
        %2567 = vmatpush1.msra.mxu0 0.0
        %2568 = vmatprep.subr.mxu0 0.0
        %2569 = vmatpush1.msra.mxu0 0.0
        %2570 = vmatprep.subr.mxu0 0.0
        %2571 = vmatpush1.msra.mxu0 0.0
        %2572 = vmatprep.subr.mxu0 0.0
        %2573 = vmatpush1.msra.mxu0 0.0
        %2574 = vmatprep.subr.mxu0 0.0
        %2575 = vmatpush1.msra.mxu0 0.0
        %2576 = vmatprep.subr.mxu0 0.0
        %2577 = vmatpush1.msra.mxu0 0.0
        %2578 = vmatprep.subr.mxu0 0.0
        %2579 = vmatpush1.msra.mxu0 0.0
        %2580 = vmatprep.subr.mxu0 0.0
        %2581 = vmatpush1.msra.mxu0 0.0
        %2582 = vmatprep.subr.mxu0 0.0
        %2583 = vmatpush1.msra.mxu0 0.0
        %2584 = vmatprep.subr.mxu0 0.0
        %2585 = vmatpush1.msra.mxu0 0.0
        %2586 = vmatprep.mubr.f32.mxu0 0.0
        %2587 = vmatmul.mubr.f32.gmra.mrb[0].mxu0 %v2520
        %v2588 = vpop.f32.mrb[0].mxu0
        %v2589 = vadd.f32 0.0, %v2588
        %v2590 = vpop.f32.mrb[0].mxu0
        %2591 = vdwg.mxu0
        %v2592 = vadd.f32 %v2352, %v2589
        %v2593 = vadd.f32 %v1519, %v2592
        %v2594 = vlaneseq
        %v2595 = vshrl.u32 %v2594, 7
        %v2596 = vsub.s32 3, %v2595
        %v2597 = vrot.slane %v252, %v2596
        %v2598 = vadd.f32 %v2593, %v2597
        %v2599 = vsel %vm270, %v2598, 0.0
        %2600 = vadd.xlane.f32.xlu0 %v2599
        %v2601 = vpop.xlane.xlu0 %2600
        %v2602 = vmul.f32 %v2601, %v274
        %v2603 = vsub.f32 %v2598, %v2602
        %v2604 = vmul.f32 %v2603, %v2603
        %v2605 = vsel %vm270, %v2604, 0.0
        %2606 = vadd.xlane.f32.xlu0 %v2605
        %v2607 = vpop.xlane.xlu0 %2606
        %v2608 = vmul.f32 %v2607, %v274
        %v2609 = vadd.f32 %v2608, 1e-05
        %v2610 = vrsqrt.pop %v2609
        %v2611 = vmul.f32 %v2603, %v2610
        %v2612 = vlaneseq
        %v2613 = vshrl.u32 %v2612, 7
        %v2614 = vsub.s32 4, %v2613
        %v2615 = vrot.slane %v252, %v2614
        %v2616 = vmul.f32 %v2611, %v2615
        %v2617 = vlaneseq
        %v2618 = vshrl.u32 %v2617, 7
        %v2619 = vsub.s32 5, %v2618
        %v2620 = vrot.slane %v252, %v2619
        %v2621 = vadd.f32 %v2616, %v2620
        %v2622 = vlaneseq
        %v2623 = vshrl.u32 %v2622, 7
        %v2624 = vsub.s32 6, %v2623
        %v2625 = vrot.slane %v252, %v2624
        %v2627 = vsel %vm270, %v2621, 0
        %2629 = vmatprep.subr.mxu0 0.0
        %2630 = vmatpush1.msra.mxu0 %v228
        %2631 = vmatprep.subr.mxu0 0.0
        %2632 = vmatpush1.msra.mxu0 %v235
        %2633 = vmatprep.subr.mxu0 0.0
        %2634 = vmatpush1.msra.mxu0 %v242
        %2635 = vmatprep.subr.mxu0 0.0
        %2636 = vmatpush1.msra.mxu0 %v249
        %2637 = vmatprep.subr.mxu0 0.0
        %2638 = vmatpush1.msra.mxu0 0.0
        %2639 = vmatprep.subr.mxu0 0.0
        %2640 = vmatpush1.msra.mxu0 0.0
        %2641 = vmatprep.subr.mxu0 0.0
        %2642 = vmatpush1.msra.mxu0 0.0
        %2643 = vmatprep.subr.mxu0 0.0
        %2644 = vmatpush1.msra.mxu0 0.0
        %2645 = vmatprep.subr.mxu0 0.0
        %2646 = vmatpush1.msra.mxu0 0.0
        %2647 = vmatprep.subr.mxu0 0.0
        %2648 = vmatpush1.msra.mxu0 0.0
        %2649 = vmatprep.subr.mxu0 0.0
        %2650 = vmatpush1.msra.mxu0 0.0
        %2651 = vmatprep.subr.mxu0 0.0
        %2652 = vmatpush1.msra.mxu0 0.0
        %2653 = vmatprep.subr.mxu0 0.0
        %2654 = vmatpush1.msra.mxu0 0.0
        %2655 = vmatprep.subr.mxu0 0.0
        %2656 = vmatpush1.msra.mxu0 0.0
        %2657 = vmatprep.subr.mxu0 0.0
        %2658 = vmatpush1.msra.mxu0 0.0
        %2659 = vmatprep.subr.mxu0 0.0
        %2660 = vmatpush1.msra.mxu0 0.0
        %2661 = vmatprep.subr.mxu0 0.0
        %2662 = vmatpush1.msra.mxu0 0.0
        %2663 = vmatprep.subr.mxu0 0.0
        %2664 = vmatpush1.msra.mxu0 0.0
        %2665 = vmatprep.subr.mxu0 0.0
        %2666 = vmatpush1.msra.mxu0 0.0
        %2667 = vmatprep.subr.mxu0 0.0
        %2668 = vmatpush1.msra.mxu0 0.0
        %2669 = vmatprep.subr.mxu0 0.0
        %2670 = vmatpush1.msra.mxu0 0.0
        %2671 = vmatprep.subr.mxu0 0.0
        %2672 = vmatpush1.msra.mxu0 0.0
        %2673 = vmatprep.subr.mxu0 0.0
        %2674 = vmatpush1.msra.mxu0 0.0
        %2675 = vmatprep.subr.mxu0 0.0
        %2676 = vmatpush1.msra.mxu0 0.0
        %2677 = vmatprep.subr.mxu0 0.0
        %2678 = vmatpush1.msra.mxu0 0.0
        %2679 = vmatprep.subr.mxu0 0.0
        %2680 = vmatpush1.msra.mxu0 0.0
        %2681 = vmatprep.subr.mxu0 0.0
        %2682 = vmatpush1.msra.mxu0 0.0
        %2683 = vmatprep.subr.mxu0 0.0
        %2684 = vmatpush1.msra.mxu0 0.0
        %2685 = vmatprep.subr.mxu0 0.0
        %2686 = vmatpush1.msra.mxu0 0.0
        %2687 = vmatprep.subr.mxu0 0.0
        %2688 = vmatpush1.msra.mxu0 0.0
        %2689 = vmatprep.subr.mxu0 0.0
        %2690 = vmatpush1.msra.mxu0 0.0
        %2691 = vmatprep.subr.mxu0 0.0
        %2692 = vmatpush1.msra.mxu0 0.0
        %2693 = vmatprep.mubr.f32.mxu0 0.0
        %2694 = vmatmul.mubr.f32.gmra.mrb[0].mxu0 %v2627
        %v2695 = vpop.f32.mrb[0].mxu0
        %v2696 = vadd.f32 %v2625, %v2695
        %v2697 = vpop.f32.mrb[0].mxu0
        %2698 = vdwg.mxu0
        %v2699 = vmul.f32 %v2696, %v2696
        %v2700 = vmul.f32 %v2696, %v2699
        %v2701 = vmul.f32 %v2700, 0.044715
        %v2702 = vadd.f32 %v2696, %v2701
        %v2703 = vmul.f32 %v2702, 0.7978846
        %v2704 = vtanh.pop %v2703
        %v2705 = vadd.f32 %v2704, 1.0
        %v2706 = vmul.f32 %v2705, 0.5
        %v2707 = vmul.f32 %v2696, %v2706
        %v2708 = vlaneseq
        %v2709 = vshrl.u32 %v2708, 7
        %v2710 = vsub.s32 7, %v2709
        %v2711 = vrot.slane %v252, %v2710
        %2728 = vrot.lane.b32.xlu0 %v1520, 96
        %v2729 = vpop.permute.xlu0 %2728
        %2730 = vrot.lane.b32.xlu0 %v1521, 96
        %v2731 = vpop.permute.xlu0 %2730
        %2732 = vrot.lane.b32.xlu0 %v1522, 96
        %v2733 = vpop.permute.xlu0 %2732
        %2734 = vrot.lane.b32.xlu0 %v1523, 96
        %v2735 = vpop.permute.xlu0 %2734
        %2736 = vrot.lane.b32.xlu0 %v1524, 96
        %v2737 = vpop.permute.xlu0 %2736
        %2738 = vrot.lane.b32.xlu0 %v1525, 96
        %v2739 = vpop.permute.xlu0 %2738
        %2740 = vrot.lane.b32.xlu0 %v1526, 96
        %v2741 = vpop.permute.xlu0 %2740
        %2742 = vrot.lane.b32.xlu0 %v1527, 96
        %v2743 = vpop.permute.xlu0 %2742
        %2744 = vrot.lane.b32.xlu0 %v1528, 96
        %v2745 = vpop.permute.xlu0 %2744
        %2746 = vrot.lane.b32.xlu0 %v1529, 96
        %v2747 = vpop.permute.xlu0 %2746
        %2748 = vrot.lane.b32.xlu0 %v1530, 96
        %v2749 = vpop.permute.xlu0 %2748
        %2750 = vrot.lane.b32.xlu0 %v1531, 96
        %v2751 = vpop.permute.xlu0 %2750
        %2752 = vrot.lane.b32.xlu0 %v1532, 96
        %v2753 = vpop.permute.xlu0 %2752
        %2754 = vrot.lane.b32.xlu0 %v1533, 96
        %v2755 = vpop.permute.xlu0 %2754
        %2756 = vrot.lane.b32.xlu0 %v1534, 96
        %v2757 = vpop.permute.xlu0 %2756
        %2758 = vrot.lane.b32.xlu0 %v1535, 96
        %v2759 = vpop.permute.xlu0 %2758
        %2776 = vmatprep.subr.mxu0 0.0
        %2777 = vmatpush1.msra.mxu0 %v2729
        %2778 = vmatprep.subr.mxu0 0.0
        %2779 = vmatpush1.msra.mxu0 %v2731
        %2780 = vmatprep.subr.mxu0 0.0
        %2781 = vmatpush1.msra.mxu0 %v2733
        %2782 = vmatprep.subr.mxu0 0.0
        %2783 = vmatpush1.msra.mxu0 %v2735
        %2784 = vmatprep.subr.mxu0 0.0
        %2785 = vmatpush1.msra.mxu0 %v2737
        %2786 = vmatprep.subr.mxu0 0.0
        %2787 = vmatpush1.msra.mxu0 %v2739
        %2788 = vmatprep.subr.mxu0 0.0
        %2789 = vmatpush1.msra.mxu0 %v2741
        %2790 = vmatprep.subr.mxu0 0.0
        %2791 = vmatpush1.msra.mxu0 %v2743
        %2792 = vmatprep.subr.mxu0 0.0
        %2793 = vmatpush1.msra.mxu0 %v2745
        %2794 = vmatprep.subr.mxu0 0.0
        %2795 = vmatpush1.msra.mxu0 %v2747
        %2796 = vmatprep.subr.mxu0 0.0
        %2797 = vmatpush1.msra.mxu0 %v2749
        %2798 = vmatprep.subr.mxu0 0.0
        %2799 = vmatpush1.msra.mxu0 %v2751
        %2800 = vmatprep.subr.mxu0 0.0
        %2801 = vmatpush1.msra.mxu0 %v2753
        %2802 = vmatprep.subr.mxu0 0.0
        %2803 = vmatpush1.msra.mxu0 %v2755
        %2804 = vmatprep.subr.mxu0 0.0
        %2805 = vmatpush1.msra.mxu0 %v2757
        %2806 = vmatprep.subr.mxu0 0.0
        %2807 = vmatpush1.msra.mxu0 %v2759
        %2808 = vmatprep.subr.mxu0 0.0
        %2809 = vmatpush1.msra.mxu0 0.0
        %2810 = vmatprep.subr.mxu0 0.0
        %2811 = vmatpush1.msra.mxu0 0.0
        %2812 = vmatprep.subr.mxu0 0.0
        %2813 = vmatpush1.msra.mxu0 0.0
        %2814 = vmatprep.subr.mxu0 0.0
        %2815 = vmatpush1.msra.mxu0 0.0
        %2816 = vmatprep.subr.mxu0 0.0
        %2817 = vmatpush1.msra.mxu0 0.0
        %2818 = vmatprep.subr.mxu0 0.0
        %2819 = vmatpush1.msra.mxu0 0.0
        %2820 = vmatprep.subr.mxu0 0.0
        %2821 = vmatpush1.msra.mxu0 0.0
        %2822 = vmatprep.subr.mxu0 0.0
        %2823 = vmatpush1.msra.mxu0 0.0
        %2824 = vmatprep.subr.mxu0 0.0
        %2825 = vmatpush1.msra.mxu0 0.0
        %2826 = vmatprep.subr.mxu0 0.0
        %2827 = vmatpush1.msra.mxu0 0.0
        %2828 = vmatprep.subr.mxu0 0.0
        %2829 = vmatpush1.msra.mxu0 0.0
        %2830 = vmatprep.subr.mxu0 0.0
        %2831 = vmatpush1.msra.mxu0 0.0
        %2832 = vmatprep.subr.mxu0 0.0
        %2833 = vmatpush1.msra.mxu0 0.0
        %2834 = vmatprep.subr.mxu0 0.0
        %2835 = vmatpush1.msra.mxu0 0.0
        %2836 = vmatprep.subr.mxu0 0.0
        %2837 = vmatpush1.msra.mxu0 0.0
        %2838 = vmatprep.subr.mxu0 0.0
        %2839 = vmatpush1.msra.mxu0 0.0
        %2840 = vmatprep.mubr.f32.mxu0 0.0
        %2841 = vmatmul.mubr.f32.gmra.mrb[0].mxu0 %v2707
        %v2842 = vpop.f32.mrb[0].mxu0
        %v2843 = vadd.f32 %v2711, %v2842
        %v2844 = vpop.f32.mrb[0].mxu0
        %2845 = vdwg.mxu0
        %v2846 = vadd.f32 %v2598, %v2843
        %v2847 = vlaneseq
        %v2848 = vshrl.u32 %v2847, 7
        %v2849 = vsub.s32 0, %v2848
        %v2850 = vrot.slane %v253, %v2849
        %v2852 = vsel %vm270, %v2846, 0
        %2854 = vmatprep.subr.mxu0 0.0
        %2855 = vmatpush1.msra.mxu0 %v229
        %2856 = vmatprep.subr.mxu0 0.0
        %2857 = vmatpush1.msra.mxu0 %v236
        %2858 = vmatprep.subr.mxu0 0.0
        %2859 = vmatpush1.msra.mxu0 %v243
        %2860 = vmatprep.subr.mxu0 0.0
        %2861 = vmatpush1.msra.mxu0 %v250
        %2862 = vmatprep.subr.mxu0 0.0
        %2863 = vmatpush1.msra.mxu0 0.0
        %2864 = vmatprep.subr.mxu0 0.0
        %2865 = vmatpush1.msra.mxu0 0.0
        %2866 = vmatprep.subr.mxu0 0.0
        %2867 = vmatpush1.msra.mxu0 0.0
        %2868 = vmatprep.subr.mxu0 0.0
        %2869 = vmatpush1.msra.mxu0 0.0
        %2870 = vmatprep.subr.mxu0 0.0
        %2871 = vmatpush1.msra.mxu0 0.0
        %2872 = vmatprep.subr.mxu0 0.0
        %2873 = vmatpush1.msra.mxu0 0.0
        %2874 = vmatprep.subr.mxu0 0.0
        %2875 = vmatpush1.msra.mxu0 0.0
        %2876 = vmatprep.subr.mxu0 0.0
        %2877 = vmatpush1.msra.mxu0 0.0
        %2878 = vmatprep.subr.mxu0 0.0
        %2879 = vmatpush1.msra.mxu0 0.0
        %2880 = vmatprep.subr.mxu0 0.0
        %2881 = vmatpush1.msra.mxu0 0.0
        %2882 = vmatprep.subr.mxu0 0.0
        %2883 = vmatpush1.msra.mxu0 0.0
        %2884 = vmatprep.subr.mxu0 0.0
        %2885 = vmatpush1.msra.mxu0 0.0
        %2886 = vmatprep.subr.mxu0 0.0
        %2887 = vmatpush1.msra.mxu0 0.0
        %2888 = vmatprep.subr.mxu0 0.0
        %2889 = vmatpush1.msra.mxu0 0.0
        %2890 = vmatprep.subr.mxu0 0.0
        %2891 = vmatpush1.msra.mxu0 0.0
        %2892 = vmatprep.subr.mxu0 0.0
        %2893 = vmatpush1.msra.mxu0 0.0
        %2894 = vmatprep.subr.mxu0 0.0
        %2895 = vmatpush1.msra.mxu0 0.0
        %2896 = vmatprep.subr.mxu0 0.0
        %2897 = vmatpush1.msra.mxu0 0.0
        %2898 = vmatprep.subr.mxu0 0.0
        %2899 = vmatpush1.msra.mxu0 0.0
        %2900 = vmatprep.subr.mxu0 0.0
        %2901 = vmatpush1.msra.mxu0 0.0
        %2902 = vmatprep.subr.mxu0 0.0
        %2903 = vmatpush1.msra.mxu0 0.0
        %2904 = vmatprep.subr.mxu0 0.0
        %2905 = vmatpush1.msra.mxu0 0.0
        %2906 = vmatprep.subr.mxu0 0.0
        %2907 = vmatpush1.msra.mxu0 0.0
        %2908 = vmatprep.subr.mxu0 0.0
        %2909 = vmatpush1.msra.mxu0 0.0
        %2910 = vmatprep.subr.mxu0 0.0
        %2911 = vmatpush1.msra.mxu0 0.0
        %2912 = vmatprep.subr.mxu0 0.0
        %2913 = vmatpush1.msra.mxu0 0.0
        %2914 = vmatprep.subr.mxu0 0.0
        %2915 = vmatpush1.msra.mxu0 0.0
        %2916 = vmatprep.subr.mxu0 0.0
        %2917 = vmatpush1.msra.mxu0 0.0
        %2918 = vmatprep.mubr.f32.mxu0 0.0
        %2919 = vmatmul.mubr.f32.gmra.mrb[0].mxu0 %v2852
        %v2920 = vpop.f32.mrb[0].mxu0
        %v2921 = vadd.f32 %v2850, %v2920
        %v2922 = vpop.f32.mrb[0].mxu0
        %2923 = vdwg.mxu0
        %2924 = vst [vmem:[%s215] sm:$0xff] %v2921
        %s2925 = sand.u32 %s137, 1
        %s2926 = scalar_lea.sflag [#allocation3], %s2925
        %s2927 = sand.u32 %s137, 1
        %s2928 = smul.addr %s2927, 8
        %s2929 = scalar_lea.vmem [#allocation2], %s2928
        // Predicated region
        $region41: #{decoder_forward.1} parent=39 // pred_check
          %p2930 = pneg %p147
        $region42: #{decoder_forward.1} parent=39 // pred_check_branch
          %2932 = sbr.rel (%p2930) target = $region44
        $region43: #{decoder_forward.1} parent=39 // pred_region
          %s2934 = ssub.s32 128, 128
          %2935 = vsyncadd %s2926, %s2934
          %s2936 = smul.addr %s19, 128
          %s2937 = scalar_lea.hbm %s5, %s2936
          %s2939 = sshll.u32 %s2929, 4
          %s2940 = int_to_ptr.vmem [resolvable:$true] %s2939
          %2942 = dma.vmem_to_hbm [thread:$0]  %s2940, 128, %s2937, %s2926
        $region44: #{decoder_forward.1} parent=39 // pred_fallthru
          _
      $region40: #{decoder_forward.1} parent=5 // pred_fallthru
        _
      %p2943 = scmp.le.s32.totalorder 2, %s14
      // Predicated region
      $region45: #{decoder_forward.1} parent=5 // pred_check
        %p2944 = pneg %p2943
      $region46: #{decoder_forward.1} parent=5 // pred_check_branch
        %2946 = sbr.rel (%p2944) target = $region48
      $region47: #{decoder_forward.1} parent=5 // pred_region
        %s2947 = ssub.s32 %s14, 2
        // Predicated region
        $region49: #{decoder_forward.1} parent=47 // pred_check
          %p2948 = pneg %p153
        $region50: #{decoder_forward.1} parent=47 // pred_check_branch
          %2950 = sbr.rel (%p2948) target = $region52
        $region51: #{decoder_forward.1} parent=47 // pred_region
          %s2951 = sand.u32 %s138, 1
          %s2952 = scalar_lea.sflag [#allocation3], %s2951
          %s2953 = sand.u32 %s138, 1
          %s2954 = smul.addr %s2953, 8
          %s2955 = scalar_lea.vmem [#allocation2], %s2954
          %2956 = dma.done %s2952, 128
        $region52: #{decoder_forward.1} parent=47 // pred_fallthru
          _
      $region48: #{decoder_forward.1} parent=5 // pred_fallthru
        _
    $region6: #{decoder_forward.1} parent=1 // loop_footer
      %s18 = sadd.s32 1, %s14
    $region7: #{decoder_forward.1} parent=1 // loop_footer_branch
      %13 = sbr.rel target = $region3
    $region8: #{decoder_forward.1} parent=1 // loop_exit
      _
    %2957 = vsyncpa [#allocation3], 1
    %s2958 = scalar_lea.sflag [#allocation3], 1
    %2959 = vsyncpa %s2958, 1

</llo_original>
